<compile_context>
chip_gen: v7x
topology: tpu7x:2x2x1
jax: 0.10.0
libtpu: 0.0.40
codegen_flags: <defaults>
</compile_context>

<pallas_src>
import functools

import jax
import jax.numpy as jnp
from jax.experimental import pallas as pl
from jax.experimental.pallas import tpu as pltpu

EPS = 1e-5
LANE = 128                       # vreg lane width -> lane-dense channel padding


def _round_up(x, m):
    return (x + m - 1) // m * m


@functools.lru_cache(maxsize=1)
def _vmem_limit_bytes():
    """~3/4 of this generation's physical VMEM, capped at 100 MiB.

    v7x (64 MiB/TC) -> 48 MiB; v5e/v6e (128 MiB) -> ~96-100 MiB."""
    cap = 128 * 1024 * 1024
    try:
        cap = int(getattr(pltpu.get_tpu_info(), "vmem_capacity_bytes", cap))
    except Exception:
        pass
    return max(32 * 1024 * 1024, min(cap * 3 // 4, 100 * 1024 * 1024))


def _pick_divisor_tile(h, cap, min_tiles=1):
    """Largest divisor of h that is <= cap (and leaves >= min_tiles tiles if possible)."""
    if min_tiles > 1:
        cap = min(cap, max(1, h // min_tiles))
    cap = max(1, cap)
    best = 1
    for t in range(1, h + 1):
        if h % t == 0 and t <= cap:
            best = t
    return best


def _conv_row_tile(h, wd, cin_p, cout_p, item, vmem_limit, min_tiles):
    """Row tile from the actual live buffers: double-buffered in/out blocks plus the
    in-register working set (halo'd tile, per-dy 3-tap lhs, f32 prep/accumulator)."""
    io = 2 * wd * (cin_p + cout_p) * item                 # pipelined (2x buffered) blocks
    work = wd * (cin_p * (4 * item + 4) + 4 * cout_p)     # xt + lhs(3 taps) + f32 temps
    cap = (vmem_limit * 3 // 5) // max(1, io + work)      # ~40% headroom for weights etc.
    return _pick_divisor_tile(h, cap, min_tiles)


def _pack_weight(w_oihw, cin_p, cout_p, dtype):
    """PyTorch OIHW conv weight -> (3, 3*cin_p, cout_p): one K=3*cin_p matrix per dy
    (dx-major blocks of cin_p along K), matching the per-dy grouped matmuls."""
    cout, cin, kh, kw = w_oihw.shape
    w = jnp.transpose(w_oihw, (2, 3, 1, 0)).astype(jnp.float32)   # (kh, kw, cin, cout)
    w = jnp.pad(w, ((0, 0), (0, 0), (0, cin_p - cin), (0, cout_p - cout)))
    return w.reshape(kh, kw * cin_p, cout_p).astype(dtype)


# --------------------------------------------------------------------------- kernels


def _conv_bn_stats_kernel(x_top_ref, x_body_ref, x_bot_ref, w_ref,
                          scale_ref, shift_ref, y_ref, stats_ref,
                          *, fuse_bn_relu, compute_dtype):
    """One row-tile of: [optional fused BN+ReLU of the input] -> 3x3 conv (no bias).

    Writes the conv output tile (in compute_dtype) plus one-pass BatchNorm partial
    moments (sum, sum of squares) taken from the f32 accumulator.
    """
    i = pl.program_id(1)
    n_tiles = pl.num_programs(1)
    _, th, wd, cin_p = x_body_ref.shape
    cout_p = y_ref.shape[-1]

    if fuse_bn_relu:
        sc = scale_ref[...].reshape(1, 1, 1, cin_p)
        sh = shift_ref[...].reshape(1, 1, 1, cin_p)

    def prep(v, oob=None):
        # BN (f32) + ReLU of the previous conv fused into the load, then a single cast
        # to the MXU operand dtype *before* any tap extraction (no 9x-blown-up casts).
        if fuse_bn_relu:
            v = jnp.maximum(v.astype(jnp.float32) * sc + sh, 0.0)
        if oob is not None:                         # zero the halo row outside the image
            v = v * jnp.where(oob, 0, 1).astype(v.dtype)
        return v.astype(compute_dtype)

    body = prep(x_body_ref[...])                               # (1, th, wd, cin_p)
    top = prep(x_top_ref[...], oob=(i == 0))                   # (1, 1,  wd, cin_p)
    bot = prep(x_bot_ref[...], oob=(i == n_tiles - 1))         # (1, 1,  wd, cin_p)

    # Halo'd tile in registers, already in the (narrow) matmul dtype.
    xt = jnp.concatenate([top, body, bot], axis=1)             # (1, th+2, wd,   cin_p)
    # TODO(synk): pre-pad W by one column per side in the wrapper (8-aligned) so this
    # per-step zero-column concat disappears and the dx tap slices stay sublane-aligned.
    zcol = jnp.zeros((1, th + 2, 1, cin_p), compute_dtype)
    xt = jnp.concatenate([zcol, xt, zcol], axis=2)             # (1, th+2, wd+2, cin_p)

    # 3x3 conv as three per-dy accumulated MXU matmuls (K = 3*cin_p >= 384 keeps the
    # 256-deep v6e/v7x MXU fed; on the 128x128 v5e MXU it is equivalent to 3 K=128
    # passes).  No 9x im2col lhs is ever materialized.
    acc = jnp.zeros((th * wd, cout_p), jnp.float32)
    for dy in range(3):
        rows = xt[:, dy:dy + th]
        lhs = jnp.concatenate([rows[:, :, dx:dx + wd, :] for dx in range(3)], axis=-1)
        acc = acc + jax.lax.dot_general(
            lhs.reshape(th * wd, 3 * cin_p), w_ref[dy],
            dimension_numbers=(((1,), (0,)), ((), ())),
            preferred_element_type=jnp.float32)

    y_ref[...] = acc.reshape(1, th, wd, cout_p).astype(y_ref.dtype)

    # One-pass BatchNorm partial moments for this tile, from the f32 accumulator.
    s = jnp.sum(acc, axis=0, keepdims=True)
    ss = jnp.sum(acc * acc, axis=0, keepdims=True)
    stats_ref[...] = jnp.concatenate([s, ss], axis=0).reshape(1, 1, 2, cout_p)


def _bn_relu_kernel(x_ref, scale_ref, shift_ref, o_ref):
    c = x_ref.shape[-1]
    sc = scale_ref[...].reshape(1, 1, 1, c)
    sh = shift_ref[...].reshape(1, 1, 1, c)
    o_ref[...] = jnp.maximum(x_ref[...].astype(jnp.float32) * sc + sh, 0.0)


# ---------------------------------------------------------------------- pallas_calls


def _conv_layer(act, w_grp, scale, shift, *, fuse_bn_relu, compute_dtype, row_tile,
                vmem_limit):
    n, h, wd, c_in = act.shape
    _, k_dim, cout_p = w_grp.shape
    th = row_tile
    n_tiles = h // th

    kernel = functools.partial(_conv_bn_stats_kernel,
                               fuse_bn_relu=fuse_bn_relu,
                               compute_dtype=compute_dtype)

    return pl.pallas_call(
        kernel,
        grid=(n, n_tiles),
        in_specs=[
            # 1-row halo above / body tile / 1-row halo below.  Halo row indices are
            # clamped at the image border and zero-masked inside the kernel.  With the
            # larger row tiles the +2-row re-fetch is a few % of input DMA.
            pl.BlockSpec((1, 1, wd, c_in),
                         lambda b, i: (b, jnp.maximum(i * th - 1, 0), 0, 0)),
            pl.BlockSpec((1, th, wd, c_in), lambda b, i: (b, i, 0, 0)),
            pl.BlockSpec((1, 1, wd, c_in),
                         lambda b, i: (b, jnp.minimum(i * th + th, h - 1), 0, 0)),
            # TODO(synk): pipeline_mode=pl.Buffered(1) on these constant-index blocks
            # would save one resident weight buffer of VMEM at large channel counts.
            pl.BlockSpec((3, k_dim, cout_p), lambda b, i: (0, 0, 0)),   # weights
            pl.BlockSpec((1, c_in), lambda b, i: (0, 0)),               # fused BN scale
            pl.BlockSpec((1, c_in), lambda b, i: (0, 0)),               # fused BN shift
        ],
        out_specs=(
            pl.BlockSpec((1, th, wd, cout_p), lambda b, i: (b, i, 0, 0)),
            pl.BlockSpec((1, 1, 2, cout_p), lambda b, i: (b, i, 0, 0)),
        ),
        out_shape=(
            jax.ShapeDtypeStruct((n, h, wd, cout_p), compute_dtype),     # bf16 stream
            jax.ShapeDtypeStruct((n, n_tiles, 2, cout_p), jnp.float32),  # BN partials
        ),
        compiler_params=pltpu.CompilerParams(
            dimension_semantics=("parallel", "parallel"),
            vmem_limit_bytes=vmem_limit),
    )(act, act, act, w_grp, scale, shift)


def _bn_relu_layer(act, scale, shift, *, vmem_limit, min_tiles):
    n, h, wd, c = act.shape
    # Pure mem-bound elementwise pass: give it its own, much larger block.
    per_row = 2 * wd * c * (act.dtype.itemsize + 4)   # 2x-buffered in (bf16) + out (f32)
    th = _pick_divisor_tile(h, (vmem_limit // 2) // max(1, per_row), min_tiles)
    return pl.pallas_call(
        _bn_relu_kernel,
        grid=(n, h // th),
        in_specs=[
            pl.BlockSpec((1, th, wd, c), lambda b, i: (b, i, 0, 0)),
            pl.BlockSpec((1, c), lambda b, i: (0, 0)),
            pl.BlockSpec((1, c), lambda b, i: (0, 0)),
        ],
        out_specs=pl.BlockSpec((1, th, wd, c), lambda b, i: (b, i, 0, 0)),
        out_shape=jax.ShapeDtypeStruct((n, h, wd, c), jnp.float32),
        compiler_params=pltpu.CompilerParams(
            dimension_semantics=("parallel", "parallel"),
            vmem_limit_bytes=vmem_limit),
    )(act, scale, shift)


def _bn_scale_shift(stats, gamma, beta, count, cout, cout_p):
    """Reduce per-tile (sum, sum_sq) partials -> fused BN scale/shift (per channel)."""
    s = jnp.sum(stats[:, :, 0, :], axis=(0, 1))
    ss = jnp.sum(stats[:, :, 1, :], axis=(0, 1))
    mean = s / count
    # one-pass moments; clamp guards E[x^2]-E[x]^2 cancellation (all in f32).
    var = jnp.maximum(ss / count - mean * mean, 0.0)
    g = jnp.pad(gamma.astype(jnp.float32), (0, cout_p - cout))
    b = jnp.pad(beta.astype(jnp.float32), (0, cout_p - cout))
    scale = g * jax.lax.rsqrt(var + EPS)
    shift = b - mean * scale
    return scale.reshape(1, cout_p), shift.reshape(1, cout_p)


# --------------------------------------------------------------------------- wrapper


@functools.partial(jax.jit, static_argnames=("matmul_dtype", "row_tile"))
def double_conv(x_nchw, params, *, matmul_dtype=jnp.bfloat16, row_tile=None):
    """x_nchw: (N, Cin, H, W) float32. Returns (N, Cout, H, W) float32.

    matmul_dtype controls the MXU operand dtype AND the intermediate activation
    storage dtype (bf16 recommended); accumulation and all BatchNorm / ReLU math
    stay in float32.
    """
    w1, g1, b1, w2, g2, b2 = params
    n, cin, h, wd = x_nchw.shape
    cout = w1.shape[0]
    cin_p = _round_up(cin, LANE)
    cout_p = _round_up(cout, LANE)
    item = jnp.dtype(matmul_dtype).itemsize
    vmem_limit = _vmem_limit_bytes()
    min_tiles = 2 if n == 1 else 1        # keep both v7x TensorCores busy when N == 1
    if row_tile is None:
        row_tile = _conv_row_tile(h, wd, max(cin_p, cout_p), cout_p, item,
                                  vmem_limit, min_tiles)
    assert h % row_tile == 0, (h, row_tile)

    # TODO(synk): NCHW<->NHWC transposes and channel padding remain XLA glue; in a full
    # model hoist them out of the per-step hot path.
    # TODO(synk): for tiny Cin (e.g. 3) a specialized first-layer packing (taps*Cin
    # jointly padded to K=128) would avoid the 128/Cin-fold MXU padding waste.
    x = jnp.transpose(x_nchw, (0, 2, 3, 1)).astype(matmul_dtype)     # NHWC stream
    x = jnp.pad(x, ((0, 0), (0, 0), (0, 0), (0, cin_p - cin)))       # lane-dense channels

    w1m = _pack_weight(w1, cin_p, cout_p, matmul_dtype)
    w2m = _pack_weight(w2, cout_p, cout_p, matmul_dtype)

    ident_scale = jnp.ones((1, cin_p), jnp.float32)    # unused by layer 1 (no fused BN)
    ident_shift = jnp.zeros((1, cin_p), jnp.float32)
    count = n * h * wd

    # layer 1: conv -> compute_dtype output + one-pass BN partial moments (f32)
    y1, st1 = _conv_layer(x, w1m, ident_scale, ident_shift,
                          fuse_bn_relu=False, compute_dtype=matmul_dtype,
                          row_tile=row_tile, vmem_limit=vmem_limit)
    scale1, shift1 = _bn_scale_shift(st1, g1, b1, count, cout, cout_p)

    # layer 2: BN1+ReLU fused into the input load -> conv -> output + partials
    y2, st2 = _conv_layer(y1, w2m, scale1, shift1,
                          fuse_bn_relu=True, compute_dtype=matmul_dtype,
                          row_tile=row_tile, vmem_limit=vmem_limit)
    scale2, shift2 = _bn_scale_shift(st2, g2, b2, count, cout, cout_p)

    # final BN2 + ReLU (own, larger block size)
    out = _bn_relu_layer(y2, scale2, shift2, vmem_limit=vmem_limit, min_tiles=min_tiles)
    return jnp.transpose(out[..., :cout], (0, 3, 1, 2))             # back to NCHW


# ------------------------------------------------------------------------- reference


def _ref_double_conv(x_nchw, params, conv_dtype=jnp.float32):
    """Pure-JAX reference mirroring the PyTorch module (training-mode BN).
    conv_dtype controls the conv operand dtype; accumulation stays f32."""
    w1, g1, b1, w2, g2, b2 = params

    def conv(x, w):
        return jax.lax.conv_general_dilated(
            x.astype(conv_dtype), w.astype(conv_dtype),
            window_strides=(1, 1), padding=((1, 1), (1, 1)),
            dimension_numbers=('NCHW', 'OIHW', 'NCHW'),
            preferred_element_type=jnp.float32)

    def bn_relu(x, g, b):
        m = jnp.mean(x, axis=(0, 2, 3), keepdims=True)
        v = jnp.mean((x - m) ** 2, axis=(0, 2, 3), keepdims=True)
        y = (x - m) * jax.lax.rsqrt(v + EPS)
        y = y * g.reshape(1, -1, 1, 1) + b.reshape(1, -1, 1, 1)
        return jnp.maximum(y, 0.0)

    hmid = bn_relu(conv(x_nchw.astype(jnp.float32), w1), g1, b1)
    return bn_relu(conv(hmid, w2), g2, b2)


if __name__ == "__main__":
    N, Cin, Cout, H, W = 2, 4, 8, 16, 16

    key = jax.random.PRNGKey(0)
    kx, k1, k2, k3, k4, k5, k6 = jax.random.split(key, 7)

    x = jax.random.normal(kx, (N, Cin, H, W), dtype=jnp.float32)

    # deterministic synthetic parameters (shapes from DoubleConv.__init__)
    w1 = 0.1 * jax.random.normal(k1, (Cout, Cin, 3, 3), dtype=jnp.float32)   # conv1 weight
    g1 = 1.0 + 0.1 * jax.random.normal(k2, (Cout,), dtype=jnp.float32)       # bn1 gamma
    b1 = 0.1 * jax.random.normal(k3, (Cout,), dtype=jnp.float32)             # bn1 beta
    w2 = 0.1 * jax.random.normal(k4, (Cout, Cout, 3, 3), dtype=jnp.float32)  # conv2 weight
    g2 = 1.0 + 0.1 * jax.random.normal(k5, (Cout,), dtype=jnp.float32)       # bn2 gamma
    b2 = 0.1 * jax.random.normal(k6, (Cout,), dtype=jnp.float32)             # bn2 beta
    params = (w1, g1, b1, w2, g2, b2)

    # Production path: bf16 MXU operands / bf16 intermediates / f32 accumulation.
    # row_tile=8 -> 2 row tiles per image so the cross-tile halo path is exercised.
    out_bf16 = jax.block_until_ready(
        double_conv(x, params, matmul_dtype=jnp.bfloat16, row_tile=8))
    # Full-f32 path (numerically faithful to the PyTorch module), auto row tile.
    out_f32 = jax.block_until_ready(
        double_conv(x, params, matmul_dtype=jnp.float32))

    ref_f32 = jax.block_until_ready(_ref_double_conv(x, params, conv_dtype=jnp.float32))
    ref_bf16 = jax.block_until_ready(_ref_double_conv(x, params, conv_dtype=jnp.bfloat16))

    assert out_bf16.shape == (N, Cout, H, W), out_bf16.shape
    assert out_f32.shape == (N, Cout, H, W), out_f32.shape

    # f32-operand path must match the f32 (PyTorch-faithful) reference tightly.
    assert jnp.allclose(out_f32, ref_f32, rtol=1e-3, atol=1e-3), \
        float(jnp.max(jnp.abs(out_f32 - ref_f32)))
    # bf16-operand path (with bf16-stored intermediates) matches the bf16-operand ref.
    assert jnp.allclose(out_bf16, ref_bf16, rtol=3e-2, atol=3e-2), \
        float(jnp.max(jnp.abs(out_bf16 - ref_bf16)))
    # ... and stays within bf16 rounding of the full-f32 module (coarse bound).
    assert jnp.allclose(out_bf16, ref_f32, rtol=1e-1, atol=1e-1), \
        float(jnp.max(jnp.abs(out_bf16 - ref_f32)))

    print("KERNEL_OK")
</pallas_src>

<mosaic_0001>
module attributes {stable_mosaic.version = 11 : i64} {
  func.func @_conv_bn_stats_kernel(%arg0: i32, %arg1: i32, %arg2: memref<1x1x16x128xbf16, #tpu.memory_space<vmem>>, %arg3: memref<1x8x16x128xbf16, #tpu.memory_space<vmem>>, %arg4: memref<1x1x16x128xbf16, #tpu.memory_space<vmem>>, %arg5: memref<3x384x128xbf16, #tpu.memory_space<vmem>>, %arg6: memref<1x128xf32, #tpu.memory_space<vmem>>, %arg7: memref<1x128xf32, #tpu.memory_space<vmem>>, %arg8: memref<1x8x16x128xbf16, #tpu.memory_space<vmem>>, %arg9: memref<1x1x2x128xf32, #tpu.memory_space<vmem>>) attributes {dimension_semantics = [#tpu.dimension_semantics<parallel>, #tpu.dimension_semantics<parallel>], iteration_bounds = array<i64: 2, 2>, scalar_prefetch = 0 : i64, scratch_operands = 0 : i64, tpu.core_type = #tpu.core_type<tc>, window_params = [{transform_indices = @transform_0, window_bounds = array<i64: 1, 1, 16, 128>}, {transform_indices = @transform_1, window_bounds = array<i64: 1, 8, 16, 128>}, {transform_indices = @transform_2, window_bounds = array<i64: 1, 1, 16, 128>}, {pipeline_mode = #tpu.pipeline_mode<synchronous>, transform_indices = @transform_3, window_bounds = array<i64: 3, 384, 128>}, {pipeline_mode = #tpu.pipeline_mode<synchronous>, transform_indices = @transform_4, window_bounds = array<i64: 1, 128>}, {pipeline_mode = #tpu.pipeline_mode<synchronous>, transform_indices = @transform_5, window_bounds = array<i64: 1, 128>}, {transform_indices = @transform_6, window_bounds = array<i64: 1, 8, 16, 128>}, {transform_indices = @transform_7, window_bounds = array<i64: 1, 1, 2, 128>}]} {
    %c0 = arith.constant 0 : index
    %c0_0 = arith.constant 0 : index
    %c0_1 = arith.constant 0 : index
    %c0_2 = arith.constant 0 : index
    %0 = vector.load %arg3[%c0, %c0_0, %c0_1, %c0_2] : memref<1x8x16x128xbf16, #tpu.memory_space<vmem>>, vector<1x8x16x128xbf16>
    %c0_3 = arith.constant 0 : index
    %c0_4 = arith.constant 0 : index
    %c0_5 = arith.constant 0 : index
    %c0_6 = arith.constant 0 : index
    %1 = vector.load %arg2[%c0_3, %c0_4, %c0_5, %c0_6] : memref<1x1x16x128xbf16, #tpu.memory_space<vmem>>, vector<1x1x16x128xbf16>
    %c0_i32 = arith.constant 0 : i32
    %2 = arith.cmpi eq, %arg1, %c0_i32 : i32
    %c0_i32_7 = arith.constant 0 : i32
    %c1_i32 = arith.constant 1 : i32
    %3 = arith.select %2, %c0_i32_7, %c1_i32 : i32
    %4 = arith.sitofp %3 : i32 to bf16
    %5 = vector.broadcast %4 : bf16 to vector<1x1x16x128xbf16>
    %6 = arith.mulf %1, %5 : vector<1x1x16x128xbf16>
    %c0_8 = arith.constant 0 : index
    %c0_9 = arith.constant 0 : index
    %c0_10 = arith.constant 0 : index
    %c0_11 = arith.constant 0 : index
    %7 = vector.load %arg4[%c0_8, %c0_9, %c0_10, %c0_11] : memref<1x1x16x128xbf16, #tpu.memory_space<vmem>>, vector<1x1x16x128xbf16>
    %c1_i32_12 = arith.constant 1 : i32
    %8 = arith.cmpi eq, %arg1, %c1_i32_12 : i32
    %c0_i32_13 = arith.constant 0 : i32
    %c1_i32_14 = arith.constant 1 : i32
    %9 = arith.select %8, %c0_i32_13, %c1_i32_14 : i32
    %10 = arith.sitofp %9 : i32 to bf16
    %11 = vector.broadcast %10 : bf16 to vector<1x1x16x128xbf16>
    %12 = arith.mulf %7, %11 : vector<1x1x16x128xbf16>
    %13 = tpu.concatenate %6, %0, %12 in 1 : vector<1x1x16x128xbf16>, vector<1x8x16x128xbf16>, vector<1x1x16x128xbf16> -> vector<1x10x16x128xbf16>
    %cst = arith.constant 0.000000e+00 : bf16
    %14 = vector.broadcast %cst : bf16 to vector<1x10x1x128xbf16>
    %15 = tpu.concatenate %14, %13, %14 in 2 : vector<1x10x1x128xbf16>, vector<1x10x16x128xbf16>, vector<1x10x1x128xbf16> -> vector<1x10x18x128xbf16>
    %cst_15 = arith.constant 0.000000e+00 : f32
    %16 = vector.broadcast %cst_15 : f32 to vector<128x128xf32>
    %17 = vector.extract_strided_slice %15 {offsets = [0, 0, 0, 0], sizes = [1, 8, 18, 128], strides = [1, 1, 1, 1]} : vector<1x10x18x128xbf16> to vector<1x8x18x128xbf16>
    %18 = vector.extract_strided_slice %17 {offsets = [0, 0, 0, 0], sizes = [1, 8, 16, 128], strides = [1, 1, 1, 1]} : vector<1x8x18x128xbf16> to vector<1x8x16x128xbf16>
    %19 = vector.extract_strided_slice %17 {offsets = [0, 0, 1, 0], sizes = [1, 8, 16, 128], strides = [1, 1, 1, 1]} : vector<1x8x18x128xbf16> to vector<1x8x16x128xbf16>
    %20 = vector.extract_strided_slice %17 {offsets = [0, 0, 2, 0], sizes = [1, 8, 16, 128], strides = [1, 1, 1, 1]} : vector<1x8x18x128xbf16> to vector<1x8x16x128xbf16>
    %21 = tpu.concatenate %18, %19, %20 in 3 : vector<1x8x16x128xbf16>, vector<1x8x16x128xbf16>, vector<1x8x16x128xbf16> -> vector<1x8x16x384xbf16>
    %22 = vector.shape_cast %21 : vector<1x8x16x384xbf16> to vector<128x384xbf16>
    %c0_16 = arith.constant 0 : index
    %c0_17 = arith.constant 0 : index
    %c0_18 = arith.constant 0 : index
    %23 = vector.load %arg5[%c0_16, %c0_17, %c0_18] : memref<3x384x128xbf16, #tpu.memory_space<vmem>>, vector<1x384x128xbf16>
    %24 = vector.shape_cast %23 : vector<1x384x128xbf16> to vector<384x128xbf16>
    %cst_19 = arith.constant dense<0.000000e+00> : vector<128x128xf32>
    %25 = tpu.matmul %22, %24, %cst_19 {dimension_numbers = #tpu.dot_dimension_numbers<[1], [0], [0], [1], [0, 0, 1, 1], [], []>} : vector<128x384xbf16>, vector<384x128xbf16>, vector<128x128xf32> -> vector<128x128xf32>
    %26 = arith.addf %16, %25 : vector<128x128xf32>
    %27 = vector.extract_strided_slice %15 {offsets = [0, 1, 0, 0], sizes = [1, 8, 18, 128], strides = [1, 1, 1, 1]} : vector<1x10x18x128xbf16> to vector<1x8x18x128xbf16>
    %28 = vector.extract_strided_slice %27 {offsets = [0, 0, 0, 0], sizes = [1, 8, 16, 128], strides = [1, 1, 1, 1]} : vector<1x8x18x128xbf16> to vector<1x8x16x128xbf16>
    %29 = vector.extract_strided_slice %27 {offsets = [0, 0, 1, 0], sizes = [1, 8, 16, 128], strides = [1, 1, 1, 1]} : vector<1x8x18x128xbf16> to vector<1x8x16x128xbf16>
    %30 = vector.extract_strided_slice %27 {offsets = [0, 0, 2, 0], sizes = [1, 8, 16, 128], strides = [1, 1, 1, 1]} : vector<1x8x18x128xbf16> to vector<1x8x16x128xbf16>
    %31 = tpu.concatenate %28, %29, %30 in 3 : vector<1x8x16x128xbf16>, vector<1x8x16x128xbf16>, vector<1x8x16x128xbf16> -> vector<1x8x16x384xbf16>
    %32 = vector.shape_cast %31 : vector<1x8x16x384xbf16> to vector<128x384xbf16>
    %c1 = arith.constant 1 : index
    %c0_20 = arith.constant 0 : index
    %c0_21 = arith.constant 0 : index
    %33 = vector.load %arg5[%c1, %c0_20, %c0_21] : memref<3x384x128xbf16, #tpu.memory_space<vmem>>, vector<1x384x128xbf16>
    %34 = vector.shape_cast %33 : vector<1x384x128xbf16> to vector<384x128xbf16>
    %cst_22 = arith.constant dense<0.000000e+00> : vector<128x128xf32>
    %35 = tpu.matmul %32, %34, %cst_22 {dimension_numbers = #tpu.dot_dimension_numbers<[1], [0], [0], [1], [0, 0, 1, 1], [], []>} : vector<128x384xbf16>, vector<384x128xbf16>, vector<128x128xf32> -> vector<128x128xf32>
    %36 = arith.addf %26, %35 : vector<128x128xf32>
    %37 = vector.extract_strided_slice %15 {offsets = [0, 2, 0, 0], sizes = [1, 8, 18, 128], strides = [1, 1, 1, 1]} : vector<1x10x18x128xbf16> to vector<1x8x18x128xbf16>
    %38 = vector.extract_strided_slice %37 {offsets = [0, 0, 0, 0], sizes = [1, 8, 16, 128], strides = [1, 1, 1, 1]} : vector<1x8x18x128xbf16> to vector<1x8x16x128xbf16>
    %39 = vector.extract_strided_slice %37 {offsets = [0, 0, 1, 0], sizes = [1, 8, 16, 128], strides = [1, 1, 1, 1]} : vector<1x8x18x128xbf16> to vector<1x8x16x128xbf16>
    %40 = vector.extract_strided_slice %37 {offsets = [0, 0, 2, 0], sizes = [1, 8, 16, 128], strides = [1, 1, 1, 1]} : vector<1x8x18x128xbf16> to vector<1x8x16x128xbf16>
    %41 = tpu.concatenate %38, %39, %40 in 3 : vector<1x8x16x128xbf16>, vector<1x8x16x128xbf16>, vector<1x8x16x128xbf16> -> vector<1x8x16x384xbf16>
    %42 = vector.shape_cast %41 : vector<1x8x16x384xbf16> to vector<128x384xbf16>
    %c2 = arith.constant 2 : index
    %c0_23 = arith.constant 0 : index
    %c0_24 = arith.constant 0 : index
    %43 = vector.load %arg5[%c2, %c0_23, %c0_24] : memref<3x384x128xbf16, #tpu.memory_space<vmem>>, vector<1x384x128xbf16>
    %44 = vector.shape_cast %43 : vector<1x384x128xbf16> to vector<384x128xbf16>
    %cst_25 = arith.constant dense<0.000000e+00> : vector<128x128xf32>
    %45 = tpu.matmul %42, %44, %cst_25 {dimension_numbers = #tpu.dot_dimension_numbers<[1], [0], [0], [1], [0, 0, 1, 1], [], []>} : vector<128x384xbf16>, vector<384x128xbf16>, vector<128x128xf32> -> vector<128x128xf32>
    %46 = arith.addf %36, %45 : vector<128x128xf32>
    %47 = vector.shape_cast %46 : vector<128x128xf32> to vector<1x8x16x128xf32>
    %48 = arith.truncf %47 : vector<1x8x16x128xf32> to vector<1x8x16x128xbf16>
    %c0_26 = arith.constant 0 : index
    %c0_27 = arith.constant 0 : index
    %c0_28 = arith.constant 0 : index
    %c0_29 = arith.constant 0 : index
    %49 = vector.load %arg8[%c0_26, %c0_27, %c0_28, %c0_29] : memref<1x8x16x128xbf16, #tpu.memory_space<vmem>>, vector<1x8x16x128xbf16>
    tpu.vector_store %arg8[%c0_26, %c0_27, %c0_28, %c0_29], %48 {strides = array<i32>} : memref<1x8x16x128xbf16, #tpu.memory_space<vmem>>, vector<1x8x16x128xbf16>,
    %cst_30 = arith.constant dense<0.000000e+00> : vector<128xf32>
    %50 = vector.multi_reduction <add>, %46, %cst_30 [0] : vector<128x128xf32> to vector<128xf32>
    %51 = vector.shape_cast %50 : vector<128xf32> to vector<1x128xf32>
    %52 = arith.mulf %46, %46 : vector<128x128xf32>
    %cst_31 = arith.constant dense<0.000000e+00> : vector<128xf32>
    %53 = vector.multi_reduction <add>, %52, %cst_31 [0] : vector<128x128xf32> to vector<128xf32>
    %54 = vector.shape_cast %53 : vector<128xf32> to vector<1x128xf32>
    %55 = tpu.concatenate %51, %54 in 0 : vector<1x128xf32>, vector<1x128xf32> -> vector<2x128xf32>
    %56 = vector.shape_cast %55 : vector<2x128xf32> to vector<1x1x2x128xf32>
    %c0_32 = arith.constant 0 : index
    %c0_33 = arith.constant 0 : index
    %c0_34 = arith.constant 0 : index
    %c0_35 = arith.constant 0 : index
    %57 = vector.load %arg9[%c0_32, %c0_33, %c0_34, %c0_35] : memref<1x1x2x128xf32, #tpu.memory_space<vmem>>, vector<1x1x2x128xf32>
    tpu.vector_store %arg9[%c0_32, %c0_33, %c0_34, %c0_35], %56 {strides = array<i32>} : memref<1x1x2x128xf32, #tpu.memory_space<vmem>>, vector<1x1x2x128xf32>,
    return
  }
  func.func @transform_0(%arg0: i32, %arg1: i32) -> (i32, i32, i32, i32) {
    %c8_i32 = arith.constant 8 : i32
    %0 = arith.muli %arg1, %c8_i32 : i32
    %c1_i32 = arith.constant 1 : i32
    %1 = arith.subi %0, %c1_i32 : i32
    %c0_i32 = arith.constant 0 : i32
    %2 = arith.maxsi %1, %c0_i32 : i32
    %c0_i32_0 = arith.constant 0 : i32
    %c0_i32_1 = arith.constant 0 : i32
    %c0_i32_2 = arith.constant 0 : i32
    return %arg0, %2, %c0_i32_0, %c0_i32_1 : i32, i32, i32, i32
  }
  func.func @transform_1(%arg0: i32, %arg1: i32) -> (i32, i32, i32, i32) {
    %c0_i32 = arith.constant 0 : i32
    %c0_i32_0 = arith.constant 0 : i32
    %c0_i32_1 = arith.constant 0 : i32
    return %arg0, %arg1, %c0_i32, %c0_i32_0 : i32, i32, i32, i32
  }
  func.func @transform_2(%arg0: i32, %arg1: i32) -> (i32, i32, i32, i32) {
    %c8_i32 = arith.constant 8 : i32
    %0 = arith.muli %arg1, %c8_i32 : i32
    %c8_i32_0 = arith.constant 8 : i32
    %1 = arith.addi %0, %c8_i32_0 : i32
    %c15_i32 = arith.constant 15 : i32
    %2 = arith.minsi %1, %c15_i32 : i32
    %c0_i32 = arith.constant 0 : i32
    %c0_i32_1 = arith.constant 0 : i32
    %c0_i32_2 = arith.constant 0 : i32
    return %arg0, %2, %c0_i32, %c0_i32_1 : i32, i32, i32, i32
  }
  func.func @transform_3(%arg0: i32, %arg1: i32) -> (i32, i32, i32) {
    %c0_i32 = arith.constant 0 : i32
    %c0_i32_0 = arith.constant 0 : i32
    %c0_i32_1 = arith.constant 0 : i32
    %c0_i32_2 = arith.constant 0 : i32
    return %c0_i32, %c0_i32_0, %c0_i32_1 : i32, i32, i32
  }
  func.func @transform_4(%arg0: i32, %arg1: i32) -> (i32, i32) {
    %c0_i32 = arith.constant 0 : i32
    %c0_i32_0 = arith.constant 0 : i32
    %c0_i32_1 = arith.constant 0 : i32
    return %c0_i32, %c0_i32_0 : i32, i32
  }
  func.func @transform_5(%arg0: i32, %arg1: i32) -> (i32, i32) {
    %c0_i32 = arith.constant 0 : i32
    %c0_i32_0 = arith.constant 0 : i32
    %c0_i32_1 = arith.constant 0 : i32
    return %c0_i32, %c0_i32_0 : i32, i32
  }
  func.func @transform_6(%arg0: i32, %arg1: i32) -> (i32, i32, i32, i32) {
    %c0_i32 = arith.constant 0 : i32
    %c0_i32_0 = arith.constant 0 : i32
    %c0_i32_1 = arith.constant 0 : i32
    return %arg0, %arg1, %c0_i32, %c0_i32_0 : i32, i32, i32, i32
  }
  func.func @transform_7(%arg0: i32, %arg1: i32) -> (i32, i32, i32, i32) {
    %c0_i32 = arith.constant 0 : i32
    %c0_i32_0 = arith.constant 0 : i32
    %c0_i32_1 = arith.constant 0 : i32
    return %arg0, %arg1, %c0_i32, %c0_i32_0 : i32, i32, i32, i32
  }
}

module attributes {stable_mosaic.version = 11 : i64} {
  func.func @_conv_bn_stats_kernel(%arg0: i32, %arg1: i32, %arg2: memref<1x1x16x128xbf16, #tpu.memory_space<vmem>>, %arg3: memref<1x8x16x128xbf16, #tpu.memory_space<vmem>>, %arg4: memref<1x1x16x128xbf16, #tpu.memory_space<vmem>>, %arg5: memref<3x384x128xbf16, #tpu.memory_space<vmem>>, %arg6: memref<1x128xf32, #tpu.memory_space<vmem>>, %arg7: memref<1x128xf32, #tpu.memory_space<vmem>>, %arg8: memref<1x8x16x128xbf16, #tpu.memory_space<vmem>>, %arg9: memref<1x1x2x128xf32, #tpu.memory_space<vmem>>) attributes {dimension_semantics = [#tpu.dimension_semantics<parallel>, #tpu.dimension_semantics<parallel>], iteration_bounds = array<i64: 2, 2>, scalar_prefetch = 0 : i64, scratch_operands = 0 : i64, tpu.core_type = #tpu.core_type<tc>, window_params = [{transform_indices = @transform_0, window_bounds = array<i64: 1, 1, 16, 128>}, {transform_indices = @transform_1, window_bounds = array<i64: 1, 8, 16, 128>}, {transform_indices = @transform_2, window_bounds = array<i64: 1, 1, 16, 128>}, {pipeline_mode = #tpu.pipeline_mode<synchronous>, transform_indices = @transform_3, window_bounds = array<i64: 3, 384, 128>}, {pipeline_mode = #tpu.pipeline_mode<synchronous>, transform_indices = @transform_4, window_bounds = array<i64: 1, 128>}, {pipeline_mode = #tpu.pipeline_mode<synchronous>, transform_indices = @transform_5, window_bounds = array<i64: 1, 128>}, {transform_indices = @transform_6, window_bounds = array<i64: 1, 8, 16, 128>}, {transform_indices = @transform_7, window_bounds = array<i64: 1, 1, 2, 128>}]} {
    %c0 = arith.constant 0 : index
    %c0_0 = arith.constant 0 : index
    %0 = vector.load %arg6[%c0, %c0_0] : memref<1x128xf32, #tpu.memory_space<vmem>>, vector<1x128xf32>
    %1 = vector.shape_cast %0 : vector<1x128xf32> to vector<1x1x1x128xf32>
    %c0_1 = arith.constant 0 : index
    %c0_2 = arith.constant 0 : index
    %2 = vector.load %arg7[%c0_1, %c0_2] : memref<1x128xf32, #tpu.memory_space<vmem>>, vector<1x128xf32>
    %3 = vector.shape_cast %2 : vector<1x128xf32> to vector<1x1x1x128xf32>
    %c0_3 = arith.constant 0 : index
    %c0_4 = arith.constant 0 : index
    %c0_5 = arith.constant 0 : index
    %c0_6 = arith.constant 0 : index
    %4 = vector.load %arg3[%c0_3, %c0_4, %c0_5, %c0_6] : memref<1x8x16x128xbf16, #tpu.memory_space<vmem>>, vector<1x8x16x128xbf16>
    %5 = arith.extf %4 : vector<1x8x16x128xbf16> to vector<1x8x16x128xf32>
    %6 = vector.broadcast %1 : vector<1x1x1x128xf32> to vector<1x8x16x128xf32>
    %7 = arith.mulf %5, %6 : vector<1x8x16x128xf32>
    %8 = vector.broadcast %3 : vector<1x1x1x128xf32> to vector<1x8x16x128xf32>
    %9 = arith.addf %7, %8 : vector<1x8x16x128xf32>
    %cst = arith.constant 0.000000e+00 : f32
    %10 = vector.broadcast %cst : f32 to vector<1x8x16x128xf32>
    %11 = arith.maximumf %9, %10 : vector<1x8x16x128xf32>
    %12 = arith.truncf %11 : vector<1x8x16x128xf32> to vector<1x8x16x128xbf16>
    %c0_7 = arith.constant 0 : index
    %c0_8 = arith.constant 0 : index
    %c0_9 = arith.constant 0 : index
    %c0_10 = arith.constant 0 : index
    %13 = vector.load %arg2[%c0_7, %c0_8, %c0_9, %c0_10] : memref<1x1x16x128xbf16, #tpu.memory_space<vmem>>, vector<1x1x16x128xbf16>
    %c0_i32 = arith.constant 0 : i32
    %14 = arith.cmpi eq, %arg1, %c0_i32 : i32
    %15 = arith.extf %13 : vector<1x1x16x128xbf16> to vector<1x1x16x128xf32>
    %16 = vector.broadcast %1 : vector<1x1x1x128xf32> to vector<1x1x16x128xf32>
    %17 = arith.mulf %15, %16 : vector<1x1x16x128xf32>
    %18 = vector.broadcast %3 : vector<1x1x1x128xf32> to vector<1x1x16x128xf32>
    %19 = arith.addf %17, %18 : vector<1x1x16x128xf32>
    %cst_11 = arith.constant 0.000000e+00 : f32
    %20 = vector.broadcast %cst_11 : f32 to vector<1x1x16x128xf32>
    %21 = arith.maximumf %19, %20 : vector<1x1x16x128xf32>
    %c0_i32_12 = arith.constant 0 : i32
    %c1_i32 = arith.constant 1 : i32
    %22 = arith.select %14, %c0_i32_12, %c1_i32 : i32
    %23 = arith.sitofp %22 : i32 to f32
    %24 = vector.broadcast %23 : f32 to vector<1x1x16x128xf32>
    %25 = arith.mulf %21, %24 : vector<1x1x16x128xf32>
    %26 = arith.truncf %25 : vector<1x1x16x128xf32> to vector<1x1x16x128xbf16>
    %c0_13 = arith.constant 0 : index
    %c0_14 = arith.constant 0 : index
    %c0_15 = arith.constant 0 : index
    %c0_16 = arith.constant 0 : index
    %27 = vector.load %arg4[%c0_13, %c0_14, %c0_15, %c0_16] : memref<1x1x16x128xbf16, #tpu.memory_space<vmem>>, vector<1x1x16x128xbf16>
    %c1_i32_17 = arith.constant 1 : i32
    %28 = arith.cmpi eq, %arg1, %c1_i32_17 : i32
    %29 = arith.extf %27 : vector<1x1x16x128xbf16> to vector<1x1x16x128xf32>
    %30 = vector.broadcast %1 : vector<1x1x1x128xf32> to vector<1x1x16x128xf32>
    %31 = arith.mulf %29, %30 : vector<1x1x16x128xf32>
    %32 = vector.broadcast %3 : vector<1x1x1x128xf32> to vector<1x1x16x128xf32>
    %33 = arith.addf %31, %32 : vector<1x1x16x128xf32>
    %cst_18 = arith.constant 0.000000e+00 : f32
    %34 = vector.broadcast %cst_18 : f32 to vector<1x1x16x128xf32>
    %35 = arith.maximumf %33, %34 : vector<1x1x16x128xf32>
    %c0_i32_19 = arith.constant 0 : i32
    %c1_i32_20 = arith.constant 1 : i32
    %36 = arith.select %28, %c0_i32_19, %c1_i32_20 : i32
    %37 = arith.sitofp %36 : i32 to f32
    %38 = vector.broadcast %37 : f32 to vector<1x1x16x128xf32>
    %39 = arith.mulf %35, %38 : vector<1x1x16x128xf32>
    %40 = arith.truncf %39 : vector<1x1x16x128xf32> to vector<1x1x16x128xbf16>
    %41 = tpu.concatenate %26, %12, %40 in 1 : vector<1x1x16x128xbf16>, vector<1x8x16x128xbf16>, vector<1x1x16x128xbf16> -> vector<1x10x16x128xbf16>
    %cst_21 = arith.constant 0.000000e+00 : bf16
    %42 = vector.broadcast %cst_21 : bf16 to vector<1x10x1x128xbf16>
    %43 = tpu.concatenate %42, %41, %42 in 2 : vector<1x10x1x128xbf16>, vector<1x10x16x128xbf16>, vector<1x10x1x128xbf16> -> vector<1x10x18x128xbf16>
    %cst_22 = arith.constant 0.000000e+00 : f32
    %44 = vector.broadcast %cst_22 : f32 to vector<128x128xf32>
    %45 = vector.extract_strided_slice %43 {offsets = [0, 0, 0, 0], sizes = [1, 8, 18, 128], strides = [1, 1, 1, 1]} : vector<1x10x18x128xbf16> to vector<1x8x18x128xbf16>
    %46 = vector.extract_strided_slice %45 {offsets = [0, 0, 0, 0], sizes = [1, 8, 16, 128], strides = [1, 1, 1, 1]} : vector<1x8x18x128xbf16> to vector<1x8x16x128xbf16>
    %47 = vector.extract_strided_slice %45 {offsets = [0, 0, 1, 0], sizes = [1, 8, 16, 128], strides = [1, 1, 1, 1]} : vector<1x8x18x128xbf16> to vector<1x8x16x128xbf16>
    %48 = vector.extract_strided_slice %45 {offsets = [0, 0, 2, 0], sizes = [1, 8, 16, 128], strides = [1, 1, 1, 1]} : vector<1x8x18x128xbf16> to vector<1x8x16x128xbf16>
    %49 = tpu.concatenate %46, %47, %48 in 3 : vector<1x8x16x128xbf16>, vector<1x8x16x128xbf16>, vector<1x8x16x128xbf16> -> vector<1x8x16x384xbf16>
    %50 = vector.shape_cast %49 : vector<1x8x16x384xbf16> to vector<128x384xbf16>
    %c0_23 = arith.constant 0 : index
    %c0_24 = arith.constant 0 : index
    %c0_25 = arith.constant 0 : index
    %51 = vector.load %arg5[%c0_23, %c0_24, %c0_25] : memref<3x384x128xbf16, #tpu.memory_space<vmem>>, vector<1x384x128xbf16>
    %52 = vector.shape_cast %51 : vector<1x384x128xbf16> to vector<384x128xbf16>
    %cst_26 = arith.constant dense<0.000000e+00> : vector<128x128xf32>
    %53 = tpu.matmul %50, %52, %cst_26 {dimension_numbers = #tpu.dot_dimension_numbers<[1], [0], [0], [1], [0, 0, 1, 1], [], []>} : vector<128x384xbf16>, vector<384x128xbf16>, vector<128x128xf32> -> vector<128x128xf32>
    %54 = arith.addf %44, %53 : vector<128x128xf32>
    %55 = vector.extract_strided_slice %43 {offsets = [0, 1, 0, 0], sizes = [1, 8, 18, 128], strides = [1, 1, 1, 1]} : vector<1x10x18x128xbf16> to vector<1x8x18x128xbf16>
    %56 = vector.extract_strided_slice %55 {offsets = [0, 0, 0, 0], sizes = [1, 8, 16, 128], strides = [1, 1, 1, 1]} : vector<1x8x18x128xbf16> to vector<1x8x16x128xbf16>
    %57 = vector.extract_strided_slice %55 {offsets = [0, 0, 1, 0], sizes = [1, 8, 16, 128], strides = [1, 1, 1, 1]} : vector<1x8x18x128xbf16> to vector<1x8x16x128xbf16>
    %58 = vector.extract_strided_slice %55 {offsets = [0, 0, 2, 0], sizes = [1, 8, 16, 128], strides = [1, 1, 1, 1]} : vector<1x8x18x128xbf16> to vector<1x8x16x128xbf16>
    %59 = tpu.concatenate %56, %57, %58 in 3 : vector<1x8x16x128xbf16>, vector<1x8x16x128xbf16>, vector<1x8x16x128xbf16> -> vector<1x8x16x384xbf16>
    %60 = vector.shape_cast %59 : vector<1x8x16x384xbf16> to vector<128x384xbf16>
    %c1 = arith.constant 1 : index
    %c0_27 = arith.constant 0 : index
    %c0_28 = arith.constant 0 : index
    %61 = vector.load %arg5[%c1, %c0_27, %c0_28] : memref<3x384x128xbf16, #tpu.memory_space<vmem>>, vector<1x384x128xbf16>
    %62 = vector.shape_cast %61 : vector<1x384x128xbf16> to vector<384x128xbf16>
    %cst_29 = arith.constant dense<0.000000e+00> : vector<128x128xf32>
    %63 = tpu.matmul %60, %62, %cst_29 {dimension_numbers = #tpu.dot_dimension_numbers<[1], [0], [0], [1], [0, 0, 1, 1], [], []>} : vector<128x384xbf16>, vector<384x128xbf16>, vector<128x128xf32> -> vector<128x128xf32>
    %64 = arith.addf %54, %63 : vector<128x128xf32>
    %65 = vector.extract_strided_slice %43 {offsets = [0, 2, 0, 0], sizes = [1, 8, 18, 128], strides = [1, 1, 1, 1]} : vector<1x10x18x128xbf16> to vector<1x8x18x128xbf16>
    %66 = vector.extract_strided_slice %65 {offsets = [0, 0, 0, 0], sizes = [1, 8, 16, 128], strides = [1, 1, 1, 1]} : vector<1x8x18x128xbf16> to vector<1x8x16x128xbf16>
    %67 = vector.extract_strided_slice %65 {offsets = [0, 0, 1, 0], sizes = [1, 8, 16, 128], strides = [1, 1, 1, 1]} : vector<1x8x18x128xbf16> to vector<1x8x16x128xbf16>
    %68 = vector.extract_strided_slice %65 {offsets = [0, 0, 2, 0], sizes = [1, 8, 16, 128], strides = [1, 1, 1, 1]} : vector<1x8x18x128xbf16> to vector<1x8x16x128xbf16>
    %69 = tpu.concatenate %66, %67, %68 in 3 : vector<1x8x16x128xbf16>, vector<1x8x16x128xbf16>, vector<1x8x16x128xbf16> -> vector<1x8x16x384xbf16>
    %70 = vector.shape_cast %69 : vector<1x8x16x384xbf16> to vector<128x384xbf16>
    %c2 = arith.constant 2 : index
    %c0_30 = arith.constant 0 : index
    %c0_31 = arith.constant 0 : index
    %71 = vector.load %arg5[%c2, %c0_30, %c0_31] : memref<3x384x128xbf16, #tpu.memory_space<vmem>>, vector<1x384x128xbf16>
    %72 = vector.shape_cast %71 : vector<1x384x128xbf16> to vector<384x128xbf16>
    %cst_32 = arith.constant dense<0.000000e+00> : vector<128x128xf32>
    %73 = tpu.matmul %70, %72, %cst_32 {dimension_numbers = #tpu.dot_dimension_numbers<[1], [0], [0], [1], [0, 0, 1, 1], [], []>} : vector<128x384xbf16>, vector<384x128xbf16>, vector<128x128xf32> -> vector<128x128xf32>
    %74 = arith.addf %64, %73 : vector<128x128xf32>
    %75 = vector.shape_cast %74 : vector<128x128xf32> to vector<1x8x16x128xf32>
    %76 = arith.truncf %75 : vector<1x8x16x128xf32> to vector<1x8x16x128xbf16>
    %c0_33 = arith.constant 0 : index
    %c0_34 = arith.constant 0 : index
    %c0_35 = arith.constant 0 : index
    %c0_36 = arith.constant 0 : index
    %77 = vector.load %arg8[%c0_33, %c0_34, %c0_35, %c0_36] : memref<1x8x16x128xbf16, #tpu.memory_space<vmem>>, vector<1x8x16x128xbf16>
    tpu.vector_store %arg8[%c0_33, %c0_34, %c0_35, %c0_36], %76 {strides = array<i32>} : memref<1x8x16x128xbf16, #tpu.memory_space<vmem>>, vector<1x8x16x128xbf16>,
    %cst_37 = arith.constant dense<0.000000e+00> : vector<128xf32>
    %78 = vector.multi_reduction <add>, %74, %cst_37 [0] : vector<128x128xf32> to vector<128xf32>
    %79 = vector.shape_cast %78 : vector<128xf32> to vector<1x128xf32>
    %80 = arith.mulf %74, %74 : vector<128x128xf32>
    %cst_38 = arith.constant dense<0.000000e+00> : vector<128xf32>
    %81 = vector.multi_reduction <add>, %80, %cst_38 [0] : vector<128x128xf32> to vector<128xf32>
    %82 = vector.shape_cast %81 : vector<128xf32> to vector<1x128xf32>
    %83 = tpu.concatenate %79, %82 in 0 : vector<1x128xf32>, vector<1x128xf32> -> vector<2x128xf32>
    %84 = vector.shape_cast %83 : vector<2x128xf32> to vector<1x1x2x128xf32>
    %c0_39 = arith.constant 0 : index
    %c0_40 = arith.constant 0 : index
    %c0_41 = arith.constant 0 : index
    %c0_42 = arith.constant 0 : index
    %85 = vector.load %arg9[%c0_39, %c0_40, %c0_41, %c0_42] : memref<1x1x2x128xf32, #tpu.memory_space<vmem>>, vector<1x1x2x128xf32>
    tpu.vector_store %arg9[%c0_39, %c0_40, %c0_41, %c0_42], %84 {strides = array<i32>} : memref<1x1x2x128xf32, #tpu.memory_space<vmem>>, vector<1x1x2x128xf32>,
    return
  }
  func.func @transform_0(%arg0: i32, %arg1: i32) -> (i32, i32, i32, i32) {
    %c8_i32 = arith.constant 8 : i32
    %0 = arith.muli %arg1, %c8_i32 : i32
    %c1_i32 = arith.constant 1 : i32
    %1 = arith.subi %0, %c1_i32 : i32
    %c0_i32 = arith.constant 0 : i32
    %2 = arith.maxsi %1, %c0_i32 : i32
    %c0_i32_0 = arith.constant 0 : i32
    %c0_i32_1 = arith.constant 0 : i32
    %c0_i32_2 = arith.constant 0 : i32
    return %arg0, %2, %c0_i32_0, %c0_i32_1 : i32, i32, i32, i32
  }
  func.func @transform_1(%arg0: i32, %arg1: i32) -> (i32, i32, i32, i32) {
    %c0_i32 = arith.constant 0 : i32
    %c0_i32_0 = arith.constant 0 : i32
    %c0_i32_1 = arith.constant 0 : i32
    return %arg0, %arg1, %c0_i32, %c0_i32_0 : i32, i32, i32, i32
  }
  func.func @transform_2(%arg0: i32, %arg1: i32) -> (i32, i32, i32, i32) {
    %c8_i32 = arith.constant 8 : i32
    %0 = arith.muli %arg1, %c8_i32 : i32
    %c8_i32_0 = arith.constant 8 : i32
    %1 = arith.addi %0, %c8_i32_0 : i32
    %c15_i32 = arith.constant 15 : i32
    %2 = arith.minsi %1, %c15_i32 : i32
    %c0_i32 = arith.constant 0 : i32
    %c0_i32_1 = arith.constant 0 : i32
    %c0_i32_2 = arith.constant 0 : i32
    return %arg0, %2, %c0_i32, %c0_i32_1 : i32, i32, i32, i32
  }
  func.func @transform_3(%arg0: i32, %arg1: i32) -> (i32, i32, i32) {
    %c0_i32 = arith.constant 0 : i32
    %c0_i32_0 = arith.constant 0 : i32
    %c0_i32_1 = arith.constant 0 : i32
    %c0_i32_2 = arith.constant 0 : i32
    return %c0_i32, %c0_i32_0, %c0_i32_1 : i32, i32, i32
  }
  func.func @transform_4(%arg0: i32, %arg1: i32) -> (i32, i32) {
    %c0_i32 = arith.constant 0 : i32
    %c0_i32_0 = arith.constant 0 : i32
    %c0_i32_1 = arith.constant 0 : i32
    return %c0_i32, %c0_i32_0 : i32, i32
  }
  func.func @transform_5(%arg0: i32, %arg1: i32) -> (i32, i32) {
    %c0_i32 = arith.constant 0 : i32
    %c0_i32_0 = arith.constant 0 : i32
    %c0_i32_1 = arith.constant 0 : i32
    return %c0_i32, %c0_i32_0 : i32, i32
  }
  func.func @transform_6(%arg0: i32, %arg1: i32) -> (i32, i32, i32, i32) {
    %c0_i32 = arith.constant 0 : i32
    %c0_i32_0 = arith.constant 0 : i32
    %c0_i32_1 = arith.constant 0 : i32
    return %arg0, %arg1, %c0_i32, %c0_i32_0 : i32, i32, i32, i32
  }
  func.func @transform_7(%arg0: i32, %arg1: i32) -> (i32, i32, i32, i32) {
    %c0_i32 = arith.constant 0 : i32
    %c0_i32_0 = arith.constant 0 : i32
    %c0_i32_1 = arith.constant 0 : i32
    return %arg0, %arg1, %c0_i32, %c0_i32_0 : i32, i32, i32, i32
  }
}

module attributes {stable_mosaic.version = 11 : i64} {
  func.func @_bn_relu_kernel(%arg0: i32, %arg1: i32, %arg2: memref<1x16x16x128xbf16, #tpu.memory_space<vmem>>, %arg3: memref<1x128xf32, #tpu.memory_space<vmem>>, %arg4: memref<1x128xf32, #tpu.memory_space<vmem>>, %arg5: memref<1x16x16x128xf32, #tpu.memory_space<vmem>>) attributes {dimension_semantics = [#tpu.dimension_semantics<parallel>, #tpu.dimension_semantics<parallel>], iteration_bounds = array<i64: 2, 1>, scalar_prefetch = 0 : i64, scratch_operands = 0 : i64, tpu.core_type = #tpu.core_type<tc>, window_params = [{transform_indices = @transform_0, window_bounds = array<i64: 1, 16, 16, 128>}, {pipeline_mode = #tpu.pipeline_mode<synchronous>, transform_indices = @transform_1, window_bounds = array<i64: 1, 128>}, {pipeline_mode = #tpu.pipeline_mode<synchronous>, transform_indices = @transform_2, window_bounds = array<i64: 1, 128>}, {transform_indices = @transform_3, window_bounds = array<i64: 1, 16, 16, 128>}]} {
    %c0 = arith.constant 0 : index
    %c0_0 = arith.constant 0 : index
    %0 = vector.load %arg3[%c0, %c0_0] : memref<1x128xf32, #tpu.memory_space<vmem>>, vector<1x128xf32>
    %1 = vector.shape_cast %0 : vector<1x128xf32> to vector<1x1x1x128xf32>
    %c0_1 = arith.constant 0 : index
    %c0_2 = arith.constant 0 : index
    %2 = vector.load %arg4[%c0_1, %c0_2] : memref<1x128xf32, #tpu.memory_space<vmem>>, vector<1x128xf32>
    %3 = vector.shape_cast %2 : vector<1x128xf32> to vector<1x1x1x128xf32>
    %c0_3 = arith.constant 0 : index
    %c0_4 = arith.constant 0 : index
    %c0_5 = arith.constant 0 : index
    %c0_6 = arith.constant 0 : index
    %4 = vector.load %arg2[%c0_3, %c0_4, %c0_5, %c0_6] : memref<1x16x16x128xbf16, #tpu.memory_space<vmem>>, vector<1x16x16x128xbf16>
    %5 = arith.extf %4 : vector<1x16x16x128xbf16> to vector<1x16x16x128xf32>
    %6 = vector.broadcast %1 : vector<1x1x1x128xf32> to vector<1x16x16x128xf32>
    %7 = arith.mulf %5, %6 : vector<1x16x16x128xf32>
    %8 = vector.broadcast %3 : vector<1x1x1x128xf32> to vector<1x16x16x128xf32>
    %9 = arith.addf %7, %8 : vector<1x16x16x128xf32>
    %cst = arith.constant 0.000000e+00 : f32
    %10 = vector.broadcast %cst : f32 to vector<1x16x16x128xf32>
    %11 = arith.maximumf %9, %10 : vector<1x16x16x128xf32>
    %c0_7 = arith.constant 0 : index
    %c0_8 = arith.constant 0 : index
    %c0_9 = arith.constant 0 : index
    %c0_10 = arith.constant 0 : index
    %12 = vector.load %arg5[%c0_7, %c0_8, %c0_9, %c0_10] : memref<1x16x16x128xf32, #tpu.memory_space<vmem>>, vector<1x16x16x128xf32>
    tpu.vector_store %arg5[%c0_7, %c0_8, %c0_9, %c0_10], %11 {strides = array<i32>} : memref<1x16x16x128xf32, #tpu.memory_space<vmem>>, vector<1x16x16x128xf32>,
    return
  }
  func.func @transform_0(%arg0: i32, %arg1: i32) -> (i32, i32, i32, i32) {
    %c0_i32 = arith.constant 0 : i32
    %c0_i32_0 = arith.constant 0 : i32
    %c0_i32_1 = arith.constant 0 : i32
    return %arg0, %arg1, %c0_i32, %c0_i32_0 : i32, i32, i32, i32
  }
  func.func @transform_1(%arg0: i32, %arg1: i32) -> (i32, i32) {
    %c0_i32 = arith.constant 0 : i32
    %c0_i32_0 = arith.constant 0 : i32
    %c0_i32_1 = arith.constant 0 : i32
    return %c0_i32, %c0_i32_0 : i32, i32
  }
  func.func @transform_2(%arg0: i32, %arg1: i32) -> (i32, i32) {
    %c0_i32 = arith.constant 0 : i32
    %c0_i32_0 = arith.constant 0 : i32
    %c0_i32_1 = arith.constant 0 : i32
    return %c0_i32, %c0_i32_0 : i32, i32
  }
  func.func @transform_3(%arg0: i32, %arg1: i32) -> (i32, i32, i32, i32) {
    %c0_i32 = arith.constant 0 : i32
    %c0_i32_0 = arith.constant 0 : i32
    %c0_i32_1 = arith.constant 0 : i32
    return %arg0, %arg1, %c0_i32, %c0_i32_0 : i32, i32, i32, i32
  }
}

</mosaic_0001>

<llo_original>
// kernel: double_conv.5
$region0: #{double_conv.5}
  #allocation0 [shape = 'u32[]', space=smem, size = 0x4, offset = 0x4, fixed_abs, tag = 'smem constant byte address 0x4 - core index']
  #allocation1 [shape = 'u32[144,128]{1,0:T(1,128)}', space=vmem, size = 0x12000, scoped, tag = 'internal scratch']
  %s0 = inlined_call_operand.hbm [shape: bf16[2,16,16,128], index: 0, kind: input, shape index: {}]
  %s1 = inlined_call_operand.hbm [shape: f32[1,128], index: 1, kind: input, shape index: {}]
  %s2 = inlined_call_operand.hbm [shape: f32[1,128], index: 2, kind: input, shape index: {}]
  %s3 = inlined_call_operand.hbm [shape: f32[2,16,16,128], index: 3, kind: output, shape index: {}]
  %s4 = sld [smem:[#allocation0]]
  $region57: #{double_conv.5} parent=0
    _
  %s6 = ssub.s32 1, %s4
  %s7 = scalar_select 0, %s6, %s4
  $region1: #{double_conv.5} parent=0
    #allocation2 [shape = 'u8[131072]{0}', space=vmem, size = 0x20000, scoped, tag = 'input window, operand 0']
    #allocation3 [shape = 's32[2]{0}', space=sflag, size = 0x8, scoped, tag = 'scoped memory for double_conv.5']
    #allocation4 [shape = 's32[2]{0}', space=sflag, size = 0x8, scoped, tag = 'scoped memory for double_conv.5']
    #allocation5 [shape = 'u8[512]{0}', space=vmem, size = 0x400, scoped, tag = 'input window, operand 1, single buffered']
    #allocation6 [shape = 's32[1]{0}', space=sflag, size = 0x4, scoped, tag = 'scoped memory for double_conv.5']
    #allocation7 [shape = 'u8[512]{0}', space=vmem, size = 0x400, scoped, tag = 'input window, operand 2, single buffered']
    #allocation8 [shape = 'u8[262144]{0}', space=vmem, size = 0x40000, scoped, tag = 'output window, operand 0']
    %8 = vsyncpa [#allocation3], 0
    %s9 = scalar_lea.sflag [#allocation3], 1
    %10 = vsyncpa %s9, 0
    %11 = vsyncpa [#allocation6], 0
    %12 = vsyncpa [#allocation4], 0
    %s13 = scalar_lea.sflag [#allocation4], 1
    %14 = vsyncpa %s13, 0
    loop: start=0, step=1, limit=4
    $region2: #{double_conv.5} parent=1 // loop_pre_header
      _
    $region3: #{double_conv.5} parent=1 // loop_header
      %s16 = sphi 0, %s20
      %p17 = scmp.ge.s32.totalorder %s16, 4
      %s23 = sphi 0, %s35
      %s24 = sphi 0, %s31
      %s25 = sphi 0, %s23
      %s26 = sphi 0, %s24
      %s27 = sphi 0, %s25
      %s28 = sphi 0, %s26
      %s40 = sphi 0, %s42
      %s43 = sphi 0, %s40
      %s44 = sphi 0, %s43
      %s60 = sphi 0, %s44
      %s64 = sphi 0, %s64
      %s66 = sphi 0, %s64
      %s67 = sphi 0, %s66
      %s81 = sphi 0, %s67
      %s85 = sphi 0, %s85
      %s87 = sphi 0, %s85
      %s88 = sphi 0, %s87
      %s102 = sphi 0, %s88
      %s110 = sphi 0, %s112
      %s113 = sphi 0, %s110
      %s114 = sphi 0, %s113
      %s130 = sphi 0, %s114
    $region4: #{double_conv.5} parent=1 // loop_header_branch
      %19 = sbr.rel (%p17) target = $region8
    $region5: #{double_conv.5} parent=1 // loop_body
      %s21 = ssub.s32 %s16, 1
      %s22 = ssub.s32 %s16, 2
      %s29 = sadd.s32 1, %s24
      %p30 = scmp.ge.s32.totalorder %s29, 1
      %s31 = scalar_select %p30, 0, %s29
      %s32 = sadd.s32 1, %s23
      %s33 = scalar_select %p30, %s32, %s23
      %p34 = scmp.ge.s32.totalorder %s33, 2
      %s35 = scalar_select %p34, 0, %s33
      %s36 = ssub.s32 %s23, %s35
      %s37 = ssub.s32 %s24, %s31
      %s38 = sor.u32 %s36, %s37
      %p39 = scmp.eq.s32.totalorder %s38, 0
      %s41 = sadd.s32 %s40, 1
      %s42 = scalar_select %p39, %s40, %s41
      %p45 = pneg %p39
      %p46 = scmp.eq.s32.totalorder %s16, 1
      %p47 = por %p45, %p46
      %p48 = scmp.ne.s32.totalorder %s40, %s43
      %p49 = scmp.eq.s32.totalorder %s16, 0
      %p50 = por %p48, %p49
      %p51 = scmp.ne.s32.totalorder %s40, %s43
      %p52 = scmp.eq.s32.totalorder %s21, 1
      %p53 = por %p51, %p52
      %p54 = scmp.ne.s32.totalorder %s43, %s44
      %p55 = scmp.eq.s32.totalorder %s21, 0
      %p56 = por %p54, %p55
      %p57 = scmp.ne.s32.totalorder %s43, %s44
      %p58 = scmp.eq.s32.totalorder %s22, 1
      %p59 = por %p57, %p58
      %p61 = scmp.ne.s32.totalorder %s44, %s60
      %p62 = scmp.eq.s32.totalorder %s22, 0
      %p63 = por %p61, %p62
      %s65 = sadd.s32 %s64, 1
      %p68 = scmp.eq.s32.totalorder %s16, 1
      %p69 = scmp.ne.s32.totalorder %s64, %s66
      %p70 = scmp.eq.s32.totalorder %s16, 0
      %p71 = por %p69, %p70
      %p72 = scmp.ne.s32.totalorder %s64, %s66
      %p73 = scmp.eq.s32.totalorder %s21, 1
      %p74 = por %p72, %p73
      %p75 = scmp.ne.s32.totalorder %s66, %s67
      %p76 = scmp.eq.s32.totalorder %s21, 0
      %p77 = por %p75, %p76
      %p78 = scmp.ne.s32.totalorder %s66, %s67
      %p79 = scmp.eq.s32.totalorder %s22, 1
      %p80 = por %p78, %p79
      %p82 = scmp.ne.s32.totalorder %s67, %s81
      %p83 = scmp.eq.s32.totalorder %s22, 0
      %p84 = por %p82, %p83
      %s86 = sadd.s32 %s85, 1
      %p89 = scmp.eq.s32.totalorder %s16, 1
      %p90 = scmp.ne.s32.totalorder %s85, %s87
      %p91 = scmp.eq.s32.totalorder %s16, 0
      %p92 = por %p90, %p91
      %p93 = scmp.ne.s32.totalorder %s85, %s87
      %p94 = scmp.eq.s32.totalorder %s21, 1
      %p95 = por %p93, %p94
      %p96 = scmp.ne.s32.totalorder %s87, %s88
      %p97 = scmp.eq.s32.totalorder %s21, 0
      %p98 = por %p96, %p97
      %p99 = scmp.ne.s32.totalorder %s87, %s88
      %p100 = scmp.eq.s32.totalorder %s22, 1
      %p101 = por %p99, %p100
      %p103 = scmp.ne.s32.totalorder %s88, %s102
      %p104 = scmp.eq.s32.totalorder %s22, 0
      %p105 = por %p103, %p104
      %s106 = ssub.s32 %s23, %s35
      %s107 = ssub.s32 %s24, %s31
      %s108 = sor.u32 %s106, %s107
      %p109 = scmp.eq.s32.totalorder %s108, 0
      %s111 = sadd.s32 %s110, 1
      %s112 = scalar_select %p109, %s110, %s111
      %p115 = pneg %p109
      %p116 = scmp.eq.s32.totalorder %s16, 1
      %p117 = por %p115, %p116
      %p118 = scmp.ne.s32.totalorder %s110, %s113
      %p119 = scmp.eq.s32.totalorder %s16, 0
      %p120 = por %p118, %p119
      %p121 = scmp.ne.s32.totalorder %s110, %s113
      %p122 = scmp.eq.s32.totalorder %s21, 1
      %p123 = por %p121, %p122
      %p124 = scmp.ne.s32.totalorder %s113, %s114
      %p125 = scmp.eq.s32.totalorder %s21, 0
      %p126 = por %p124, %p125
      %p127 = scmp.ne.s32.totalorder %s113, %s114
      %p128 = scmp.eq.s32.totalorder %s22, 1
      %p129 = por %p127, %p128
      %p131 = scmp.ne.s32.totalorder %s114, %s130
      %p132 = scmp.eq.s32.totalorder %s22, 0
      %p133 = por %p131, %p132
      %p134 = scmp.le.s32.totalorder 1, %s16
      %p135 = scmp.lt.s32.totalorder %s16, 3
      %p136 = pnand %p134, %p135
      %p137 = pneg %p136
      // Predicated region
      $region9: #{double_conv.5} parent=5 // pred_check
        _
      $region10: #{double_conv.5} parent=5 // pred_check_branch
        %139 = sbr.rel (%p136) target = $region12
      $region11: #{double_conv.5} parent=5 // pred_region
        %s140 = ssub.s32 %s16, 1
        // Predicated region
        $region13: #{double_conv.5} parent=11 // pred_check
          %p141 = pneg %p77
        $region14: #{double_conv.5} parent=11 // pred_check_branch
          %143 = sbr.rel (%p141) target = $region16
        $region15: #{double_conv.5} parent=11 // pred_region
          %s145 = ssub.s32 16, 16
          %146 = vsyncadd [#allocation6], %s145
          %s148 = sshll.u32 [#allocation5], 4
          %s149 = int_to_ptr.vmem [resolvable:$true] %s148
          %151 = dma.hbm_to_vmem [thread:$0]  %s1, 16, %s149, [#allocation6]
        $region16: #{double_conv.5} parent=11 // pred_fallthru
          _
        // Predicated region
        $region17: #{double_conv.5} parent=11 // pred_check
          %p152 = pneg %p98
        $region18: #{double_conv.5} parent=11 // pred_check_branch
          %154 = sbr.rel (%p152) target = $region20
        $region19: #{double_conv.5} parent=11 // pred_region
          %s156 = ssub.s32 16, 16
          %157 = vsyncadd [#allocation6], %s156
          %s159 = sshll.u32 [#allocation7], 4
          %s160 = int_to_ptr.vmem [resolvable:$true] %s159
          %162 = dma.hbm_to_vmem [thread:$0]  %s2, 16, %s160, [#allocation6]
        $region20: #{double_conv.5} parent=11 // pred_fallthru
          _
      $region12: #{double_conv.5} parent=5 // pred_fallthru
        _
      %p163 = scmp.lt.s32.totalorder %s16, 2
      // Predicated region
      $region21: #{double_conv.5} parent=5 // pred_check
        %p164 = pneg %p163
      $region22: #{double_conv.5} parent=5 // pred_check_branch
        %166 = sbr.rel (%p164) target = $region24
      $region23: #{double_conv.5} parent=5 // pred_region
        // Predicated region
        $region25: #{double_conv.5} parent=23 // pred_check
          %p167 = pneg %p50
        $region26: #{double_conv.5} parent=23 // pred_check_branch
          %169 = sbr.rel (%p167) target = $region28
        $region27: #{double_conv.5} parent=23 // pred_region
          %s170 = sand.u32 %s40, 1
          %s171 = scalar_lea.sflag [#allocation3], %s170
          %s172 = sand.u32 %s40, 1
          %s173 = smul.addr %s172, 128
          %s174 = scalar_lea.vmem [#allocation2], %s173
          %s175 = smul.u32 16, %s24
          %s177 = ssub.s32 2048, 2048
          %178 = vsyncadd %s171, %s177
          %s179 = smul.addr %s175, 2
          %s180 = smul.addr %s23, 32
          %s181 = sadd.s32 %s179, %s180
          %s182 = smul.addr %s181, 64
          %s183 = scalar_lea.hbm %s0, %s182
          %s184 = sshll.u32 %s174, 4
          %s185 = int_to_ptr.vmem [resolvable:$true] %s184
          %190 = dma.hbm_to_vmem [thread:$0]  %s183, 2048, %s185, %s171, 64, 64, 4
        $region28: #{double_conv.5} parent=23 // pred_fallthru
          _
      $region24: #{double_conv.5} parent=5 // pred_fallthru
        _
      %p191 = scmp.le.s32.totalorder 1, %s16
      %p192 = scmp.lt.s32.totalorder %s16, 3
      %p193 = pnand %p191, %p192
      %p194 = pneg %p193
      // Predicated region
      $region29: #{double_conv.5} parent=5 // pred_check
        _
      $region30: #{double_conv.5} parent=5 // pred_check_branch
        %196 = sbr.rel (%p193) target = $region32
      $region31: #{double_conv.5} parent=5 // pred_region
        %s197 = ssub.s32 %s16, 1
        %s198 = sand.u32 %s43, 1
        %s199 = scalar_lea.sflag [#allocation3], %s198
        %s200 = sand.u32 %s43, 1
        %s201 = smul.addr %s200, 128
        %s202 = scalar_lea.vmem [#allocation2], %s201
        // Predicated region
        $region33: #{double_conv.5} parent=31 // pred_check
          %p203 = pneg %p56
        $region34: #{double_conv.5} parent=31 // pred_check_branch
          %205 = sbr.rel (%p203) target = $region36
        $region35: #{double_conv.5} parent=31 // pred_region
          %206 = dma.done %s199, 2048
        $region36: #{double_conv.5} parent=31 // pred_fallthru
          _
        // Predicated region
        $region37: #{double_conv.5} parent=31 // pred_check
          %p207 = pneg %p77
        $region38: #{double_conv.5} parent=31 // pred_check_branch
          %209 = sbr.rel (%p207) target = $region40
        $region39: #{double_conv.5} parent=31 // pred_region
          %210 = dma.done [#allocation6], 16
        $region40: #{double_conv.5} parent=31 // pred_fallthru
          _
        // Predicated region
        $region41: #{double_conv.5} parent=31 // pred_check
          %p211 = pneg %p98
        $region42: #{double_conv.5} parent=31 // pred_check_branch
          %213 = sbr.rel (%p211) target = $region44
        $region43: #{double_conv.5} parent=31 // pred_region
          %214 = dma.done [#allocation6], 16
        $region44: #{double_conv.5} parent=31 // pred_fallthru
          _
        %s215 = sand.u32 %s43, 1
        %s216 = scalar_lea.sflag [#allocation3], %s215
        %s217 = sand.u32 %s43, 1
        %s218 = smul.addr %s217, 128
        %s219 = scalar_lea.vmem [#allocation2], %s218
        %p220 = pneg %p56
        %p221 = pneg %p53
        %p222 = pneg %p77
        %p223 = pneg %p74
        %p224 = pneg %p98
        %p225 = pneg %p95
        %p226 = pneg %p126
        %p227 = pneg %p123
        %s228 = sand.u32 %s113, 1
        %s229 = scalar_lea.sflag [#allocation4], %s228
        %s230 = sand.u32 %s113, 1
        %s231 = smul.addr %s230, 256
        %s232 = scalar_lea.vmem [#allocation8], %s231
        %s233 = smul.u32 16, %s26
        %s234 = smul.u32 16, %s26
        %v235 = vld [vmem:[#allocation5] sm:$0x1]
        %v236 = vld [vmem:[#allocation7] sm:$0x1]
        %v237 = vld [vmem:[%s202] sm:$0xf]
        %v238 = vld [vmem:[%s202 + $0x4] sm:$0xf]
        %v239 = vld [vmem:[%s202 + $0x8] sm:$0xf]
        %v240 = vld [vmem:[%s202 + $0xc] sm:$0xf]
        %v241 = vld [vmem:[%s202 + $0x10] sm:$0xf]
        %v242 = vld [vmem:[%s202 + $0x14] sm:$0xf]
        %v243 = vld [vmem:[%s202 + $0x18] sm:$0xf]
        %v244 = vld [vmem:[%s202 + $0x1c] sm:$0xf]
        %v245 = vld [vmem:[%s202 + $0x20] sm:$0xf]
        %v246 = vld [vmem:[%s202 + $0x24] sm:$0xf]
        %v247 = vld [vmem:[%s202 + $0x28] sm:$0xf]
        %v248 = vld [vmem:[%s202 + $0x2c] sm:$0xf]
        %v249 = vld [vmem:[%s202 + $0x30] sm:$0xf]
        %v250 = vld [vmem:[%s202 + $0x34] sm:$0xf]
        %v251 = vld [vmem:[%s202 + $0x38] sm:$0xf]
        %v252 = vld [vmem:[%s202 + $0x3c] sm:$0xf]
        %v253 = vld [vmem:[%s202 + $0x40] sm:$0xf]
        %v254 = vld [vmem:[%s202 + $0x44] sm:$0xf]
        %v255 = vld [vmem:[%s202 + $0x48] sm:$0xf]
        %v256 = vld [vmem:[%s202 + $0x4c] sm:$0xf]
        %v257 = vld [vmem:[%s202 + $0x50] sm:$0xf]
        %v258 = vld [vmem:[%s202 + $0x54] sm:$0xf]
        %v259 = vld [vmem:[%s202 + $0x58] sm:$0xf]
        %v260 = vld [vmem:[%s202 + $0x5c] sm:$0xf]
        %v261 = vld [vmem:[%s202 + $0x60] sm:$0xf]
        %v262 = vld [vmem:[%s202 + $0x64] sm:$0xf]
        %v263 = vld [vmem:[%s202 + $0x68] sm:$0xf]
        %v264 = vld [vmem:[%s202 + $0x6c] sm:$0xf]
        %v265 = vld [vmem:[%s202 + $0x70] sm:$0xf]
        %v266 = vld [vmem:[%s202 + $0x74] sm:$0xf]
        %v267 = vld [vmem:[%s202 + $0x78] sm:$0xf]
        %v268 = vld [vmem:[%s202 + $0x7c] sm:$0xf]
        %v269 = vunpack.c.l.bf16 %v237
        %v270 = vunpack.c.l.bf16 %v238
        %v271 = vunpack.c.l.bf16 %v239
        %v272 = vunpack.c.l.bf16 %v240
        %v273 = vunpack.c.l.bf16 %v241
        %v274 = vunpack.c.l.bf16 %v242
        %v275 = vunpack.c.l.bf16 %v243
        %v276 = vunpack.c.l.bf16 %v244
        %v277 = vunpack.c.l.bf16 %v245
        %v278 = vunpack.c.l.bf16 %v246
        %v279 = vunpack.c.l.bf16 %v247
        %v280 = vunpack.c.l.bf16 %v248
        %v281 = vunpack.c.l.bf16 %v249
        %v282 = vunpack.c.l.bf16 %v250
        %v283 = vunpack.c.l.bf16 %v251
        %v284 = vunpack.c.l.bf16 %v252
        %v285 = vunpack.c.l.bf16 %v253
        %v286 = vunpack.c.l.bf16 %v254
        %v287 = vunpack.c.l.bf16 %v255
        %v288 = vunpack.c.l.bf16 %v256
        %v289 = vunpack.c.l.bf16 %v257
        %v290 = vunpack.c.l.bf16 %v258
        %v291 = vunpack.c.l.bf16 %v259
        %v292 = vunpack.c.l.bf16 %v260
        %v293 = vunpack.c.l.bf16 %v261
        %v294 = vunpack.c.l.bf16 %v262
        %v295 = vunpack.c.l.bf16 %v263
        %v296 = vunpack.c.l.bf16 %v264
        %v297 = vunpack.c.l.bf16 %v265
        %v298 = vunpack.c.l.bf16 %v266
        %v299 = vunpack.c.l.bf16 %v267
        %v300 = vunpack.c.l.bf16 %v268
        %v302 = vlaneseq
        %v303 = vshrl.u32 %v302, 7
        %v304 = vsub.s32 0, %v303
        %v305 = vrot.slane %v235, %v304
        %v307 = vmul.f32 %v269, %v305
        %v308 = vmul.f32 %v270, %v305
        %v309 = vmul.f32 %v271, %v305
        %v310 = vmul.f32 %v272, %v305
        %v311 = vmul.f32 %v273, %v305
        %v312 = vmul.f32 %v274, %v305
        %v313 = vmul.f32 %v275, %v305
        %v314 = vmul.f32 %v276, %v305
        %v315 = vmul.f32 %v277, %v305
        %v316 = vmul.f32 %v278, %v305
        %v317 = vmul.f32 %v279, %v305
        %v318 = vmul.f32 %v280, %v305
        %v319 = vmul.f32 %v281, %v305
        %v320 = vmul.f32 %v282, %v305
        %v321 = vmul.f32 %v283, %v305
        %v322 = vmul.f32 %v284, %v305
        %v323 = vmul.f32 %v285, %v305
        %v324 = vmul.f32 %v286, %v305
        %v325 = vmul.f32 %v287, %v305
        %v326 = vmul.f32 %v288, %v305
        %v327 = vmul.f32 %v289, %v305
        %v328 = vmul.f32 %v290, %v305
        %v329 = vmul.f32 %v291, %v305
        %v330 = vmul.f32 %v292, %v305
        %v331 = vmul.f32 %v293, %v305
        %v332 = vmul.f32 %v294, %v305
        %v333 = vmul.f32 %v295, %v305
        %v334 = vmul.f32 %v296, %v305
        %v335 = vmul.f32 %v297, %v305
        %v336 = vmul.f32 %v298, %v305
        %v337 = vmul.f32 %v299, %v305
        %v338 = vmul.f32 %v300, %v305
        %v340 = vlaneseq
        %v341 = vshrl.u32 %v340, 7
        %v342 = vsub.s32 0, %v341
        %v343 = vrot.slane %v236, %v342
        %v345 = vadd.f32 %v307, %v343
        %v346 = vadd.f32 %v308, %v343
        %v347 = vadd.f32 %v309, %v343
        %v348 = vadd.f32 %v310, %v343
        %v349 = vadd.f32 %v311, %v343
        %v350 = vadd.f32 %v312, %v343
        %v351 = vadd.f32 %v313, %v343
        %v352 = vadd.f32 %v314, %v343
        %v353 = vadd.f32 %v315, %v343
        %v354 = vadd.f32 %v316, %v343
        %v355 = vadd.f32 %v317, %v343
        %v356 = vadd.f32 %v318, %v343
        %v357 = vadd.f32 %v319, %v343
        %v358 = vadd.f32 %v320, %v343
        %v359 = vadd.f32 %v321, %v343
        %v360 = vadd.f32 %v322, %v343
        %v361 = vadd.f32 %v323, %v343
        %v362 = vadd.f32 %v324, %v343
        %v363 = vadd.f32 %v325, %v343
        %v364 = vadd.f32 %v326, %v343
        %v365 = vadd.f32 %v327, %v343
        %v366 = vadd.f32 %v328, %v343
        %v367 = vadd.f32 %v329, %v343
        %v368 = vadd.f32 %v330, %v343
        %v369 = vadd.f32 %v331, %v343
        %v370 = vadd.f32 %v332, %v343
        %v371 = vadd.f32 %v333, %v343
        %v372 = vadd.f32 %v334, %v343
        %v373 = vadd.f32 %v335, %v343
        %v374 = vadd.f32 %v336, %v343
        %v375 = vadd.f32 %v337, %v343
        %v376 = vadd.f32 %v338, %v343
        %v377 = vmax.f32 %v345, 0.0
        %v378 = vmax.f32 %v346, 0.0
        %v379 = vmax.f32 %v347, 0.0
        %v380 = vmax.f32 %v348, 0.0
        %v381 = vmax.f32 %v349, 0.0
        %v382 = vmax.f32 %v350, 0.0
        %v383 = vmax.f32 %v351, 0.0
        %v384 = vmax.f32 %v352, 0.0
        %v385 = vmax.f32 %v353, 0.0
        %v386 = vmax.f32 %v354, 0.0
        %v387 = vmax.f32 %v355, 0.0
        %v388 = vmax.f32 %v356, 0.0
        %v389 = vmax.f32 %v357, 0.0
        %v390 = vmax.f32 %v358, 0.0
        %v391 = vmax.f32 %v359, 0.0
        %v392 = vmax.f32 %v360, 0.0
        %v393 = vmax.f32 %v361, 0.0
        %v394 = vmax.f32 %v362, 0.0
        %v395 = vmax.f32 %v363, 0.0
        %v396 = vmax.f32 %v364, 0.0
        %v397 = vmax.f32 %v365, 0.0
        %v398 = vmax.f32 %v366, 0.0
        %v399 = vmax.f32 %v367, 0.0
        %v400 = vmax.f32 %v368, 0.0
        %v401 = vmax.f32 %v369, 0.0
        %v402 = vmax.f32 %v370, 0.0
        %v403 = vmax.f32 %v371, 0.0
        %v404 = vmax.f32 %v372, 0.0
        %v405 = vmax.f32 %v373, 0.0
        %v406 = vmax.f32 %v374, 0.0
        %v407 = vmax.f32 %v375, 0.0
        %v408 = vmax.f32 %v376, 0.0
        %409 = vst [vmem:[%s232] sm:$0xff] %v377
        %410 = vst [vmem:[%s232 + $0x8] sm:$0xff] %v378
        %411 = vst [vmem:[%s232 + $0x10] sm:$0xff] %v379
        %412 = vst [vmem:[%s232 + $0x18] sm:$0xff] %v380
        %413 = vst [vmem:[%s232 + $0x20] sm:$0xff] %v381
        %414 = vst [vmem:[%s232 + $0x28] sm:$0xff] %v382
        %415 = vst [vmem:[%s232 + $0x30] sm:$0xff] %v383
        %416 = vst [vmem:[%s232 + $0x38] sm:$0xff] %v384
        %417 = vst [vmem:[%s232 + $0x40] sm:$0xff] %v385
        %418 = vst [vmem:[%s232 + $0x48] sm:$0xff] %v386
        %419 = vst [vmem:[%s232 + $0x50] sm:$0xff] %v387
        %420 = vst [vmem:[%s232 + $0x58] sm:$0xff] %v388
        %421 = vst [vmem:[%s232 + $0x60] sm:$0xff] %v389
        %422 = vst [vmem:[%s232 + $0x68] sm:$0xff] %v390
        %423 = vst [vmem:[%s232 + $0x70] sm:$0xff] %v391
        %424 = vst [vmem:[%s232 + $0x78] sm:$0xff] %v392
        %425 = vst [vmem:[%s232 + $0x80] sm:$0xff] %v393
        %426 = vst [vmem:[%s232 + $0x88] sm:$0xff] %v394
        %427 = vst [vmem:[%s232 + $0x90] sm:$0xff] %v395
        %428 = vst [vmem:[%s232 + $0x98] sm:$0xff] %v396
        %429 = vst [vmem:[%s232 + $0xa0] sm:$0xff] %v397
        %430 = vst [vmem:[%s232 + $0xa8] sm:$0xff] %v398
        %431 = vst [vmem:[%s232 + $0xb0] sm:$0xff] %v399
        %432 = vst [vmem:[%s232 + $0xb8] sm:$0xff] %v400
        %433 = vst [vmem:[%s232 + $0xc0] sm:$0xff] %v401
        %434 = vst [vmem:[%s232 + $0xc8] sm:$0xff] %v402
        %435 = vst [vmem:[%s232 + $0xd0] sm:$0xff] %v403
        %436 = vst [vmem:[%s232 + $0xd8] sm:$0xff] %v404
        %437 = vst [vmem:[%s232 + $0xe0] sm:$0xff] %v405
        %438 = vst [vmem:[%s232 + $0xe8] sm:$0xff] %v406
        %439 = vst [vmem:[%s232 + $0xf0] sm:$0xff] %v407
        %440 = vst [vmem:[%s232 + $0xf8] sm:$0xff] %v408
        %s441 = sand.u32 %s113, 1
        %s442 = scalar_lea.sflag [#allocation4], %s441
        %s443 = sand.u32 %s113, 1
        %s444 = smul.addr %s443, 256
        %s445 = scalar_lea.vmem [#allocation8], %s444
        // Predicated region
        $region45: #{double_conv.5} parent=31 // pred_check
          %p446 = pneg %p123
        $region46: #{double_conv.5} parent=31 // pred_check_branch
          %448 = sbr.rel (%p446) target = $region48
        $region47: #{double_conv.5} parent=31 // pred_region
          %s449 = smul.u32 16, %s26
          %s451 = ssub.s32 4096, 4096
          %452 = vsyncadd %s442, %s451
          %s453 = smul.addr %s449, 2
          %s454 = smul.addr %s25, 32
          %s455 = sadd.s32 %s453, %s454
          %s456 = smul.addr %s455, 128
          %s457 = scalar_lea.hbm %s3, %s456
          %s458 = sshll.u32 %s445, 4
          %s459 = int_to_ptr.vmem [resolvable:$true] %s458
          %464 = dma.vmem_to_hbm [thread:$0]  %s459, 4096, %s457, %s442, 128, 128, 8
        $region48: #{double_conv.5} parent=31 // pred_fallthru
          _
      $region32: #{double_conv.5} parent=5 // pred_fallthru
        _
      %p465 = scmp.le.s32.totalorder 2, %s16
      // Predicated region
      $region49: #{double_conv.5} parent=5 // pred_check
        %p466 = pneg %p465
      $region50: #{double_conv.5} parent=5 // pred_check_branch
        %468 = sbr.rel (%p466) target = $region52
      $region51: #{double_conv.5} parent=5 // pred_region
        %s469 = ssub.s32 %s16, 2
        // Predicated region
        $region53: #{double_conv.5} parent=51 // pred_check
          %p470 = pneg %p129
        $region54: #{double_conv.5} parent=51 // pred_check_branch
          %472 = sbr.rel (%p470) target = $region56
        $region55: #{double_conv.5} parent=51 // pred_region
          %s473 = sand.u32 %s114, 1
          %s474 = scalar_lea.sflag [#allocation4], %s473
          %s475 = sand.u32 %s114, 1
          %s476 = smul.addr %s475, 256
          %s477 = scalar_lea.vmem [#allocation8], %s476
          %478 = dma.done %s474, 4096
        $region56: #{double_conv.5} parent=51 // pred_fallthru
          _
      $region52: #{double_conv.5} parent=5 // pred_fallthru
        _
    $region6: #{double_conv.5} parent=1 // loop_footer
      %s20 = sadd.s32 1, %s16
    $region7: #{double_conv.5} parent=1 // loop_footer_branch
      %15 = sbr.rel target = $region3
    $region8: #{double_conv.5} parent=1 // loop_exit
      _
    %479 = vsyncpa [#allocation3], 1
    %s480 = scalar_lea.sflag [#allocation3], 1
    %481 = vsyncpa %s480, 1
    %482 = vsyncpa [#allocation6], 1
    %483 = vsyncpa [#allocation4], 1
    %s484 = scalar_lea.sflag [#allocation4], 1
    %485 = vsyncpa %s484, 1

// kernel: double_conv.3
$region0: #{double_conv.3}
  #allocation0 [shape = 'u32[]', space=smem, size = 0x4, offset = 0x4, fixed_abs, tag = 'smem constant byte address 0x4 - core index']
  #allocation1 [shape = 'u32[144,128]{1,0:T(1,128)}', space=vmem, size = 0x12000, scoped, tag = 'internal scratch']
  %s0 = inlined_call_operand.hbm [shape: bf16[2,16,16,128], index: 0, kind: input, shape index: {}, may-alias: {0,1,2}]
  %s1 = inlined_call_operand.hbm [shape: bf16[2,16,16,128], index: 1, kind: input, shape index: {}, may-alias: {0,1,2}]
  %s2 = inlined_call_operand.hbm [shape: bf16[2,16,16,128], index: 2, kind: input, shape index: {}, may-alias: {0,1,2}]
  %s3 = inlined_call_operand.hbm [shape: bf16[3,384,128], index: 3, kind: input, shape index: {}]
  %s4 = inlined_call_operand.hbm [shape: f32[1,128], index: 4, kind: input, shape index: {}]
  %s5 = inlined_call_operand.hbm [shape: f32[1,128], index: 5, kind: input, shape index: {}]
  %s6 = inlined_call_operand.hbm [shape: bf16[2,16,16,128], index: 6, kind: output, shape index: {0}]
  %s7 = inlined_call_operand.hbm [shape: f32[2,2,2,128], index: 7, kind: output, shape index: {1}]
  %8 = xla_tuple %s6, %s7
  %s9 = sld [smem:[#allocation0]]
  $region89: #{double_conv.3} parent=0
    _
  %s11 = ssub.s32 1, %s9
  %s12 = scalar_select 0, %s11, %s9
  $region1: #{double_conv.3} parent=0
    #allocation2 [shape = 'u8[8192]{0}', space=vmem, size = 0x2000, scoped, tag = 'input window, operand 0']
    #allocation3 [shape = 's32[2]{0}', space=sflag, size = 0x8, scoped, tag = 'scoped memory for double_conv.3']
    #allocation4 [shape = 's32[2]{0}', space=sflag, size = 0x8, scoped, tag = 'scoped memory for double_conv.3']
    #allocation5 [shape = 'u8[65536]{0}', space=vmem, size = 0x10000, scoped, tag = 'input window, operand 1']
    #allocation6 [shape = 's32[2]{0}', space=sflag, size = 0x8, scoped, tag = 'scoped memory for double_conv.3']
    #allocation7 [shape = 'u8[8192]{0}', space=vmem, size = 0x2000, scoped, tag = 'input window, operand 2']
    #allocation8 [shape = 'u8[294912]{0}', space=vmem, size = 0x48000, scoped, tag = 'input window, operand 3, single buffered']
    #allocation9 [shape = 's32[1]{0}', space=sflag, size = 0x4, scoped, tag = 'scoped memory for double_conv.3']
    #allocation10 [shape = 'u8[512]{0}', space=vmem, size = 0x400, scoped, tag = 'input window, operand 4, single buffered']
    #allocation11 [shape = 'u8[512]{0}', space=vmem, size = 0x400, scoped, tag = 'input window, operand 5, single buffered']
    #allocation12 [shape = 's32[1]{0}', space=sflag, size = 0x4, scoped, tag = 'scoped memory for double_conv.3']
    #allocation13 [shape = 'u8[65536]{0}', space=vmem, size = 0x10000, scoped, tag = 'output window, operand 0']
    #allocation14 [shape = 'u8[2048]{0}', space=vmem, size = 0x800, scoped, tag = 'output window, operand 1']
    #allocation15 [shape = 's32[2]{0}', space=sflag, size = 0x8, scoped, tag = 'scoped memory for double_conv.3']
    %13 = vsyncpa [#allocation3], 0
    %s14 = scalar_lea.sflag [#allocation3], 1
    %15 = vsyncpa %s14, 0
    %16 = vsyncpa [#allocation6], 0
    %s17 = scalar_lea.sflag [#allocation6], 1
    %18 = vsyncpa %s17, 0
    %19 = vsyncpa [#allocation9], 0
    %20 = vsyncpa [#allocation12], 0
    %21 = vsyncpa [#allocation4], 0
    %s22 = scalar_lea.sflag [#allocation4], 1
    %23 = vsyncpa %s22, 0
    %24 = vsyncpa [#allocation15], 0
    %s25 = scalar_lea.sflag [#allocation15], 1
    %26 = vsyncpa %s25, 0
    loop: start=0, step=1, limit=6
    $region2: #{double_conv.3} parent=1 // loop_pre_header
      _
    $region3: #{double_conv.3} parent=1 // loop_header
      %s28 = sphi 0, %s32
      %p29 = scmp.ge.s32.totalorder %s28, 6
      %s35 = sphi 0, %s47
      %s36 = sphi 0, %s43
      %s37 = sphi 0, %s35
      %s38 = sphi 0, %s36
      %s39 = sphi 0, %s37
      %s40 = sphi 0, %s38
      %s60 = sphi 0, %s62
      %s63 = sphi 0, %s60
      %s64 = sphi 0, %s63
      %s80 = sphi 0, %s64
      %s88 = sphi 0, %s90
      %s91 = sphi 0, %s88
      %s92 = sphi 0, %s91
      %s108 = sphi 0, %s92
      %s124 = sphi 0, %s126
      %s127 = sphi 0, %s124
      %s128 = sphi 0, %s127
      %s144 = sphi 0, %s128
      %s148 = sphi 0, %s148
      %s150 = sphi 0, %s148
      %s151 = sphi 0, %s150
      %s165 = sphi 0, %s151
      %s169 = sphi 0, %s169
      %s171 = sphi 0, %s169
      %s172 = sphi 0, %s171
      %s186 = sphi 0, %s172
      %s190 = sphi 0, %s190
      %s192 = sphi 0, %s190
      %s193 = sphi 0, %s192
      %s207 = sphi 0, %s193
      %s215 = sphi 0, %s217
      %s218 = sphi 0, %s215
      %s219 = sphi 0, %s218
      %s235 = sphi 0, %s219
      %s243 = sphi 0, %s245
      %s246 = sphi 0, %s243
      %s247 = sphi 0, %s246
      %s263 = sphi 0, %s247
    $region4: #{double_conv.3} parent=1 // loop_header_branch
      %31 = sbr.rel (%p29) target = $region8
    $region5: #{double_conv.3} parent=1 // loop_body
      %s33 = ssub.s32 %s28, 1
      %s34 = ssub.s32 %s28, 2
      %s41 = sadd.s32 1, %s36
      %p42 = scmp.ge.s32.totalorder %s41, 2
      %s43 = scalar_select %p42, 0, %s41
      %s44 = sadd.s32 1, %s35
      %s45 = scalar_select %p42, %s44, %s35
      %p46 = scmp.ge.s32.totalorder %s45, 2
      %s47 = scalar_select %p46, 0, %s45
      %s48 = smul.u32 %s36, 8
      %s49 = ssub.s32 %s48, 1
      %p50 = scmp.gt.s32.totalorder %s49, 0
      %s51 = scalar_select %p50, %s49, 0
      %s52 = smul.u32 %s43, 8
      %s53 = ssub.s32 %s52, 1
      %p54 = scmp.gt.s32.totalorder %s53, 0
      %s55 = scalar_select %p54, %s53, 0
      %s56 = ssub.s32 %s35, %s47
      %s57 = ssub.s32 %s51, %s55
      %s58 = sor.u32 %s56, %s57
      %p59 = scmp.eq.s32.totalorder %s58, 0
      %s61 = sadd.s32 %s60, 1
      %s62 = scalar_select %p59, %s60, %s61
      %p65 = pneg %p59
      %p66 = scmp.eq.s32.totalorder %s28, 3
      %p67 = por %p65, %p66
      %p68 = scmp.ne.s32.totalorder %s60, %s63
      %p69 = scmp.eq.s32.totalorder %s28, 0
      %p70 = por %p68, %p69
      %p71 = scmp.ne.s32.totalorder %s60, %s63
      %p72 = scmp.eq.s32.totalorder %s33, 3
      %p73 = por %p71, %p72
      %p74 = scmp.ne.s32.totalorder %s63, %s64
      %p75 = scmp.eq.s32.totalorder %s33, 0
      %p76 = por %p74, %p75
      %p77 = scmp.ne.s32.totalorder %s63, %s64
      %p78 = scmp.eq.s32.totalorder %s34, 3
      %p79 = por %p77, %p78
      %p81 = scmp.ne.s32.totalorder %s64, %s80
      %p82 = scmp.eq.s32.totalorder %s34, 0
      %p83 = por %p81, %p82
      %s84 = ssub.s32 %s35, %s47
      %s85 = ssub.s32 %s36, %s43
      %s86 = sor.u32 %s84, %s85
      %p87 = scmp.eq.s32.totalorder %s86, 0
      %s89 = sadd.s32 %s88, 1
      %s90 = scalar_select %p87, %s88, %s89
      %p93 = pneg %p87
      %p94 = scmp.eq.s32.totalorder %s28, 3
      %p95 = por %p93, %p94
      %p96 = scmp.ne.s32.totalorder %s88, %s91
      %p97 = scmp.eq.s32.totalorder %s28, 0
      %p98 = por %p96, %p97
      %p99 = scmp.ne.s32.totalorder %s88, %s91
      %p100 = scmp.eq.s32.totalorder %s33, 3
      %p101 = por %p99, %p100
      %p102 = scmp.ne.s32.totalorder %s91, %s92
      %p103 = scmp.eq.s32.totalorder %s33, 0
      %p104 = por %p102, %p103
      %p105 = scmp.ne.s32.totalorder %s91, %s92
      %p106 = scmp.eq.s32.totalorder %s34, 3
      %p107 = por %p105, %p106
      %p109 = scmp.ne.s32.totalorder %s92, %s108
      %p110 = scmp.eq.s32.totalorder %s34, 0
      %p111 = por %p109, %p110
      %s112 = smul.u32 %s36, 8
      %s113 = sadd.s32 %s112, 8
      %p114 = scmp.lt.s32.totalorder %s113, 15
      %s115 = scalar_select %p114, %s113, 15
      %s116 = smul.u32 %s43, 8
      %s117 = sadd.s32 %s116, 8
      %p118 = scmp.lt.s32.totalorder %s117, 15
      %s119 = scalar_select %p118, %s117, 15
      %s120 = ssub.s32 %s35, %s47
      %s121 = ssub.s32 %s115, %s119
      %s122 = sor.u32 %s120, %s121
      %p123 = scmp.eq.s32.totalorder %s122, 0
      %s125 = sadd.s32 %s124, 1
      %s126 = scalar_select %p123, %s124, %s125
      %p129 = pneg %p123
      %p130 = scmp.eq.s32.totalorder %s28, 3
      %p131 = por %p129, %p130
      %p132 = scmp.ne.s32.totalorder %s124, %s127
      %p133 = scmp.eq.s32.totalorder %s28, 0
      %p134 = por %p132, %p133
      %p135 = scmp.ne.s32.totalorder %s124, %s127
      %p136 = scmp.eq.s32.totalorder %s33, 3
      %p137 = por %p135, %p136
      %p138 = scmp.ne.s32.totalorder %s127, %s128
      %p139 = scmp.eq.s32.totalorder %s33, 0
      %p140 = por %p138, %p139
      %p141 = scmp.ne.s32.totalorder %s127, %s128
      %p142 = scmp.eq.s32.totalorder %s34, 3
      %p143 = por %p141, %p142
      %p145 = scmp.ne.s32.totalorder %s128, %s144
      %p146 = scmp.eq.s32.totalorder %s34, 0
      %p147 = por %p145, %p146
      %s149 = sadd.s32 %s148, 1
      %p152 = scmp.eq.s32.totalorder %s28, 3
      %p153 = scmp.ne.s32.totalorder %s148, %s150
      %p154 = scmp.eq.s32.totalorder %s28, 0
      %p155 = por %p153, %p154
      %p156 = scmp.ne.s32.totalorder %s148, %s150
      %p157 = scmp.eq.s32.totalorder %s33, 3
      %p158 = por %p156, %p157
      %p159 = scmp.ne.s32.totalorder %s150, %s151
      %p160 = scmp.eq.s32.totalorder %s33, 0
      %p161 = por %p159, %p160
      %p162 = scmp.ne.s32.totalorder %s150, %s151
      %p163 = scmp.eq.s32.totalorder %s34, 3
      %p164 = por %p162, %p163
      %p166 = scmp.ne.s32.totalorder %s151, %s165
      %p167 = scmp.eq.s32.totalorder %s34, 0
      %p168 = por %p166, %p167
      %s170 = sadd.s32 %s169, 1
      %p173 = scmp.eq.s32.totalorder %s28, 3
      %p174 = scmp.ne.s32.totalorder %s169, %s171
      %p175 = scmp.eq.s32.totalorder %s28, 0
      %p176 = por %p174, %p175
      %p177 = scmp.ne.s32.totalorder %s169, %s171
      %p178 = scmp.eq.s32.totalorder %s33, 3
      %p179 = por %p177, %p178
      %p180 = scmp.ne.s32.totalorder %s171, %s172
      %p181 = scmp.eq.s32.totalorder %s33, 0
      %p182 = por %p180, %p181
      %p183 = scmp.ne.s32.totalorder %s171, %s172
      %p184 = scmp.eq.s32.totalorder %s34, 3
      %p185 = por %p183, %p184
      %p187 = scmp.ne.s32.totalorder %s172, %s186
      %p188 = scmp.eq.s32.totalorder %s34, 0
      %p189 = por %p187, %p188
      %s191 = sadd.s32 %s190, 1
      %p194 = scmp.eq.s32.totalorder %s28, 3
      %p195 = scmp.ne.s32.totalorder %s190, %s192
      %p196 = scmp.eq.s32.totalorder %s28, 0
      %p197 = por %p195, %p196
      %p198 = scmp.ne.s32.totalorder %s190, %s192
      %p199 = scmp.eq.s32.totalorder %s33, 3
      %p200 = por %p198, %p199
      %p201 = scmp.ne.s32.totalorder %s192, %s193
      %p202 = scmp.eq.s32.totalorder %s33, 0
      %p203 = por %p201, %p202
      %p204 = scmp.ne.s32.totalorder %s192, %s193
      %p205 = scmp.eq.s32.totalorder %s34, 3
      %p206 = por %p204, %p205
      %p208 = scmp.ne.s32.totalorder %s193, %s207
      %p209 = scmp.eq.s32.totalorder %s34, 0
      %p210 = por %p208, %p209
      %s211 = ssub.s32 %s35, %s47
      %s212 = ssub.s32 %s36, %s43
      %s213 = sor.u32 %s211, %s212
      %p214 = scmp.eq.s32.totalorder %s213, 0
      %s216 = sadd.s32 %s215, 1
      %s217 = scalar_select %p214, %s215, %s216
      %p220 = pneg %p214
      %p221 = scmp.eq.s32.totalorder %s28, 3
      %p222 = por %p220, %p221
      %p223 = scmp.ne.s32.totalorder %s215, %s218
      %p224 = scmp.eq.s32.totalorder %s28, 0
      %p225 = por %p223, %p224
      %p226 = scmp.ne.s32.totalorder %s215, %s218
      %p227 = scmp.eq.s32.totalorder %s33, 3
      %p228 = por %p226, %p227
      %p229 = scmp.ne.s32.totalorder %s218, %s219
      %p230 = scmp.eq.s32.totalorder %s33, 0
      %p231 = por %p229, %p230
      %p232 = scmp.ne.s32.totalorder %s218, %s219
      %p233 = scmp.eq.s32.totalorder %s34, 3
      %p234 = por %p232, %p233
      %p236 = scmp.ne.s32.totalorder %s219, %s235
      %p237 = scmp.eq.s32.totalorder %s34, 0
      %p238 = por %p236, %p237
      %s239 = ssub.s32 %s35, %s47
      %s240 = ssub.s32 %s36, %s43
      %s241 = sor.u32 %s239, %s240
      %p242 = scmp.eq.s32.totalorder %s241, 0
      %s244 = sadd.s32 %s243, 1
      %s245 = scalar_select %p242, %s243, %s244
      %p248 = pneg %p242
      %p249 = scmp.eq.s32.totalorder %s28, 3
      %p250 = por %p248, %p249
      %p251 = scmp.ne.s32.totalorder %s243, %s246
      %p252 = scmp.eq.s32.totalorder %s28, 0
      %p253 = por %p251, %p252
      %p254 = scmp.ne.s32.totalorder %s243, %s246
      %p255 = scmp.eq.s32.totalorder %s33, 3
      %p256 = por %p254, %p255
      %p257 = scmp.ne.s32.totalorder %s246, %s247
      %p258 = scmp.eq.s32.totalorder %s33, 0
      %p259 = por %p257, %p258
      %p260 = scmp.ne.s32.totalorder %s246, %s247
      %p261 = scmp.eq.s32.totalorder %s34, 3
      %p262 = por %p260, %p261
      %p264 = scmp.ne.s32.totalorder %s247, %s263
      %p265 = scmp.eq.s32.totalorder %s34, 0
      %p266 = por %p264, %p265
      %p267 = scmp.le.s32.totalorder 1, %s28
      %p268 = scmp.lt.s32.totalorder %s28, 5
      %p269 = pnand %p267, %p268
      %p270 = pneg %p269
      // Predicated region
      $region9: #{double_conv.3} parent=5 // pred_check
        _
      $region10: #{double_conv.3} parent=5 // pred_check_branch
        %272 = sbr.rel (%p269) target = $region12
      $region11: #{double_conv.3} parent=5 // pred_region
        %s273 = ssub.s32 %s28, 1
        // Predicated region
        $region13: #{double_conv.3} parent=11 // pred_check
          %p274 = pneg %p161
        $region14: #{double_conv.3} parent=11 // pred_check_branch
          %276 = sbr.rel (%p274) target = $region16
        $region15: #{double_conv.3} parent=11 // pred_region
          %s278 = ssub.s32 9216, 9216
          %279 = vsyncadd [#allocation9], %s278
          %s280 = sshll.u32 [#allocation8], 4
          %s281 = int_to_ptr.vmem [resolvable:$true] %s280
          %286 = dma.hbm_to_vmem [thread:$0]  %s3, 9216, %s281, [#allocation9], 64, 64, 4
        $region16: #{double_conv.3} parent=11 // pred_fallthru
          _
        // Predicated region
        $region17: #{double_conv.3} parent=11 // pred_check
          %p287 = pneg %p182
        $region18: #{double_conv.3} parent=11 // pred_check_branch
          %289 = sbr.rel (%p287) target = $region20
        $region19: #{double_conv.3} parent=11 // pred_region
          %s291 = ssub.s32 16, 16
          %292 = vsyncadd [#allocation9], %s291
          %s294 = sshll.u32 [#allocation10], 4
          %s295 = int_to_ptr.vmem [resolvable:$true] %s294
          %297 = dma.hbm_to_vmem [thread:$0]  %s4, 16, %s295, [#allocation9]
        $region20: #{double_conv.3} parent=11 // pred_fallthru
          _
        // Predicated region
        $region21: #{double_conv.3} parent=11 // pred_check
          %p298 = pneg %p203
        $region22: #{double_conv.3} parent=11 // pred_check_branch
          %300 = sbr.rel (%p298) target = $region24
        $region23: #{double_conv.3} parent=11 // pred_region
          %s302 = ssub.s32 16, 16
          %303 = vsyncadd [#allocation12], %s302
          %s305 = sshll.u32 [#allocation11], 4
          %s306 = int_to_ptr.vmem [resolvable:$true] %s305
          %308 = dma.hbm_to_vmem [thread:$0]  %s5, 16, %s306, [#allocation12]
        $region24: #{double_conv.3} parent=11 // pred_fallthru
          _
      $region12: #{double_conv.3} parent=5 // pred_fallthru
        _
      %p309 = scmp.lt.s32.totalorder %s28, 4
      // Predicated region
      $region25: #{double_conv.3} parent=5 // pred_check
        %p310 = pneg %p309
      $region26: #{double_conv.3} parent=5 // pred_check_branch
        %312 = sbr.rel (%p310) target = $region28
      $region27: #{double_conv.3} parent=5 // pred_region
        // Predicated region
        $region29: #{double_conv.3} parent=27 // pred_check
          %p313 = pneg %p70
        $region30: #{double_conv.3} parent=27 // pred_check_branch
          %315 = sbr.rel (%p313) target = $region32
        $region31: #{double_conv.3} parent=27 // pred_region
          %s316 = sand.u32 %s60, 1
          %s317 = scalar_lea.sflag [#allocation3], %s316
          %s318 = sand.u32 %s60, 1
          %s319 = smul.addr %s318, 8
          %s320 = scalar_lea.vmem [#allocation2], %s319
          %s321 = smul.u32 %s36, 8
          %s322 = ssub.s32 %s321, 1
          %p323 = scmp.gt.s32.totalorder %s322, 0
          %s324 = scalar_select %p323, %s322, 0
          %s326 = ssub.s32 128, 128
          %327 = vsyncadd %s317, %s326
          %s328 = smul.addr %s324, 2
          %s329 = smul.addr %s35, 32
          %s330 = sadd.s32 %s328, %s329
          %s331 = smul.addr %s330, 64
          %s332 = scalar_lea.hbm %s0, %s331
          %s333 = sshll.u32 %s320, 4
          %s334 = int_to_ptr.vmem [resolvable:$true] %s333
          %339 = dma.hbm_to_vmem [thread:$0]  %s332, 128, %s334, %s317, 64, 64, 4
        $region32: #{double_conv.3} parent=27 // pred_fallthru
          _
        // Predicated region
        $region33: #{double_conv.3} parent=27 // pred_check
          %p340 = pneg %p98
        $region34: #{double_conv.3} parent=27 // pred_check_branch
          %342 = sbr.rel (%p340) target = $region36
        $region35: #{double_conv.3} parent=27 // pred_region
          %s343 = sand.u32 %s28, 1
          %s344 = scalar_lea.sflag [#allocation6], %s343
          %s345 = sand.u32 %s88, 1
          %s346 = smul.addr %s345, 64
          %s347 = scalar_lea.vmem [#allocation5], %s346
          %s348 = smul.u32 8, %s36
          %s350 = ssub.s32 1024, 1024
          %351 = vsyncadd %s344, %s350
          %s352 = smul.addr %s348, 2
          %s353 = smul.addr %s35, 32
          %s354 = sadd.s32 %s352, %s353
          %s355 = smul.addr %s354, 64
          %s356 = scalar_lea.hbm %s1, %s355
          %s357 = sshll.u32 %s347, 4
          %s358 = int_to_ptr.vmem [resolvable:$true] %s357
          %363 = dma.hbm_to_vmem [thread:$0]  %s356, 1024, %s358, %s344, 64, 64, 4
        $region36: #{double_conv.3} parent=27 // pred_fallthru
          _
        // Predicated region
        $region37: #{double_conv.3} parent=27 // pred_check
          %p364 = pneg %p134
        $region38: #{double_conv.3} parent=27 // pred_check_branch
          %366 = sbr.rel (%p364) target = $region40
        $region39: #{double_conv.3} parent=27 // pred_region
          %s367 = sand.u32 %s28, 1
          %s368 = scalar_lea.sflag [#allocation6], %s367
          %s369 = sand.u32 %s124, 1
          %s370 = smul.addr %s369, 8
          %s371 = scalar_lea.vmem [#allocation7], %s370
          %s372 = smul.u32 %s36, 8
          %s373 = sadd.s32 %s372, 8
          %p374 = scmp.lt.s32.totalorder %s373, 15
          %s375 = scalar_select %p374, %s373, 15
          %s377 = ssub.s32 128, 128
          %378 = vsyncadd %s368, %s377
          %s379 = smul.addr %s375, 2
          %s380 = smul.addr %s35, 32
          %s381 = sadd.s32 %s379, %s380
          %s382 = smul.addr %s381, 64
          %s383 = scalar_lea.hbm %s2, %s382
          %s384 = sshll.u32 %s371, 4
          %s385 = int_to_ptr.vmem [resolvable:$true] %s384
          %390 = dma.hbm_to_vmem [thread:$0]  %s383, 128, %s385, %s368, 64, 64, 4
        $region40: #{double_conv.3} parent=27 // pred_fallthru
          _
      $region28: #{double_conv.3} parent=5 // pred_fallthru
        _
      %p391 = scmp.le.s32.totalorder 1, %s28
      %p392 = scmp.lt.s32.totalorder %s28, 5
      %p393 = pnand %p391, %p392
      %p394 = pneg %p393
      // Predicated region
      $region41: #{double_conv.3} parent=5 // pred_check
        _
      $region42: #{double_conv.3} parent=5 // pred_check_branch
        %396 = sbr.rel (%p393) target = $region44
      $region43: #{double_conv.3} parent=5 // pred_region
        %s397 = ssub.s32 %s28, 1
        %s398 = sand.u32 %s63, 1
        %s399 = scalar_lea.sflag [#allocation3], %s398
        %s400 = sand.u32 %s63, 1
        %s401 = smul.addr %s400, 8
        %s402 = scalar_lea.vmem [#allocation2], %s401
        // Predicated region
        $region45: #{double_conv.3} parent=43 // pred_check
          %p403 = pneg %p76
        $region46: #{double_conv.3} parent=43 // pred_check_branch
          %405 = sbr.rel (%p403) target = $region48
        $region47: #{double_conv.3} parent=43 // pred_region
          %406 = dma.done %s399, 128
        $region48: #{double_conv.3} parent=43 // pred_fallthru
          _
        %s407 = sand.u32 %s33, 1
        %s408 = scalar_lea.sflag [#allocation6], %s407
        %s409 = sand.u32 %s91, 1
        %s410 = smul.addr %s409, 64
        %s411 = scalar_lea.vmem [#allocation5], %s410
        // Predicated region
        $region49: #{double_conv.3} parent=43 // pred_check
          %p412 = pneg %p104
        $region50: #{double_conv.3} parent=43 // pred_check_branch
          %414 = sbr.rel (%p412) target = $region52
        $region51: #{double_conv.3} parent=43 // pred_region
          %415 = dma.done %s408, 1024
        $region52: #{double_conv.3} parent=43 // pred_fallthru
          _
        %s416 = sand.u32 %s33, 1
        %s417 = scalar_lea.sflag [#allocation6], %s416
        %s418 = sand.u32 %s127, 1
        %s419 = smul.addr %s418, 8
        %s420 = scalar_lea.vmem [#allocation7], %s419
        // Predicated region
        $region53: #{double_conv.3} parent=43 // pred_check
          %p421 = pneg %p140
        $region54: #{double_conv.3} parent=43 // pred_check_branch
          %423 = sbr.rel (%p421) target = $region56
        $region55: #{double_conv.3} parent=43 // pred_region
          %424 = dma.done %s417, 128
        $region56: #{double_conv.3} parent=43 // pred_fallthru
          _
        // Predicated region
        $region57: #{double_conv.3} parent=43 // pred_check
          %p425 = pneg %p161
        $region58: #{double_conv.3} parent=43 // pred_check_branch
          %427 = sbr.rel (%p425) target = $region60
        $region59: #{double_conv.3} parent=43 // pred_region
          %428 = dma.done [#allocation9], 9216
        $region60: #{double_conv.3} parent=43 // pred_fallthru
          _
        // Predicated region
        $region61: #{double_conv.3} parent=43 // pred_check
          %p429 = pneg %p182
        $region62: #{double_conv.3} parent=43 // pred_check_branch
          %431 = sbr.rel (%p429) target = $region64
        $region63: #{double_conv.3} parent=43 // pred_region
          %432 = dma.done [#allocation9], 16
        $region64: #{double_conv.3} parent=43 // pred_fallthru
          _
        // Predicated region
        $region65: #{double_conv.3} parent=43 // pred_check
          %p433 = pneg %p203
        $region66: #{double_conv.3} parent=43 // pred_check_branch
          %435 = sbr.rel (%p433) target = $region68
        $region67: #{double_conv.3} parent=43 // pred_region
          %436 = dma.done [#allocation12], 16
        $region68: #{double_conv.3} parent=43 // pred_fallthru
          _
        %s437 = sand.u32 %s63, 1
        %s438 = scalar_lea.sflag [#allocation3], %s437
        %s439 = sand.u32 %s63, 1
        %s440 = smul.addr %s439, 8
        %s441 = scalar_lea.vmem [#allocation2], %s440
        %p442 = pneg %p76
        %p443 = pneg %p73
        %s444 = sand.u32 %s33, 1
        %s445 = scalar_lea.sflag [#allocation6], %s444
        %s446 = sand.u32 %s91, 1
        %s447 = smul.addr %s446, 64
        %s448 = scalar_lea.vmem [#allocation5], %s447
        %p449 = pneg %p104
        %p450 = pneg %p101
        %s451 = sand.u32 %s33, 1
        %s452 = scalar_lea.sflag [#allocation6], %s451
        %s453 = sand.u32 %s127, 1
        %s454 = smul.addr %s453, 8
        %s455 = scalar_lea.vmem [#allocation7], %s454
        %p456 = pneg %p140
        %p457 = pneg %p137
        %p458 = pneg %p161
        %p459 = pneg %p158
        %p460 = pneg %p182
        %p461 = pneg %p179
        %p462 = pneg %p203
        %p463 = pneg %p200
        %p464 = pneg %p231
        %p465 = pneg %p228
        %s466 = sand.u32 %s218, 1
        %s467 = scalar_lea.sflag [#allocation4], %s466
        %s468 = sand.u32 %s218, 1
        %s469 = smul.addr %s468, 64
        %s470 = scalar_lea.vmem [#allocation13], %s469
        %p471 = pneg %p259
        %p472 = pneg %p256
        %s473 = sand.u32 %s246, 1
        %s474 = scalar_lea.sflag [#allocation15], %s473
        %s475 = sand.u32 %s246, 1
        %s476 = smul.addr %s475, 2
        %s477 = scalar_lea.vmem [#allocation14], %s476
        %s478 = smul.u32 %s38, 8
        %s479 = ssub.s32 %s478, 1
        %p480 = scmp.gt.s32.totalorder %s479, 0
        %s481 = scalar_select %p480, %s479, 0
        %s482 = smul.u32 8, %s38
        %s483 = smul.u32 %s38, 8
        %s484 = sadd.s32 %s483, 8
        %p485 = scmp.lt.s32.totalorder %s484, 15
        %s486 = scalar_select %p485, %s484, 15
        %s487 = smul.u32 8, %s38
        %v489 = vld [vmem:[%s411] sm:$0xf]
        %v490 = vld [vmem:[%s411 + $0x4] sm:$0xf]
        %v491 = vld [vmem:[%s411 + $0x8] sm:$0xf]
        %v492 = vld [vmem:[%s411 + $0xc] sm:$0xf]
        %v493 = vld [vmem:[%s411 + $0x10] sm:$0xf]
        %v494 = vld [vmem:[%s411 + $0x14] sm:$0xf]
        %v495 = vld [vmem:[%s411 + $0x18] sm:$0xf]
        %v496 = vld [vmem:[%s411 + $0x1c] sm:$0xf]
        %v497 = vld [vmem:[%s411 + $0x20] sm:$0xf]
        %v498 = vld [vmem:[%s411 + $0x24] sm:$0xf]
        %v499 = vld [vmem:[%s411 + $0x28] sm:$0xf]
        %v500 = vld [vmem:[%s411 + $0x2c] sm:$0xf]
        %v501 = vld [vmem:[%s411 + $0x30] sm:$0xf]
        %v502 = vld [vmem:[%s411 + $0x34] sm:$0xf]
        %v503 = vld [vmem:[%s411 + $0x38] sm:$0xf]
        %v504 = vld [vmem:[%s411 + $0x3c] sm:$0xf]
        %v505 = vld [vmem:[%s402] sm:$0xf]
        %v506 = vld [vmem:[%s402 + $0x4] sm:$0xf]
        %p507 = scmp.ne.s32.totalorder %s38, 0
        %s508 = scalar_select %p507, 1, 0
        %s509 = scvt.s32.f32 %s508
        %p511 = scmp.ne.f32.partialorder %s509, %s509
        %s512 = sshrl.u32 %s509, 16
        %s513 = sand.u32 %s512, 1
        %s514 = sadd.s32 32767, %s513
        %s515 = sadd.s32 %s509, %s514
        %s516 = sand.u32 %s515, 4294901760
        %s517 = scalar_select %p511, 2143289344, %s516
        %s519 = sshrl.u32 %s517, 16
        %s520 = sshll.u32 %s519, 16
        %s521 = sor.u32 %s519, %s520
        %v522 = vstv %s521
        %v524 = vmul.bf16 %v505, %v522
        %v525 = vmul.bf16 %v506, %v522
        %v526 = vld [vmem:[%s420] sm:$0xf]
        %v527 = vld [vmem:[%s420 + $0x4] sm:$0xf]
        %p528 = scmp.ne.s32.totalorder %s38, 1
        %s529 = scalar_select %p528, 1, 0
        %s530 = scvt.s32.f32 %s529
        %p532 = scmp.ne.f32.partialorder %s530, %s530
        %s533 = sshrl.u32 %s530, 16
        %s534 = sand.u32 %s533, 1
        %s535 = sadd.s32 32767, %s534
        %s536 = sadd.s32 %s530, %s535
        %s537 = sand.u32 %s536, 4294901760
        %s538 = scalar_select %p532, 2143289344, %s537
        %s540 = sshrl.u32 %s538, 16
        %s541 = sshll.u32 %s540, 16
        %s542 = sor.u32 %s540, %s541
        %v543 = vstv %s542
        %v545 = vmul.bf16 %v526, %v543
        %v546 = vmul.bf16 %v527, %v543
        %v567 = vunpack.c.l.b16 %v524
        %v568 = vunpack.c.l.b16 %v525
        %v569 = vunpack.c.l.b16 %v489
        %v570 = vunpack.c.l.b16 %v490
        %v571 = vunpack.c.l.b16 %v491
        %v572 = vunpack.c.l.b16 %v492
        %v573 = vunpack.c.l.b16 %v493
        %v574 = vunpack.c.l.b16 %v494
        %v575 = vunpack.c.l.b16 %v495
        %v576 = vunpack.c.l.b16 %v496
        %v577 = vunpack.c.l.b16 %v497
        %v578 = vunpack.c.l.b16 %v498
        %v579 = vunpack.c.l.b16 %v499
        %v580 = vunpack.c.l.b16 %v500
        %v581 = vunpack.c.l.b16 %v501
        %v582 = vunpack.c.l.b16 %v502
        %v583 = vunpack.c.l.b16 %v503
        %v584 = vunpack.c.l.b16 %v504
        %v585 = vunpack.c.l.b16 %v545
        %v586 = vunpack.c.l.b16 %v546
        %v587 = vpack.c.b16 %v568, %v567
        %v588 = vpack.c.b16 %v570, %v569
        %v589 = vpack.c.b16 %v572, %v571
        %v590 = vpack.c.b16 %v574, %v573
        %v591 = vpack.c.b16 %v576, %v575
        %v592 = vpack.c.b16 %v578, %v577
        %v593 = vpack.c.b16 %v580, %v579
        %v594 = vpack.c.b16 %v582, %v581
        %v595 = vpack.c.b16 %v584, %v583
        %v596 = vpack.c.b16 %v586, %v585
        %v598 = vshrl.u32 %v587, 16
        %v600 = vrot.slane %v598, 7
        %v601 = vshll.u32 %v587, 16
        %v603 = vor.u32 %v600, %v601
        %v605 = vshrl.u32 %v588, 16
        %v607 = vrot.slane %v605, 7
        %v608 = vshll.u32 %v588, 16
        %v610 = vor.u32 %v607, %v608
        %v612 = vshrl.u32 %v589, 16
        %v614 = vrot.slane %v612, 7
        %v615 = vshll.u32 %v589, 16
        %v617 = vor.u32 %v614, %v615
        %v619 = vshrl.u32 %v590, 16
        %v621 = vrot.slane %v619, 7
        %v622 = vshll.u32 %v590, 16
        %v624 = vor.u32 %v621, %v622
        %v626 = vshrl.u32 %v591, 16
        %v628 = vrot.slane %v626, 7
        %v629 = vshll.u32 %v591, 16
        %v631 = vor.u32 %v628, %v629
        %v633 = vshrl.u32 %v592, 16
        %v635 = vrot.slane %v633, 7
        %v636 = vshll.u32 %v592, 16
        %v638 = vor.u32 %v635, %v636
        %v640 = vshrl.u32 %v593, 16
        %v642 = vrot.slane %v640, 7
        %v643 = vshll.u32 %v593, 16
        %v645 = vor.u32 %v642, %v643
        %v647 = vshrl.u32 %v594, 16
        %v649 = vrot.slane %v647, 7
        %v650 = vshll.u32 %v594, 16
        %v652 = vor.u32 %v649, %v650
        %v654 = vshrl.u32 %v595, 16
        %v656 = vrot.slane %v654, 7
        %v657 = vshll.u32 %v595, 16
        %v659 = vor.u32 %v656, %v657
        %v661 = vshrl.u32 %v596, 16
        %v663 = vrot.slane %v661, 7
        %v664 = vshll.u32 %v596, 16
        %v666 = vor.u32 %v663, %v664
        %vm687 = vcmask 1040384
        %vm688 = vsmask.f32 256
        %vm689 = vmand %vm687, %vm688
        %v690 = vsel %vm689, 0, %v603
        %v691 = vsel %vm689, 0, %v610
        %v692 = vsel %vm689, 0, %v617
        %v693 = vsel %vm689, 0, %v624
        %v694 = vsel %vm689, 0, %v631
        %v695 = vsel %vm689, 0, %v638
        %v696 = vsel %vm689, 0, %v645
        %v697 = vsel %vm689, 0, %v652
        %v698 = vsel %vm689, 0, %v659
        %v699 = vsel %vm689, 0, %v666
        %v700 = vsel %vm689, %v600, 0
        %v701 = vsel %vm689, %v607, 0
        %v702 = vsel %vm689, %v614, 0
        %v703 = vsel %vm689, %v621, 0
        %v704 = vsel %vm689, %v628, 0
        %v705 = vsel %vm689, %v635, 0
        %v706 = vsel %vm689, %v642, 0
        %v707 = vsel %vm689, %v649, 0
        %v708 = vsel %vm689, %v656, 0
        %v709 = vsel %vm689, %v663, 0
        %vm710 = vsmask.f32 7424
        %v712 = vshrl.u32 %v690, 16
        %v714 = vshll.u32 %v690, 16
        %v716 = vrot.slane %v714, 1
        %v717 = vor.u32 %v712, %v716
        %v719 = vshll.u32 %v700, 16
        %v721 = vrot.slane %v719, 1
        %v722 = vsel %vm710, %v717, %v721
        %v724 = vshrl.u32 %v691, 16
        %v726 = vshll.u32 %v691, 16
        %v728 = vrot.slane %v726, 1
        %v729 = vor.u32 %v724, %v728
        %v731 = vshll.u32 %v701, 16
        %v733 = vrot.slane %v731, 1
        %v734 = vsel %vm710, %v729, %v733
        %v736 = vshrl.u32 %v692, 16
        %v738 = vshll.u32 %v692, 16
        %v740 = vrot.slane %v738, 1
        %v741 = vor.u32 %v736, %v740
        %v743 = vshll.u32 %v702, 16
        %v745 = vrot.slane %v743, 1
        %v746 = vsel %vm710, %v741, %v745
        %v748 = vshrl.u32 %v693, 16
        %v750 = vshll.u32 %v693, 16
        %v752 = vrot.slane %v750, 1
        %v753 = vor.u32 %v748, %v752
        %v755 = vshll.u32 %v703, 16
        %v757 = vrot.slane %v755, 1
        %v758 = vsel %vm710, %v753, %v757
        %v760 = vshrl.u32 %v694, 16
        %v762 = vshll.u32 %v694, 16
        %v764 = vrot.slane %v762, 1
        %v765 = vor.u32 %v760, %v764
        %v767 = vshll.u32 %v704, 16
        %v769 = vrot.slane %v767, 1
        %v770 = vsel %vm710, %v765, %v769
        %v772 = vshrl.u32 %v695, 16
        %v774 = vshll.u32 %v695, 16
        %v776 = vrot.slane %v774, 1
        %v777 = vor.u32 %v772, %v776
        %v779 = vshll.u32 %v705, 16
        %v781 = vrot.slane %v779, 1
        %v782 = vsel %vm710, %v777, %v781
        %v784 = vshrl.u32 %v696, 16
        %v786 = vshll.u32 %v696, 16
        %v788 = vrot.slane %v786, 1
        %v789 = vor.u32 %v784, %v788
        %v791 = vshll.u32 %v706, 16
        %v793 = vrot.slane %v791, 1
        %v794 = vsel %vm710, %v789, %v793
        %v796 = vshrl.u32 %v697, 16
        %v798 = vshll.u32 %v697, 16
        %v800 = vrot.slane %v798, 1
        %v801 = vor.u32 %v796, %v800
        %v803 = vshll.u32 %v707, 16
        %v805 = vrot.slane %v803, 1
        %v806 = vsel %vm710, %v801, %v805
        %vm831 = vcmask 1046528
        %v832 = vrot.slane %v690, 1
        %v833 = vrot.slane %v700, 1
        %v834 = vsel %vm831, %v832, %v833
        %v835 = vrot.slane %v691, 1
        %v836 = vrot.slane %v701, 1
        %v837 = vsel %vm831, %v835, %v836
        %v838 = vrot.slane %v692, 1
        %v839 = vrot.slane %v702, 1
        %v840 = vsel %vm831, %v838, %v839
        %v841 = vrot.slane %v693, 1
        %v842 = vrot.slane %v703, 1
        %v843 = vsel %vm831, %v841, %v842
        %v844 = vrot.slane %v694, 1
        %v845 = vrot.slane %v704, 1
        %v846 = vsel %vm831, %v844, %v845
        %v847 = vrot.slane %v695, 1
        %v848 = vrot.slane %v705, 1
        %v849 = vsel %vm831, %v847, %v848
        %v850 = vrot.slane %v696, 1
        %v851 = vrot.slane %v706, 1
        %v852 = vsel %vm831, %v850, %v851
        %v853 = vrot.slane %v697, 1
        %v854 = vrot.slane %v707, 1
        %v855 = vsel %vm831, %v853, %v854
        %v864 = vld [vmem:[#allocation8] sm:$0xf]
        %v865 = vld [vmem:[#allocation8 + $0x4] sm:$0xf]
        %v866 = vld [vmem:[#allocation8 + $0x8] sm:$0xf]
        %v867 = vld [vmem:[#allocation8 + $0xc] sm:$0xf]
        %v868 = vld [vmem:[#allocation8 + $0x10] sm:$0xf]
        %v869 = vld [vmem:[#allocation8 + $0x14] sm:$0xf]
        %v870 = vld [vmem:[#allocation8 + $0x18] sm:$0xf]
        %v871 = vld [vmem:[#allocation8 + $0x1c] sm:$0xf]
        %v872 = vld [vmem:[#allocation8 + $0x20] sm:$0xf]
        %v873 = vld [vmem:[#allocation8 + $0x24] sm:$0xf]
        %v874 = vld [vmem:[#allocation8 + $0x28] sm:$0xf]
        %v875 = vld [vmem:[#allocation8 + $0x2c] sm:$0xf]
        %v876 = vld [vmem:[#allocation8 + $0x30] sm:$0xf]
        %v877 = vld [vmem:[#allocation8 + $0x34] sm:$0xf]
        %v878 = vld [vmem:[#allocation8 + $0x38] sm:$0xf]
        %v879 = vld [vmem:[#allocation8 + $0x3c] sm:$0xf]
        %v880 = vld [vmem:[#allocation8 + $0x40] sm:$0xf]
        %v881 = vld [vmem:[#allocation8 + $0x44] sm:$0xf]
        %v882 = vld [vmem:[#allocation8 + $0x48] sm:$0xf]
        %v883 = vld [vmem:[#allocation8 + $0x4c] sm:$0xf]
        %v884 = vld [vmem:[#allocation8 + $0x50] sm:$0xf]
        %v885 = vld [vmem:[#allocation8 + $0x54] sm:$0xf]
        %v886 = vld [vmem:[#allocation8 + $0x58] sm:$0xf]
        %v887 = vld [vmem:[#allocation8 + $0x5c] sm:$0xf]
        %v888 = vld [vmem:[#allocation8 + $0x60] sm:$0xf]
        %v889 = vld [vmem:[#allocation8 + $0x64] sm:$0xf]
        %v890 = vld [vmem:[#allocation8 + $0x68] sm:$0xf]
        %v891 = vld [vmem:[#allocation8 + $0x6c] sm:$0xf]
        %v892 = vld [vmem:[#allocation8 + $0x70] sm:$0xf]
        %v893 = vld [vmem:[#allocation8 + $0x74] sm:$0xf]
        %v894 = vld [vmem:[#allocation8 + $0x78] sm:$0xf]
        %v895 = vld [vmem:[#allocation8 + $0x7c] sm:$0xf]
        %v896 = vld [vmem:[#allocation8 + $0x80] sm:$0xf]
        %v897 = vld [vmem:[#allocation8 + $0x84] sm:$0xf]
        %v898 = vld [vmem:[#allocation8 + $0x88] sm:$0xf]
        %v899 = vld [vmem:[#allocation8 + $0x8c] sm:$0xf]
        %v900 = vld [vmem:[#allocation8 + $0x90] sm:$0xf]
        %v901 = vld [vmem:[#allocation8 + $0x94] sm:$0xf]
        %v902 = vld [vmem:[#allocation8 + $0x98] sm:$0xf]
        %v903 = vld [vmem:[#allocation8 + $0x9c] sm:$0xf]
        %v904 = vld [vmem:[#allocation8 + $0xa0] sm:$0xf]
        %v905 = vld [vmem:[#allocation8 + $0xa4] sm:$0xf]
        %v906 = vld [vmem:[#allocation8 + $0xa8] sm:$0xf]
        %v907 = vld [vmem:[#allocation8 + $0xac] sm:$0xf]
        %v908 = vld [vmem:[#allocation8 + $0xb0] sm:$0xf]
        %v909 = vld [vmem:[#allocation8 + $0xb4] sm:$0xf]
        %v910 = vld [vmem:[#allocation8 + $0xb8] sm:$0xf]
        %v911 = vld [vmem:[#allocation8 + $0xbc] sm:$0xf]
        %v913 = vshrl.u32 %v698, 16
        %v915 = vshll.u32 %v698, 16
        %v917 = vrot.slane %v915, 1
        %v918 = vor.u32 %v913, %v917
        %v920 = vshll.u32 %v708, 16
        %v922 = vrot.slane %v920, 1
        %v923 = vsel %vm710, %v918, %v922
        %v927 = vrot.slane %v698, 1
        %v928 = vrot.slane %v708, 1
        %v929 = vsel %vm831, %v927, %v928
        %s931 = scalar_lea.vmem [#allocation8], 192
        %v932 = vld [vmem:[%s931] sm:$0xf]
        %v933 = vld [vmem:[%s931 + $0x4] sm:$0xf]
        %v934 = vld [vmem:[%s931 + $0x8] sm:$0xf]
        %v935 = vld [vmem:[%s931 + $0xc] sm:$0xf]
        %v936 = vld [vmem:[%s931 + $0x10] sm:$0xf]
        %v937 = vld [vmem:[%s931 + $0x14] sm:$0xf]
        %v938 = vld [vmem:[%s931 + $0x18] sm:$0xf]
        %v939 = vld [vmem:[%s931 + $0x1c] sm:$0xf]
        %v940 = vld [vmem:[%s931 + $0x20] sm:$0xf]
        %v941 = vld [vmem:[%s931 + $0x24] sm:$0xf]
        %v942 = vld [vmem:[%s931 + $0x28] sm:$0xf]
        %v943 = vld [vmem:[%s931 + $0x2c] sm:$0xf]
        %v944 = vld [vmem:[%s931 + $0x30] sm:$0xf]
        %v945 = vld [vmem:[%s931 + $0x34] sm:$0xf]
        %v946 = vld [vmem:[%s931 + $0x38] sm:$0xf]
        %v947 = vld [vmem:[%s931 + $0x3c] sm:$0xf]
        %v948 = vld [vmem:[%s931 + $0x40] sm:$0xf]
        %v949 = vld [vmem:[%s931 + $0x44] sm:$0xf]
        %v950 = vld [vmem:[%s931 + $0x48] sm:$0xf]
        %v951 = vld [vmem:[%s931 + $0x4c] sm:$0xf]
        %v952 = vld [vmem:[%s931 + $0x50] sm:$0xf]
        %v953 = vld [vmem:[%s931 + $0x54] sm:$0xf]
        %v954 = vld [vmem:[%s931 + $0x58] sm:$0xf]
        %v955 = vld [vmem:[%s931 + $0x5c] sm:$0xf]
        %v956 = vld [vmem:[%s931 + $0x60] sm:$0xf]
        %v957 = vld [vmem:[%s931 + $0x64] sm:$0xf]
        %v958 = vld [vmem:[%s931 + $0x68] sm:$0xf]
        %v959 = vld [vmem:[%s931 + $0x6c] sm:$0xf]
        %v960 = vld [vmem:[%s931 + $0x70] sm:$0xf]
        %v961 = vld [vmem:[%s931 + $0x74] sm:$0xf]
        %v962 = vld [vmem:[%s931 + $0x78] sm:$0xf]
        %v963 = vld [vmem:[%s931 + $0x7c] sm:$0xf]
        %v964 = vld [vmem:[%s931 + $0x80] sm:$0xf]
        %v965 = vld [vmem:[%s931 + $0x84] sm:$0xf]
        %v966 = vld [vmem:[%s931 + $0x88] sm:$0xf]
        %v967 = vld [vmem:[%s931 + $0x8c] sm:$0xf]
        %v968 = vld [vmem:[%s931 + $0x90] sm:$0xf]
        %v969 = vld [vmem:[%s931 + $0x94] sm:$0xf]
        %v970 = vld [vmem:[%s931 + $0x98] sm:$0xf]
        %v971 = vld [vmem:[%s931 + $0x9c] sm:$0xf]
        %v972 = vld [vmem:[%s931 + $0xa0] sm:$0xf]
        %v973 = vld [vmem:[%s931 + $0xa4] sm:$0xf]
        %v974 = vld [vmem:[%s931 + $0xa8] sm:$0xf]
        %v975 = vld [vmem:[%s931 + $0xac] sm:$0xf]
        %v976 = vld [vmem:[%s931 + $0xb0] sm:$0xf]
        %v977 = vld [vmem:[%s931 + $0xb4] sm:$0xf]
        %v978 = vld [vmem:[%s931 + $0xb8] sm:$0xf]
        %v979 = vld [vmem:[%s931 + $0xbc] sm:$0xf]
        %v1028 = vunpack.c.l.b16 %v932
        %v1029 = vunpack.c.l.b16 %v933
        %v1030 = vunpack.c.l.b16 %v934
        %v1031 = vunpack.c.l.b16 %v935
        %v1032 = vunpack.c.l.b16 %v936
        %v1033 = vunpack.c.l.b16 %v937
        %v1034 = vunpack.c.l.b16 %v938
        %v1035 = vunpack.c.l.b16 %v939
        %v1036 = vunpack.c.l.b16 %v940
        %v1037 = vunpack.c.l.b16 %v941
        %v1038 = vunpack.c.l.b16 %v942
        %v1039 = vunpack.c.l.b16 %v943
        %v1040 = vunpack.c.l.b16 %v944
        %v1041 = vunpack.c.l.b16 %v945
        %v1042 = vunpack.c.l.b16 %v946
        %v1043 = vunpack.c.l.b16 %v947
        %v1044 = vunpack.c.l.b16 %v948
        %v1045 = vunpack.c.l.b16 %v949
        %v1046 = vunpack.c.l.b16 %v950
        %v1047 = vunpack.c.l.b16 %v951
        %v1048 = vunpack.c.l.b16 %v952
        %v1049 = vunpack.c.l.b16 %v953
        %v1050 = vunpack.c.l.b16 %v954
        %v1051 = vunpack.c.l.b16 %v955
        %v1052 = vunpack.c.l.b16 %v956
        %v1053 = vunpack.c.l.b16 %v957
        %v1054 = vunpack.c.l.b16 %v958
        %v1055 = vunpack.c.l.b16 %v959
        %v1056 = vunpack.c.l.b16 %v960
        %v1057 = vunpack.c.l.b16 %v961
        %v1058 = vunpack.c.l.b16 %v962
        %v1059 = vunpack.c.l.b16 %v963
        %v1060 = vunpack.c.l.b16 %v964
        %v1061 = vunpack.c.l.b16 %v965
        %v1062 = vunpack.c.l.b16 %v966
        %v1063 = vunpack.c.l.b16 %v967
        %v1064 = vunpack.c.l.b16 %v968
        %v1065 = vunpack.c.l.b16 %v969
        %v1066 = vunpack.c.l.b16 %v970
        %v1067 = vunpack.c.l.b16 %v971
        %v1068 = vunpack.c.l.b16 %v972
        %v1069 = vunpack.c.l.b16 %v973
        %v1070 = vunpack.c.l.b16 %v974
        %v1071 = vunpack.c.l.b16 %v975
        %v1072 = vunpack.c.l.b16 %v976
        %v1073 = vunpack.c.l.b16 %v977
        %v1074 = vunpack.c.l.b16 %v978
        %v1075 = vunpack.c.l.b16 %v979
        %v1076 = vpack.c.b16 %v1029, %v1028
        %v1077 = vpack.c.b16 %v1031, %v1030
        %v1078 = vpack.c.b16 %v1033, %v1032
        %v1079 = vpack.c.b16 %v1035, %v1034
        %v1080 = vpack.c.b16 %v1037, %v1036
        %v1081 = vpack.c.b16 %v1039, %v1038
        %v1082 = vpack.c.b16 %v1041, %v1040
        %v1083 = vpack.c.b16 %v1043, %v1042
        %v1084 = vpack.c.b16 %v1045, %v1044
        %v1085 = vpack.c.b16 %v1047, %v1046
        %v1086 = vpack.c.b16 %v1049, %v1048
        %v1087 = vpack.c.b16 %v1051, %v1050
        %v1088 = vpack.c.b16 %v1053, %v1052
        %v1089 = vpack.c.b16 %v1055, %v1054
        %v1090 = vpack.c.b16 %v1057, %v1056
        %v1091 = vpack.c.b16 %v1059, %v1058
        %v1092 = vpack.c.b16 %v1061, %v1060
        %v1093 = vpack.c.b16 %v1063, %v1062
        %v1094 = vpack.c.b16 %v1065, %v1064
        %v1095 = vpack.c.b16 %v1067, %v1066
        %v1096 = vpack.c.b16 %v1069, %v1068
        %v1097 = vpack.c.b16 %v1071, %v1070
        %v1098 = vpack.c.b16 %v1073, %v1072
        %v1099 = vpack.c.b16 %v1075, %v1074
        %1124 = vmatprep.subr.bf16.mxu0 0
        %1125 = vmatpush1.bf16.msra.mxu0 %v1076
        %1126 = vmatprep.subr.bf16.mxu0 0
        %1127 = vmatpush1.bf16.msra.mxu0 %v1077
        %1128 = vmatprep.subr.bf16.mxu0 0
        %1129 = vmatpush1.bf16.msra.mxu0 %v1078
        %1130 = vmatprep.subr.bf16.mxu0 0
        %1131 = vmatpush1.bf16.msra.mxu0 %v1079
        %1132 = vmatprep.subr.bf16.mxu0 0
        %1133 = vmatpush1.bf16.msra.mxu0 %v1080
        %1134 = vmatprep.subr.bf16.mxu0 0
        %1135 = vmatpush1.bf16.msra.mxu0 %v1081
        %1136 = vmatprep.subr.bf16.mxu0 0
        %1137 = vmatpush1.bf16.msra.mxu0 %v1082
        %1138 = vmatprep.subr.bf16.mxu0 0
        %1139 = vmatpush1.bf16.msra.mxu0 %v1083
        %1140 = vmatprep.subr.bf16.mxu0 0
        %1141 = vmatpush1.bf16.msra.mxu0 %v1084
        %1142 = vmatprep.subr.bf16.mxu0 0
        %1143 = vmatpush1.bf16.msra.mxu0 %v1085
        %1144 = vmatprep.subr.bf16.mxu0 0
        %1145 = vmatpush1.bf16.msra.mxu0 %v1086
        %1146 = vmatprep.subr.bf16.mxu0 0
        %1147 = vmatpush1.bf16.msra.mxu0 %v1087
        %1148 = vmatprep.subr.bf16.mxu0 0
        %1149 = vmatpush1.bf16.msra.mxu0 %v1088
        %1150 = vmatprep.subr.bf16.mxu0 0
        %1151 = vmatpush1.bf16.msra.mxu0 %v1089
        %1152 = vmatprep.subr.bf16.mxu0 0
        %1153 = vmatpush1.bf16.msra.mxu0 %v1090
        %1154 = vmatprep.subr.bf16.mxu0 0
        %1155 = vmatpush1.bf16.msra.mxu0 %v1091
        %1156 = vmatprep.mubr.bf16.mxu0 %v734
        %1157 = vmatmul.mubr.bf16.gmra.mrb[0].mxu0 %v691
        %v1158 = vpop.f32.mrb[0].mxu0
        %v1159 = vadd.f32 0.0, %v1158
        %v1160 = vpop.f32.mrb[0].mxu0
        %v1161 = vpop.f32.mrb[0].mxu0
        %v1162 = vadd.f32 0.0, %v1161
        %v1163 = vpop.f32.mrb[0].mxu0
        %1164 = vmatprep.mubr.bf16.mxu0 %v746
        %1165 = vmatmul.mubr.bf16.gmra.mrb[0].mxu0 %v692
        %v1166 = vpop.f32.mrb[0].mxu0
        %v1167 = vadd.f32 0.0, %v1166
        %v1168 = vpop.f32.mrb[0].mxu0
        %v1169 = vpop.f32.mrb[0].mxu0
        %v1170 = vadd.f32 0.0, %v1169
        %v1171 = vpop.f32.mrb[0].mxu0
        %1172 = vmatprep.mubr.bf16.mxu0 %v758
        %1173 = vmatmul.mubr.bf16.gmra.mrb[0].mxu0 %v693
        %v1174 = vpop.f32.mrb[0].mxu0
        %v1175 = vadd.f32 0.0, %v1174
        %v1176 = vpop.f32.mrb[0].mxu0
        %v1177 = vpop.f32.mrb[0].mxu0
        %v1178 = vadd.f32 0.0, %v1177
        %v1179 = vpop.f32.mrb[0].mxu0
        %1180 = vmatprep.mubr.bf16.mxu0 %v770
        %1181 = vmatmul.mubr.bf16.gmra.mrb[0].mxu0 %v694
        %v1182 = vpop.f32.mrb[0].mxu0
        %v1183 = vadd.f32 0.0, %v1182
        %v1184 = vpop.f32.mrb[0].mxu0
        %v1185 = vpop.f32.mrb[0].mxu0
        %v1186 = vadd.f32 0.0, %v1185
        %v1187 = vpop.f32.mrb[0].mxu0
        %1188 = vmatprep.mubr.bf16.mxu0 %v782
        %1189 = vmatmul.mubr.bf16.gmra.mrb[0].mxu0 %v695
        %v1190 = vpop.f32.mrb[0].mxu0
        %v1191 = vadd.f32 0.0, %v1190
        %v1192 = vpop.f32.mrb[0].mxu0
        %v1193 = vpop.f32.mrb[0].mxu0
        %v1194 = vadd.f32 0.0, %v1193
        %v1195 = vpop.f32.mrb[0].mxu0
        %1196 = vmatprep.mubr.bf16.mxu0 %v794
        %1197 = vmatmul.mubr.bf16.gmra.mrb[0].mxu0 %v696
        %v1198 = vpop.f32.mrb[0].mxu0
        %v1199 = vadd.f32 0.0, %v1198
        %v1200 = vpop.f32.mrb[0].mxu0
        %v1201 = vpop.f32.mrb[0].mxu0
        %v1202 = vadd.f32 0.0, %v1201
        %v1203 = vpop.f32.mrb[0].mxu0
        %1204 = vmatprep.mubr.bf16.mxu0 %v806
        %1205 = vmatmul.mubr.bf16.gmra.mrb[0].mxu0 %v697
        %v1206 = vpop.f32.mrb[0].mxu0
        %v1207 = vadd.f32 0.0, %v1206
        %v1208 = vpop.f32.mrb[0].mxu0
        %v1209 = vpop.f32.mrb[0].mxu0
        %v1210 = vadd.f32 0.0, %v1209
        %v1211 = vpop.f32.mrb[0].mxu0
        %1212 = vmatprep.mubr.bf16.mxu0 %v923
        %1213 = vmatmul.mubr.bf16.gmra.mrb[0].mxu0 %v698
        %v1214 = vpop.f32.mrb[0].mxu0
        %v1215 = vadd.f32 0.0, %v1214
        %v1216 = vpop.f32.mrb[0].mxu0
        %v1217 = vpop.f32.mrb[0].mxu0
        %v1218 = vadd.f32 0.0, %v1217
        %v1219 = vpop.f32.mrb[0].mxu0
        %1220 = vdwg.mxu0
        %1221 = vmatprep.subr.bf16.mxu0 0
        %1222 = vmatpush1.bf16.msra.mxu0 %v1092
        %1223 = vmatprep.subr.bf16.mxu0 0
        %1224 = vmatpush1.bf16.msra.mxu0 %v1093
        %1225 = vmatprep.subr.bf16.mxu0 0
        %1226 = vmatpush1.bf16.msra.mxu0 %v1094
        %1227 = vmatprep.subr.bf16.mxu0 0
        %1228 = vmatpush1.bf16.msra.mxu0 %v1095
        %1229 = vmatprep.subr.bf16.mxu0 0
        %1230 = vmatpush1.bf16.msra.mxu0 %v1096
        %1231 = vmatprep.subr.bf16.mxu0 0
        %1232 = vmatpush1.bf16.msra.mxu0 %v1097
        %1233 = vmatprep.subr.bf16.mxu0 0
        %1234 = vmatpush1.bf16.msra.mxu0 %v1098
        %1235 = vmatprep.subr.bf16.mxu0 0
        %1236 = vmatpush1.bf16.msra.mxu0 %v1099
        %1237 = vmatprep.subr.bf16.mxu0 0
        %1238 = vmatpush1.bf16.msra.mxu0 0
        %1239 = vmatprep.subr.bf16.mxu0 0
        %1240 = vmatpush1.bf16.msra.mxu0 0
        %1241 = vmatprep.subr.bf16.mxu0 0
        %1242 = vmatpush1.bf16.msra.mxu0 0
        %1243 = vmatprep.subr.bf16.mxu0 0
        %1244 = vmatpush1.bf16.msra.mxu0 0
        %1245 = vmatprep.subr.bf16.mxu0 0
        %1246 = vmatpush1.bf16.msra.mxu0 0
        %1247 = vmatprep.subr.bf16.mxu0 0
        %1248 = vmatpush1.bf16.msra.mxu0 0
        %1249 = vmatprep.subr.bf16.mxu0 0
        %1250 = vmatpush1.bf16.msra.mxu0 0
        %1251 = vmatprep.subr.bf16.mxu0 0
        %1252 = vmatpush1.bf16.msra.mxu0 0
        %1253 = vmatprep.mubr.bf16.mxu0 0
        %1254 = vmatmul.mubr.bf16.gmra.mrb[0].mxu0 %v837
        %v1255 = vpop.f32.mrb[0].mxu0
        %v1256 = vadd.f32 %v1159, %v1255
        %v1257 = vpop.f32.mrb[0].mxu0
        %v1258 = vpop.f32.mrb[0].mxu0
        %v1259 = vadd.f32 %v1162, %v1258
        %v1260 = vpop.f32.mrb[0].mxu0
        %1261 = vmatprep.mubr.bf16.mxu0 0
        %1262 = vmatmul.mubr.bf16.gmra.mrb[0].mxu0 %v840
        %v1263 = vpop.f32.mrb[0].mxu0
        %v1264 = vadd.f32 %v1167, %v1263
        %v1265 = vpop.f32.mrb[0].mxu0
        %v1266 = vpop.f32.mrb[0].mxu0
        %v1267 = vadd.f32 %v1170, %v1266
        %v1268 = vpop.f32.mrb[0].mxu0
        %1269 = vmatprep.mubr.bf16.mxu0 0
        %1270 = vmatmul.mubr.bf16.gmra.mrb[0].mxu0 %v843
        %v1271 = vpop.f32.mrb[0].mxu0
        %v1272 = vadd.f32 %v1175, %v1271
        %v1273 = vpop.f32.mrb[0].mxu0
        %v1274 = vpop.f32.mrb[0].mxu0
        %v1275 = vadd.f32 %v1178, %v1274
        %v1276 = vpop.f32.mrb[0].mxu0
        %1277 = vmatprep.mubr.bf16.mxu0 0
        %1278 = vmatmul.mubr.bf16.gmra.mrb[0].mxu0 %v846
        %v1279 = vpop.f32.mrb[0].mxu0
        %v1280 = vadd.f32 %v1183, %v1279
        %v1281 = vpop.f32.mrb[0].mxu0
        %v1282 = vpop.f32.mrb[0].mxu0
        %v1283 = vadd.f32 %v1186, %v1282
        %v1284 = vpop.f32.mrb[0].mxu0
        %1285 = vmatprep.mubr.bf16.mxu0 0
        %1286 = vmatmul.mubr.bf16.gmra.mrb[0].mxu0 %v849
        %v1287 = vpop.f32.mrb[0].mxu0
        %v1288 = vadd.f32 %v1191, %v1287
        %v1289 = vpop.f32.mrb[0].mxu0
        %v1290 = vpop.f32.mrb[0].mxu0
        %v1291 = vadd.f32 %v1194, %v1290
        %v1292 = vpop.f32.mrb[0].mxu0
        %1293 = vmatprep.mubr.bf16.mxu0 0
        %1294 = vmatmul.mubr.bf16.gmra.mrb[0].mxu0 %v852
        %v1295 = vpop.f32.mrb[0].mxu0
        %v1296 = vadd.f32 %v1199, %v1295
        %v1297 = vpop.f32.mrb[0].mxu0
        %v1298 = vpop.f32.mrb[0].mxu0
        %v1299 = vadd.f32 %v1202, %v1298
        %v1300 = vpop.f32.mrb[0].mxu0
        %1301 = vmatprep.mubr.bf16.mxu0 0
        %1302 = vmatmul.mubr.bf16.gmra.mrb[0].mxu0 %v855
        %v1303 = vpop.f32.mrb[0].mxu0
        %v1304 = vadd.f32 %v1207, %v1303
        %v1305 = vpop.f32.mrb[0].mxu0
        %v1306 = vpop.f32.mrb[0].mxu0
        %v1307 = vadd.f32 %v1210, %v1306
        %v1308 = vpop.f32.mrb[0].mxu0
        %1309 = vmatprep.mubr.bf16.mxu0 0
        %1310 = vmatmul.mubr.bf16.gmra.mrb[0].mxu0 %v929
        %v1311 = vpop.f32.mrb[0].mxu0
        %v1312 = vadd.f32 %v1215, %v1311
        %v1313 = vpop.f32.mrb[0].mxu0
        %v1314 = vpop.f32.mrb[0].mxu0
        %v1315 = vadd.f32 %v1218, %v1314
        %v1316 = vpop.f32.mrb[0].mxu0
        %1317 = vdwg.mxu0
        %v1366 = vunpack.c.l.b16 %v864
        %v1367 = vunpack.c.l.b16 %v865
        %v1368 = vunpack.c.l.b16 %v866
        %v1369 = vunpack.c.l.b16 %v867
        %v1370 = vunpack.c.l.b16 %v868
        %v1371 = vunpack.c.l.b16 %v869
        %v1372 = vunpack.c.l.b16 %v870
        %v1373 = vunpack.c.l.b16 %v871
        %v1374 = vunpack.c.l.b16 %v872
        %v1375 = vunpack.c.l.b16 %v873
        %v1376 = vunpack.c.l.b16 %v874
        %v1377 = vunpack.c.l.b16 %v875
        %v1378 = vunpack.c.l.b16 %v876
        %v1379 = vunpack.c.l.b16 %v877
        %v1380 = vunpack.c.l.b16 %v878
        %v1381 = vunpack.c.l.b16 %v879
        %v1382 = vunpack.c.l.b16 %v880
        %v1383 = vunpack.c.l.b16 %v881
        %v1384 = vunpack.c.l.b16 %v882
        %v1385 = vunpack.c.l.b16 %v883
        %v1386 = vunpack.c.l.b16 %v884
        %v1387 = vunpack.c.l.b16 %v885
        %v1388 = vunpack.c.l.b16 %v886
        %v1389 = vunpack.c.l.b16 %v887
        %v1390 = vunpack.c.l.b16 %v888
        %v1391 = vunpack.c.l.b16 %v889
        %v1392 = vunpack.c.l.b16 %v890
        %v1393 = vunpack.c.l.b16 %v891
        %v1394 = vunpack.c.l.b16 %v892
        %v1395 = vunpack.c.l.b16 %v893
        %v1396 = vunpack.c.l.b16 %v894
        %v1397 = vunpack.c.l.b16 %v895
        %v1398 = vunpack.c.l.b16 %v896
        %v1399 = vunpack.c.l.b16 %v897
        %v1400 = vunpack.c.l.b16 %v898
        %v1401 = vunpack.c.l.b16 %v899
        %v1402 = vunpack.c.l.b16 %v900
        %v1403 = vunpack.c.l.b16 %v901
        %v1404 = vunpack.c.l.b16 %v902
        %v1405 = vunpack.c.l.b16 %v903
        %v1406 = vunpack.c.l.b16 %v904
        %v1407 = vunpack.c.l.b16 %v905
        %v1408 = vunpack.c.l.b16 %v906
        %v1409 = vunpack.c.l.b16 %v907
        %v1410 = vunpack.c.l.b16 %v908
        %v1411 = vunpack.c.l.b16 %v909
        %v1412 = vunpack.c.l.b16 %v910
        %v1413 = vunpack.c.l.b16 %v911
        %v1414 = vpack.c.b16 %v1367, %v1366
        %v1415 = vpack.c.b16 %v1369, %v1368
        %v1416 = vpack.c.b16 %v1371, %v1370
        %v1417 = vpack.c.b16 %v1373, %v1372
        %v1418 = vpack.c.b16 %v1375, %v1374
        %v1419 = vpack.c.b16 %v1377, %v1376
        %v1420 = vpack.c.b16 %v1379, %v1378
        %v1421 = vpack.c.b16 %v1381, %v1380
        %v1422 = vpack.c.b16 %v1383, %v1382
        %v1423 = vpack.c.b16 %v1385, %v1384
        %v1424 = vpack.c.b16 %v1387, %v1386
        %v1425 = vpack.c.b16 %v1389, %v1388
        %v1426 = vpack.c.b16 %v1391, %v1390
        %v1427 = vpack.c.b16 %v1393, %v1392
        %v1428 = vpack.c.b16 %v1395, %v1394
        %v1429 = vpack.c.b16 %v1397, %v1396
        %v1430 = vpack.c.b16 %v1399, %v1398
        %v1431 = vpack.c.b16 %v1401, %v1400
        %v1432 = vpack.c.b16 %v1403, %v1402
        %v1433 = vpack.c.b16 %v1405, %v1404
        %v1434 = vpack.c.b16 %v1407, %v1406
        %v1435 = vpack.c.b16 %v1409, %v1408
        %v1436 = vpack.c.b16 %v1411, %v1410
        %v1437 = vpack.c.b16 %v1413, %v1412
        %1462 = vmatprep.subr.bf16.mxu0 0
        %1463 = vmatpush1.bf16.msra.mxu0 %v1414
        %1464 = vmatprep.subr.bf16.mxu0 0
        %1465 = vmatpush1.bf16.msra.mxu0 %v1415
        %1466 = vmatprep.subr.bf16.mxu0 0
        %1467 = vmatpush1.bf16.msra.mxu0 %v1416
        %1468 = vmatprep.subr.bf16.mxu0 0
        %1469 = vmatpush1.bf16.msra.mxu0 %v1417
        %1470 = vmatprep.subr.bf16.mxu0 0
        %1471 = vmatpush1.bf16.msra.mxu0 %v1418
        %1472 = vmatprep.subr.bf16.mxu0 0
        %1473 = vmatpush1.bf16.msra.mxu0 %v1419
        %1474 = vmatprep.subr.bf16.mxu0 0
        %1475 = vmatpush1.bf16.msra.mxu0 %v1420
        %1476 = vmatprep.subr.bf16.mxu0 0
        %1477 = vmatpush1.bf16.msra.mxu0 %v1421
        %1478 = vmatprep.subr.bf16.mxu0 0
        %1479 = vmatpush1.bf16.msra.mxu0 %v1422
        %1480 = vmatprep.subr.bf16.mxu0 0
        %1481 = vmatpush1.bf16.msra.mxu0 %v1423
        %1482 = vmatprep.subr.bf16.mxu0 0
        %1483 = vmatpush1.bf16.msra.mxu0 %v1424
        %1484 = vmatprep.subr.bf16.mxu0 0
        %1485 = vmatpush1.bf16.msra.mxu0 %v1425
        %1486 = vmatprep.subr.bf16.mxu0 0
        %1487 = vmatpush1.bf16.msra.mxu0 %v1426
        %1488 = vmatprep.subr.bf16.mxu0 0
        %1489 = vmatpush1.bf16.msra.mxu0 %v1427
        %1490 = vmatprep.subr.bf16.mxu0 0
        %1491 = vmatpush1.bf16.msra.mxu0 %v1428
        %1492 = vmatprep.subr.bf16.mxu0 0
        %1493 = vmatpush1.bf16.msra.mxu0 %v1429
        %1494 = vmatprep.mubr.bf16.mxu0 %v722
        %1495 = vmatmul.mubr.bf16.gmra.mrb[0].mxu0 %v690
        %v1496 = vpop.f32.mrb[0].mxu0
        %v1497 = vadd.f32 %v1256, %v1496
        %v1498 = vpop.f32.mrb[0].mxu0
        %v1499 = vpop.f32.mrb[0].mxu0
        %v1500 = vadd.f32 %v1259, %v1499
        %v1501 = vpop.f32.mrb[0].mxu0
        %1502 = vmatprep.mubr.bf16.mxu0 %v734
        %1503 = vmatmul.mubr.bf16.gmra.mrb[0].mxu0 %v691
        %v1504 = vpop.f32.mrb[0].mxu0
        %v1505 = vadd.f32 %v1264, %v1504
        %v1506 = vpop.f32.mrb[0].mxu0
        %v1507 = vpop.f32.mrb[0].mxu0
        %v1508 = vadd.f32 %v1267, %v1507
        %v1509 = vpop.f32.mrb[0].mxu0
        %1510 = vmatprep.mubr.bf16.mxu0 %v746
        %1511 = vmatmul.mubr.bf16.gmra.mrb[0].mxu0 %v692
        %v1512 = vpop.f32.mrb[0].mxu0
        %v1513 = vadd.f32 %v1272, %v1512
        %v1514 = vpop.f32.mrb[0].mxu0
        %v1515 = vpop.f32.mrb[0].mxu0
        %v1516 = vadd.f32 %v1275, %v1515
        %v1517 = vpop.f32.mrb[0].mxu0
        %1518 = vmatprep.mubr.bf16.mxu0 %v758
        %1519 = vmatmul.mubr.bf16.gmra.mrb[0].mxu0 %v693
        %v1520 = vpop.f32.mrb[0].mxu0
        %v1521 = vadd.f32 %v1280, %v1520
        %v1522 = vpop.f32.mrb[0].mxu0
        %v1523 = vpop.f32.mrb[0].mxu0
        %v1524 = vadd.f32 %v1283, %v1523
        %v1525 = vpop.f32.mrb[0].mxu0
        %1526 = vmatprep.mubr.bf16.mxu0 %v770
        %1527 = vmatmul.mubr.bf16.gmra.mrb[0].mxu0 %v694
        %v1528 = vpop.f32.mrb[0].mxu0
        %v1529 = vadd.f32 %v1288, %v1528
        %v1530 = vpop.f32.mrb[0].mxu0
        %v1531 = vpop.f32.mrb[0].mxu0
        %v1532 = vadd.f32 %v1291, %v1531
        %v1533 = vpop.f32.mrb[0].mxu0
        %1534 = vmatprep.mubr.bf16.mxu0 %v782
        %1535 = vmatmul.mubr.bf16.gmra.mrb[0].mxu0 %v695
        %v1536 = vpop.f32.mrb[0].mxu0
        %v1537 = vadd.f32 %v1296, %v1536
        %v1538 = vpop.f32.mrb[0].mxu0
        %v1539 = vpop.f32.mrb[0].mxu0
        %v1540 = vadd.f32 %v1299, %v1539
        %v1541 = vpop.f32.mrb[0].mxu0
        %1542 = vmatprep.mubr.bf16.mxu0 %v794
        %1543 = vmatmul.mubr.bf16.gmra.mrb[0].mxu0 %v696
        %v1544 = vpop.f32.mrb[0].mxu0
        %v1545 = vadd.f32 %v1304, %v1544
        %v1546 = vpop.f32.mrb[0].mxu0
        %v1547 = vpop.f32.mrb[0].mxu0
        %v1548 = vadd.f32 %v1307, %v1547
        %v1549 = vpop.f32.mrb[0].mxu0
        %1550 = vmatprep.mubr.bf16.mxu0 %v806
        %1551 = vmatmul.mubr.bf16.gmra.mrb[0].mxu0 %v697
        %v1552 = vpop.f32.mrb[0].mxu0
        %v1553 = vadd.f32 %v1312, %v1552
        %v1554 = vpop.f32.mrb[0].mxu0
        %v1555 = vpop.f32.mrb[0].mxu0
        %v1556 = vadd.f32 %v1315, %v1555
        %v1557 = vpop.f32.mrb[0].mxu0
        %1558 = vdwg.mxu0
        %1559 = vmatprep.subr.bf16.mxu0 0
        %1560 = vmatpush1.bf16.msra.mxu0 %v1430
        %1561 = vmatprep.subr.bf16.mxu0 0
        %1562 = vmatpush1.bf16.msra.mxu0 %v1431
        %1563 = vmatprep.subr.bf16.mxu0 0
        %1564 = vmatpush1.bf16.msra.mxu0 %v1432
        %1565 = vmatprep.subr.bf16.mxu0 0
        %1566 = vmatpush1.bf16.msra.mxu0 %v1433
        %1567 = vmatprep.subr.bf16.mxu0 0
        %1568 = vmatpush1.bf16.msra.mxu0 %v1434
        %1569 = vmatprep.subr.bf16.mxu0 0
        %1570 = vmatpush1.bf16.msra.mxu0 %v1435
        %1571 = vmatprep.subr.bf16.mxu0 0
        %1572 = vmatpush1.bf16.msra.mxu0 %v1436
        %1573 = vmatprep.subr.bf16.mxu0 0
        %1574 = vmatpush1.bf16.msra.mxu0 %v1437
        %1575 = vmatprep.subr.bf16.mxu0 0
        %1576 = vmatpush1.bf16.msra.mxu0 0
        %1577 = vmatprep.subr.bf16.mxu0 0
        %1578 = vmatpush1.bf16.msra.mxu0 0
        %1579 = vmatprep.subr.bf16.mxu0 0
        %1580 = vmatpush1.bf16.msra.mxu0 0
        %1581 = vmatprep.subr.bf16.mxu0 0
        %1582 = vmatpush1.bf16.msra.mxu0 0
        %1583 = vmatprep.subr.bf16.mxu0 0
        %1584 = vmatpush1.bf16.msra.mxu0 0
        %1585 = vmatprep.subr.bf16.mxu0 0
        %1586 = vmatpush1.bf16.msra.mxu0 0
        %1587 = vmatprep.subr.bf16.mxu0 0
        %1588 = vmatpush1.bf16.msra.mxu0 0
        %1589 = vmatprep.subr.bf16.mxu0 0
        %1590 = vmatpush1.bf16.msra.mxu0 0
        %1591 = vmatprep.mubr.bf16.mxu0 0
        %1592 = vmatmul.mubr.bf16.gmra.mrb[0].mxu0 %v834
        %v1593 = vpop.f32.mrb[0].mxu0
        %v1594 = vadd.f32 %v1497, %v1593
        %v1595 = vpop.f32.mrb[0].mxu0
        %v1596 = vpop.f32.mrb[0].mxu0
        %v1597 = vadd.f32 %v1500, %v1596
        %v1598 = vpop.f32.mrb[0].mxu0
        %1599 = vmatprep.mubr.bf16.mxu0 0
        %1600 = vmatmul.mubr.bf16.gmra.mrb[0].mxu0 %v837
        %v1601 = vpop.f32.mrb[0].mxu0
        %v1602 = vadd.f32 %v1505, %v1601
        %v1603 = vpop.f32.mrb[0].mxu0
        %v1604 = vpop.f32.mrb[0].mxu0
        %v1605 = vadd.f32 %v1508, %v1604
        %v1606 = vpop.f32.mrb[0].mxu0
        %1607 = vmatprep.mubr.bf16.mxu0 0
        %1608 = vmatmul.mubr.bf16.gmra.mrb[0].mxu0 %v840
        %v1609 = vpop.f32.mrb[0].mxu0
        %v1610 = vadd.f32 %v1513, %v1609
        %v1611 = vpop.f32.mrb[0].mxu0
        %v1612 = vpop.f32.mrb[0].mxu0
        %v1613 = vadd.f32 %v1516, %v1612
        %v1614 = vpop.f32.mrb[0].mxu0
        %1615 = vmatprep.mubr.bf16.mxu0 0
        %1616 = vmatmul.mubr.bf16.gmra.mrb[0].mxu0 %v843
        %v1617 = vpop.f32.mrb[0].mxu0
        %v1618 = vadd.f32 %v1521, %v1617
        %v1619 = vpop.f32.mrb[0].mxu0
        %v1620 = vpop.f32.mrb[0].mxu0
        %v1621 = vadd.f32 %v1524, %v1620
        %v1622 = vpop.f32.mrb[0].mxu0
        %1623 = vmatprep.mubr.bf16.mxu0 0
        %1624 = vmatmul.mubr.bf16.gmra.mrb[0].mxu0 %v846
        %v1625 = vpop.f32.mrb[0].mxu0
        %v1626 = vadd.f32 %v1529, %v1625
        %v1627 = vpop.f32.mrb[0].mxu0
        %v1628 = vpop.f32.mrb[0].mxu0
        %v1629 = vadd.f32 %v1532, %v1628
        %v1630 = vpop.f32.mrb[0].mxu0
        %1631 = vmatprep.mubr.bf16.mxu0 0
        %1632 = vmatmul.mubr.bf16.gmra.mrb[0].mxu0 %v849
        %v1633 = vpop.f32.mrb[0].mxu0
        %v1634 = vadd.f32 %v1537, %v1633
        %v1635 = vpop.f32.mrb[0].mxu0
        %v1636 = vpop.f32.mrb[0].mxu0
        %v1637 = vadd.f32 %v1540, %v1636
        %v1638 = vpop.f32.mrb[0].mxu0
        %1639 = vmatprep.mubr.bf16.mxu0 0
        %1640 = vmatmul.mubr.bf16.gmra.mrb[0].mxu0 %v852
        %v1641 = vpop.f32.mrb[0].mxu0
        %v1642 = vadd.f32 %v1545, %v1641
        %v1643 = vpop.f32.mrb[0].mxu0
        %v1644 = vpop.f32.mrb[0].mxu0
        %v1645 = vadd.f32 %v1548, %v1644
        %v1646 = vpop.f32.mrb[0].mxu0
        %1647 = vmatprep.mubr.bf16.mxu0 0
        %1648 = vmatmul.mubr.bf16.gmra.mrb[0].mxu0 %v855
        %v1649 = vpop.f32.mrb[0].mxu0
        %v1650 = vadd.f32 %v1553, %v1649
        %v1651 = vpop.f32.mrb[0].mxu0
        %v1652 = vpop.f32.mrb[0].mxu0
        %v1653 = vadd.f32 %v1556, %v1652
        %v1654 = vpop.f32.mrb[0].mxu0
        %1655 = vdwg.mxu0
        %v1657 = vshrl.u32 %v699, 16
        %v1659 = vshll.u32 %v699, 16
        %v1661 = vrot.slane %v1659, 1
        %v1662 = vor.u32 %v1657, %v1661
        %v1664 = vshll.u32 %v709, 16
        %v1666 = vrot.slane %v1664, 1
        %v1667 = vsel %vm710, %v1662, %v1666
        %v1671 = vrot.slane %v699, 1
        %v1672 = vrot.slane %v709, 1
        %v1673 = vsel %vm831, %v1671, %v1672
        %s1675 = scalar_lea.vmem [#allocation8], 384
        %v1676 = vld [vmem:[%s1675] sm:$0xf]
        %v1677 = vld [vmem:[%s1675 + $0x4] sm:$0xf]
        %v1678 = vld [vmem:[%s1675 + $0x8] sm:$0xf]
        %v1679 = vld [vmem:[%s1675 + $0xc] sm:$0xf]
        %v1680 = vld [vmem:[%s1675 + $0x10] sm:$0xf]
        %v1681 = vld [vmem:[%s1675 + $0x14] sm:$0xf]
        %v1682 = vld [vmem:[%s1675 + $0x18] sm:$0xf]
        %v1683 = vld [vmem:[%s1675 + $0x1c] sm:$0xf]
        %v1684 = vld [vmem:[%s1675 + $0x20] sm:$0xf]
        %v1685 = vld [vmem:[%s1675 + $0x24] sm:$0xf]
        %v1686 = vld [vmem:[%s1675 + $0x28] sm:$0xf]
        %v1687 = vld [vmem:[%s1675 + $0x2c] sm:$0xf]
        %v1688 = vld [vmem:[%s1675 + $0x30] sm:$0xf]
        %v1689 = vld [vmem:[%s1675 + $0x34] sm:$0xf]
        %v1690 = vld [vmem:[%s1675 + $0x38] sm:$0xf]
        %v1691 = vld [vmem:[%s1675 + $0x3c] sm:$0xf]
        %v1692 = vld [vmem:[%s1675 + $0x40] sm:$0xf]
        %v1693 = vld [vmem:[%s1675 + $0x44] sm:$0xf]
        %v1694 = vld [vmem:[%s1675 + $0x48] sm:$0xf]
        %v1695 = vld [vmem:[%s1675 + $0x4c] sm:$0xf]
        %v1696 = vld [vmem:[%s1675 + $0x50] sm:$0xf]
        %v1697 = vld [vmem:[%s1675 + $0x54] sm:$0xf]
        %v1698 = vld [vmem:[%s1675 + $0x58] sm:$0xf]
        %v1699 = vld [vmem:[%s1675 + $0x5c] sm:$0xf]
        %v1700 = vld [vmem:[%s1675 + $0x60] sm:$0xf]
        %v1701 = vld [vmem:[%s1675 + $0x64] sm:$0xf]
        %v1702 = vld [vmem:[%s1675 + $0x68] sm:$0xf]
        %v1703 = vld [vmem:[%s1675 + $0x6c] sm:$0xf]
        %v1704 = vld [vmem:[%s1675 + $0x70] sm:$0xf]
        %v1705 = vld [vmem:[%s1675 + $0x74] sm:$0xf]
        %v1706 = vld [vmem:[%s1675 + $0x78] sm:$0xf]
        %v1707 = vld [vmem:[%s1675 + $0x7c] sm:$0xf]
        %v1708 = vld [vmem:[%s1675 + $0x80] sm:$0xf]
        %v1709 = vld [vmem:[%s1675 + $0x84] sm:$0xf]
        %v1710 = vld [vmem:[%s1675 + $0x88] sm:$0xf]
        %v1711 = vld [vmem:[%s1675 + $0x8c] sm:$0xf]
        %v1712 = vld [vmem:[%s1675 + $0x90] sm:$0xf]
        %v1713 = vld [vmem:[%s1675 + $0x94] sm:$0xf]
        %v1714 = vld [vmem:[%s1675 + $0x98] sm:$0xf]
        %v1715 = vld [vmem:[%s1675 + $0x9c] sm:$0xf]
        %v1716 = vld [vmem:[%s1675 + $0xa0] sm:$0xf]
        %v1717 = vld [vmem:[%s1675 + $0xa4] sm:$0xf]
        %v1718 = vld [vmem:[%s1675 + $0xa8] sm:$0xf]
        %v1719 = vld [vmem:[%s1675 + $0xac] sm:$0xf]
        %v1720 = vld [vmem:[%s1675 + $0xb0] sm:$0xf]
        %v1721 = vld [vmem:[%s1675 + $0xb4] sm:$0xf]
        %v1722 = vld [vmem:[%s1675 + $0xb8] sm:$0xf]
        %v1723 = vld [vmem:[%s1675 + $0xbc] sm:$0xf]
        %v1772 = vunpack.c.l.b16 %v1676
        %v1773 = vunpack.c.l.b16 %v1677
        %v1774 = vunpack.c.l.b16 %v1678
        %v1775 = vunpack.c.l.b16 %v1679
        %v1776 = vunpack.c.l.b16 %v1680
        %v1777 = vunpack.c.l.b16 %v1681
        %v1778 = vunpack.c.l.b16 %v1682
        %v1779 = vunpack.c.l.b16 %v1683
        %v1780 = vunpack.c.l.b16 %v1684
        %v1781 = vunpack.c.l.b16 %v1685
        %v1782 = vunpack.c.l.b16 %v1686
        %v1783 = vunpack.c.l.b16 %v1687
        %v1784 = vunpack.c.l.b16 %v1688
        %v1785 = vunpack.c.l.b16 %v1689
        %v1786 = vunpack.c.l.b16 %v1690
        %v1787 = vunpack.c.l.b16 %v1691
        %v1788 = vunpack.c.l.b16 %v1692
        %v1789 = vunpack.c.l.b16 %v1693
        %v1790 = vunpack.c.l.b16 %v1694
        %v1791 = vunpack.c.l.b16 %v1695
        %v1792 = vunpack.c.l.b16 %v1696
        %v1793 = vunpack.c.l.b16 %v1697
        %v1794 = vunpack.c.l.b16 %v1698
        %v1795 = vunpack.c.l.b16 %v1699
        %v1796 = vunpack.c.l.b16 %v1700
        %v1797 = vunpack.c.l.b16 %v1701
        %v1798 = vunpack.c.l.b16 %v1702
        %v1799 = vunpack.c.l.b16 %v1703
        %v1800 = vunpack.c.l.b16 %v1704
        %v1801 = vunpack.c.l.b16 %v1705
        %v1802 = vunpack.c.l.b16 %v1706
        %v1803 = vunpack.c.l.b16 %v1707
        %v1804 = vunpack.c.l.b16 %v1708
        %v1805 = vunpack.c.l.b16 %v1709
        %v1806 = vunpack.c.l.b16 %v1710
        %v1807 = vunpack.c.l.b16 %v1711
        %v1808 = vunpack.c.l.b16 %v1712
        %v1809 = vunpack.c.l.b16 %v1713
        %v1810 = vunpack.c.l.b16 %v1714
        %v1811 = vunpack.c.l.b16 %v1715
        %v1812 = vunpack.c.l.b16 %v1716
        %v1813 = vunpack.c.l.b16 %v1717
        %v1814 = vunpack.c.l.b16 %v1718
        %v1815 = vunpack.c.l.b16 %v1719
        %v1816 = vunpack.c.l.b16 %v1720
        %v1817 = vunpack.c.l.b16 %v1721
        %v1818 = vunpack.c.l.b16 %v1722
        %v1819 = vunpack.c.l.b16 %v1723
        %v1820 = vpack.c.b16 %v1773, %v1772
        %v1821 = vpack.c.b16 %v1775, %v1774
        %v1822 = vpack.c.b16 %v1777, %v1776
        %v1823 = vpack.c.b16 %v1779, %v1778
        %v1824 = vpack.c.b16 %v1781, %v1780
        %v1825 = vpack.c.b16 %v1783, %v1782
        %v1826 = vpack.c.b16 %v1785, %v1784
        %v1827 = vpack.c.b16 %v1787, %v1786
        %v1828 = vpack.c.b16 %v1789, %v1788
        %v1829 = vpack.c.b16 %v1791, %v1790
        %v1830 = vpack.c.b16 %v1793, %v1792
        %v1831 = vpack.c.b16 %v1795, %v1794
        %v1832 = vpack.c.b16 %v1797, %v1796
        %v1833 = vpack.c.b16 %v1799, %v1798
        %v1834 = vpack.c.b16 %v1801, %v1800
        %v1835 = vpack.c.b16 %v1803, %v1802
        %v1836 = vpack.c.b16 %v1805, %v1804
        %v1837 = vpack.c.b16 %v1807, %v1806
        %v1838 = vpack.c.b16 %v1809, %v1808
        %v1839 = vpack.c.b16 %v1811, %v1810
        %v1840 = vpack.c.b16 %v1813, %v1812
        %v1841 = vpack.c.b16 %v1815, %v1814
        %v1842 = vpack.c.b16 %v1817, %v1816
        %v1843 = vpack.c.b16 %v1819, %v1818
        %1868 = vmatprep.subr.bf16.mxu0 0
        %1869 = vmatpush1.bf16.msra.mxu0 %v1820
        %1870 = vmatprep.subr.bf16.mxu0 0
        %1871 = vmatpush1.bf16.msra.mxu0 %v1821
        %1872 = vmatprep.subr.bf16.mxu0 0
        %1873 = vmatpush1.bf16.msra.mxu0 %v1822
        %1874 = vmatprep.subr.bf16.mxu0 0
        %1875 = vmatpush1.bf16.msra.mxu0 %v1823
        %1876 = vmatprep.subr.bf16.mxu0 0
        %1877 = vmatpush1.bf16.msra.mxu0 %v1824
        %1878 = vmatprep.subr.bf16.mxu0 0
        %1879 = vmatpush1.bf16.msra.mxu0 %v1825
        %1880 = vmatprep.subr.bf16.mxu0 0
        %1881 = vmatpush1.bf16.msra.mxu0 %v1826
        %1882 = vmatprep.subr.bf16.mxu0 0
        %1883 = vmatpush1.bf16.msra.mxu0 %v1827
        %1884 = vmatprep.subr.bf16.mxu0 0
        %1885 = vmatpush1.bf16.msra.mxu0 %v1828
        %1886 = vmatprep.subr.bf16.mxu0 0
        %1887 = vmatpush1.bf16.msra.mxu0 %v1829
        %1888 = vmatprep.subr.bf16.mxu0 0
        %1889 = vmatpush1.bf16.msra.mxu0 %v1830
        %1890 = vmatprep.subr.bf16.mxu0 0
        %1891 = vmatpush1.bf16.msra.mxu0 %v1831
        %1892 = vmatprep.subr.bf16.mxu0 0
        %1893 = vmatpush1.bf16.msra.mxu0 %v1832
        %1894 = vmatprep.subr.bf16.mxu0 0
        %1895 = vmatpush1.bf16.msra.mxu0 %v1833
        %1896 = vmatprep.subr.bf16.mxu0 0
        %1897 = vmatpush1.bf16.msra.mxu0 %v1834
        %1898 = vmatprep.subr.bf16.mxu0 0
        %1899 = vmatpush1.bf16.msra.mxu0 %v1835
        %1900 = vmatprep.mubr.bf16.mxu0 %v746
        %1901 = vmatmul.mubr.bf16.gmra.mrb[0].mxu0 %v692
        %v1902 = vpop.f32.mrb[0].mxu0
        %v1903 = vadd.f32 0.0, %v1902
        %v1904 = vpop.f32.mrb[0].mxu0
        %v1905 = vpop.f32.mrb[0].mxu0
        %v1906 = vadd.f32 0.0, %v1905
        %v1907 = vpop.f32.mrb[0].mxu0
        %1908 = vmatprep.mubr.bf16.mxu0 %v758
        %1909 = vmatmul.mubr.bf16.gmra.mrb[0].mxu0 %v693
        %v1910 = vpop.f32.mrb[0].mxu0
        %v1911 = vadd.f32 0.0, %v1910
        %v1912 = vpop.f32.mrb[0].mxu0
        %v1913 = vpop.f32.mrb[0].mxu0
        %v1914 = vadd.f32 0.0, %v1913
        %v1915 = vpop.f32.mrb[0].mxu0
        %1916 = vmatprep.mubr.bf16.mxu0 %v770
        %1917 = vmatmul.mubr.bf16.gmra.mrb[0].mxu0 %v694
        %v1918 = vpop.f32.mrb[0].mxu0
        %v1919 = vadd.f32 0.0, %v1918
        %v1920 = vpop.f32.mrb[0].mxu0
        %v1921 = vpop.f32.mrb[0].mxu0
        %v1922 = vadd.f32 0.0, %v1921
        %v1923 = vpop.f32.mrb[0].mxu0
        %1924 = vmatprep.mubr.bf16.mxu0 %v782
        %1925 = vmatmul.mubr.bf16.gmra.mrb[0].mxu0 %v695
        %v1926 = vpop.f32.mrb[0].mxu0
        %v1927 = vadd.f32 0.0, %v1926
        %v1928 = vpop.f32.mrb[0].mxu0
        %v1929 = vpop.f32.mrb[0].mxu0
        %v1930 = vadd.f32 0.0, %v1929
        %v1931 = vpop.f32.mrb[0].mxu0
        %1932 = vmatprep.mubr.bf16.mxu0 %v794
        %1933 = vmatmul.mubr.bf16.gmra.mrb[0].mxu0 %v696
        %v1934 = vpop.f32.mrb[0].mxu0
        %v1935 = vadd.f32 0.0, %v1934
        %v1936 = vpop.f32.mrb[0].mxu0
        %v1937 = vpop.f32.mrb[0].mxu0
        %v1938 = vadd.f32 0.0, %v1937
        %v1939 = vpop.f32.mrb[0].mxu0
        %1940 = vmatprep.mubr.bf16.mxu0 %v806
        %1941 = vmatmul.mubr.bf16.gmra.mrb[0].mxu0 %v697
        %v1942 = vpop.f32.mrb[0].mxu0
        %v1943 = vadd.f32 0.0, %v1942
        %v1944 = vpop.f32.mrb[0].mxu0
        %v1945 = vpop.f32.mrb[0].mxu0
        %v1946 = vadd.f32 0.0, %v1945
        %v1947 = vpop.f32.mrb[0].mxu0
        %1948 = vmatprep.mubr.bf16.mxu0 %v923
        %1949 = vmatmul.mubr.bf16.gmra.mrb[0].mxu0 %v698
        %v1950 = vpop.f32.mrb[0].mxu0
        %v1951 = vadd.f32 0.0, %v1950
        %v1952 = vpop.f32.mrb[0].mxu0
        %v1953 = vpop.f32.mrb[0].mxu0
        %v1954 = vadd.f32 0.0, %v1953
        %v1955 = vpop.f32.mrb[0].mxu0
        %1956 = vmatprep.mubr.bf16.mxu0 %v1667
        %1957 = vmatmul.mubr.bf16.gmra.mrb[0].mxu0 %v699
        %v1958 = vpop.f32.mrb[0].mxu0
        %v1959 = vadd.f32 0.0, %v1958
        %v1960 = vpop.f32.mrb[0].mxu0
        %v1961 = vpop.f32.mrb[0].mxu0
        %v1962 = vadd.f32 0.0, %v1961
        %v1963 = vpop.f32.mrb[0].mxu0
        %1964 = vdwg.mxu0
        %1965 = vmatprep.subr.bf16.mxu0 0
        %1966 = vmatpush1.bf16.msra.mxu0 %v1836
        %1967 = vmatprep.subr.bf16.mxu0 0
        %1968 = vmatpush1.bf16.msra.mxu0 %v1837
        %1969 = vmatprep.subr.bf16.mxu0 0
        %1970 = vmatpush1.bf16.msra.mxu0 %v1838
        %1971 = vmatprep.subr.bf16.mxu0 0
        %1972 = vmatpush1.bf16.msra.mxu0 %v1839
        %1973 = vmatprep.subr.bf16.mxu0 0
        %1974 = vmatpush1.bf16.msra.mxu0 %v1840
        %1975 = vmatprep.subr.bf16.mxu0 0
        %1976 = vmatpush1.bf16.msra.mxu0 %v1841
        %1977 = vmatprep.subr.bf16.mxu0 0
        %1978 = vmatpush1.bf16.msra.mxu0 %v1842
        %1979 = vmatprep.subr.bf16.mxu0 0
        %1980 = vmatpush1.bf16.msra.mxu0 %v1843
        %1981 = vmatprep.subr.bf16.mxu0 0
        %1982 = vmatpush1.bf16.msra.mxu0 0
        %1983 = vmatprep.subr.bf16.mxu0 0
        %1984 = vmatpush1.bf16.msra.mxu0 0
        %1985 = vmatprep.subr.bf16.mxu0 0
        %1986 = vmatpush1.bf16.msra.mxu0 0
        %1987 = vmatprep.subr.bf16.mxu0 0
        %1988 = vmatpush1.bf16.msra.mxu0 0
        %1989 = vmatprep.subr.bf16.mxu0 0
        %1990 = vmatpush1.bf16.msra.mxu0 0
        %1991 = vmatprep.subr.bf16.mxu0 0
        %1992 = vmatpush1.bf16.msra.mxu0 0
        %1993 = vmatprep.subr.bf16.mxu0 0
        %1994 = vmatpush1.bf16.msra.mxu0 0
        %1995 = vmatprep.subr.bf16.mxu0 0
        %1996 = vmatpush1.bf16.msra.mxu0 0
        %1997 = vmatprep.mubr.bf16.mxu0 0
        %1998 = vmatmul.mubr.bf16.gmra.mrb[0].mxu0 %v840
        %v1999 = vpop.f32.mrb[0].mxu0
        %v2000 = vadd.f32 %v1903, %v1999
        %v2001 = vpop.f32.mrb[0].mxu0
        %v2002 = vpop.f32.mrb[0].mxu0
        %v2003 = vadd.f32 %v1906, %v2002
        %v2004 = vpop.f32.mrb[0].mxu0
        %2005 = vmatprep.mubr.bf16.mxu0 0
        %2006 = vmatmul.mubr.bf16.gmra.mrb[0].mxu0 %v843
        %v2007 = vpop.f32.mrb[0].mxu0
        %v2008 = vadd.f32 %v1911, %v2007
        %v2009 = vpop.f32.mrb[0].mxu0
        %v2010 = vpop.f32.mrb[0].mxu0
        %v2011 = vadd.f32 %v1914, %v2010
        %v2012 = vpop.f32.mrb[0].mxu0
        %2013 = vmatprep.mubr.bf16.mxu0 0
        %2014 = vmatmul.mubr.bf16.gmra.mrb[0].mxu0 %v846
        %v2015 = vpop.f32.mrb[0].mxu0
        %v2016 = vadd.f32 %v1919, %v2015
        %v2017 = vpop.f32.mrb[0].mxu0
        %v2018 = vpop.f32.mrb[0].mxu0
        %v2019 = vadd.f32 %v1922, %v2018
        %v2020 = vpop.f32.mrb[0].mxu0
        %2021 = vmatprep.mubr.bf16.mxu0 0
        %2022 = vmatmul.mubr.bf16.gmra.mrb[0].mxu0 %v849
        %v2023 = vpop.f32.mrb[0].mxu0
        %v2024 = vadd.f32 %v1927, %v2023
        %v2025 = vpop.f32.mrb[0].mxu0
        %v2026 = vpop.f32.mrb[0].mxu0
        %v2027 = vadd.f32 %v1930, %v2026
        %v2028 = vpop.f32.mrb[0].mxu0
        %2029 = vmatprep.mubr.bf16.mxu0 0
        %2030 = vmatmul.mubr.bf16.gmra.mrb[0].mxu0 %v852
        %v2031 = vpop.f32.mrb[0].mxu0
        %v2032 = vadd.f32 %v1935, %v2031
        %v2033 = vpop.f32.mrb[0].mxu0
        %v2034 = vpop.f32.mrb[0].mxu0
        %v2035 = vadd.f32 %v1938, %v2034
        %v2036 = vpop.f32.mrb[0].mxu0
        %2037 = vmatprep.mubr.bf16.mxu0 0
        %2038 = vmatmul.mubr.bf16.gmra.mrb[0].mxu0 %v855
        %v2039 = vpop.f32.mrb[0].mxu0
        %v2040 = vadd.f32 %v1943, %v2039
        %v2041 = vpop.f32.mrb[0].mxu0
        %v2042 = vpop.f32.mrb[0].mxu0
        %v2043 = vadd.f32 %v1946, %v2042
        %v2044 = vpop.f32.mrb[0].mxu0
        %2045 = vmatprep.mubr.bf16.mxu0 0
        %2046 = vmatmul.mubr.bf16.gmra.mrb[0].mxu0 %v929
        %v2047 = vpop.f32.mrb[0].mxu0
        %v2048 = vadd.f32 %v1951, %v2047
        %v2049 = vpop.f32.mrb[0].mxu0
        %v2050 = vpop.f32.mrb[0].mxu0
        %v2051 = vadd.f32 %v1954, %v2050
        %v2052 = vpop.f32.mrb[0].mxu0
        %2053 = vmatprep.mubr.bf16.mxu0 0
        %2054 = vmatmul.mubr.bf16.gmra.mrb[0].mxu0 %v1673
        %v2055 = vpop.f32.mrb[0].mxu0
        %v2056 = vadd.f32 %v1959, %v2055
        %v2057 = vpop.f32.mrb[0].mxu0
        %v2058 = vpop.f32.mrb[0].mxu0
        %v2059 = vadd.f32 %v1962, %v2058
        %v2060 = vpop.f32.mrb[0].mxu0
        %2061 = vdwg.mxu0
        %v2062 = vadd.f32 %v1594, %v2000
        %v2063 = vadd.f32 %v1597, %v2003
        %v2064 = vadd.f32 %v1602, %v2008
        %v2065 = vadd.f32 %v1605, %v2011
        %v2066 = vadd.f32 %v1610, %v2016
        %v2067 = vadd.f32 %v1613, %v2019
        %v2068 = vadd.f32 %v1618, %v2024
        %v2069 = vadd.f32 %v1621, %v2027
        %v2070 = vadd.f32 %v1626, %v2032
        %v2071 = vadd.f32 %v1629, %v2035
        %v2072 = vadd.f32 %v1634, %v2040
        %v2073 = vadd.f32 %v1637, %v2043
        %v2074 = vadd.f32 %v1642, %v2048
        %v2075 = vadd.f32 %v1645, %v2051
        %v2076 = vadd.f32 %v1650, %v2056
        %v2077 = vadd.f32 %v1653, %v2059
        %v2078 = vpack.c.bf16 %v2063, %v2062
        %v2079 = vpack.c.bf16 %v2065, %v2064
        %v2080 = vpack.c.bf16 %v2067, %v2066
        %v2081 = vpack.c.bf16 %v2069, %v2068
        %v2082 = vpack.c.bf16 %v2071, %v2070
        %v2083 = vpack.c.bf16 %v2073, %v2072
        %v2084 = vpack.c.bf16 %v2075, %v2074
        %v2085 = vpack.c.bf16 %v2077, %v2076
        %v2094 = vunpack.c.l.b16 %v2078
        %v2095 = vunpack.c.h.b16 %v2078
        %v2096 = vunpack.c.l.b16 %v2079
        %v2097 = vunpack.c.h.b16 %v2079
        %v2098 = vunpack.c.l.b16 %v2080
        %v2099 = vunpack.c.h.b16 %v2080
        %v2100 = vunpack.c.l.b16 %v2081
        %v2101 = vunpack.c.h.b16 %v2081
        %v2102 = vunpack.c.l.b16 %v2082
        %v2103 = vunpack.c.h.b16 %v2082
        %v2104 = vunpack.c.l.b16 %v2083
        %v2105 = vunpack.c.h.b16 %v2083
        %v2106 = vunpack.c.l.b16 %v2084
        %v2107 = vunpack.c.h.b16 %v2084
        %v2108 = vunpack.c.l.b16 %v2085
        %v2109 = vunpack.c.h.b16 %v2085
        %v2110 = vpack.c.b16 %v2094, %v2094
        %v2111 = vpack.c.b16 %v2095, %v2095
        %v2112 = vpack.c.b16 %v2096, %v2096
        %v2113 = vpack.c.b16 %v2097, %v2097
        %v2114 = vpack.c.b16 %v2098, %v2098
        %v2115 = vpack.c.b16 %v2099, %v2099
        %v2116 = vpack.c.b16 %v2100, %v2100
        %v2117 = vpack.c.b16 %v2101, %v2101
        %v2118 = vpack.c.b16 %v2102, %v2102
        %v2119 = vpack.c.b16 %v2103, %v2103
        %v2120 = vpack.c.b16 %v2104, %v2104
        %v2121 = vpack.c.b16 %v2105, %v2105
        %v2122 = vpack.c.b16 %v2106, %v2106
        %v2123 = vpack.c.b16 %v2107, %v2107
        %v2124 = vpack.c.b16 %v2108, %v2108
        %v2125 = vpack.c.b16 %v2109, %v2109
        %2142 = vst [vmem:[%s470] sm:$0xf] %v2110
        %2143 = vst [vmem:[%s470 + $0x4] sm:$0xf] %v2111
        %2144 = vst [vmem:[%s470 + $0x8] sm:$0xf] %v2112
        %2145 = vst [vmem:[%s470 + $0xc] sm:$0xf] %v2113
        %2146 = vst [vmem:[%s470 + $0x10] sm:$0xf] %v2114
        %2147 = vst [vmem:[%s470 + $0x14] sm:$0xf] %v2115
        %2148 = vst [vmem:[%s470 + $0x18] sm:$0xf] %v2116
        %2149 = vst [vmem:[%s470 + $0x1c] sm:$0xf] %v2117
        %2150 = vst [vmem:[%s470 + $0x20] sm:$0xf] %v2118
        %2151 = vst [vmem:[%s470 + $0x24] sm:$0xf] %v2119
        %2152 = vst [vmem:[%s470 + $0x28] sm:$0xf] %v2120
        %2153 = vst [vmem:[%s470 + $0x2c] sm:$0xf] %v2121
        %2154 = vst [vmem:[%s470 + $0x30] sm:$0xf] %v2122
        %2155 = vst [vmem:[%s470 + $0x34] sm:$0xf] %v2123
        %2156 = vst [vmem:[%s470 + $0x38] sm:$0xf] %v2124
        %2157 = vst [vmem:[%s470 + $0x3c] sm:$0xf] %v2125
        %v2158 = vadd.f32 %v2062, %v2063
        %v2159 = vadd.f32 %v2158, %v2064
        %v2160 = vadd.f32 %v2159, %v2065
        %v2161 = vadd.f32 %v2160, %v2066
        %v2162 = vadd.f32 %v2161, %v2067
        %v2163 = vadd.f32 %v2162, %v2068
        %v2164 = vadd.f32 %v2163, %v2069
        %v2165 = vadd.f32 %v2164, %v2070
        %v2166 = vadd.f32 %v2165, %v2071
        %v2167 = vadd.f32 %v2166, %v2072
        %v2168 = vadd.f32 %v2167, %v2073
        %v2169 = vadd.f32 %v2168, %v2074
        %v2170 = vadd.f32 %v2169, %v2075
        %v2171 = vadd.f32 %v2170, %v2076
        %v2172 = vadd.f32 %v2171, %v2077
        %v2173 = vrot.slane %v2172, 4
        %v2174 = vadd.f32 %v2172, %v2173
        %v2175 = vrot.slane %v2174, 2
        %v2176 = vadd.f32 %v2174, %v2175
        %v2177 = vrot.slane %v2176, 1
        %v2178 = vadd.f32 %v2176, %v2177
        %v2179 = vmul.f32 %v2062, %v2062
        %v2180 = vmul.f32 %v2063, %v2063
        %v2181 = vmul.f32 %v2064, %v2064
        %v2182 = vmul.f32 %v2065, %v2065
        %v2183 = vmul.f32 %v2066, %v2066
        %v2184 = vmul.f32 %v2067, %v2067
        %v2185 = vmul.f32 %v2068, %v2068
        %v2186 = vmul.f32 %v2069, %v2069
        %v2187 = vmul.f32 %v2070, %v2070
        %v2188 = vmul.f32 %v2071, %v2071
        %v2189 = vmul.f32 %v2072, %v2072
        %v2190 = vmul.f32 %v2073, %v2073
        %v2191 = vmul.f32 %v2074, %v2074
        %v2192 = vmul.f32 %v2075, %v2075
        %v2193 = vmul.f32 %v2076, %v2076
        %v2194 = vmul.f32 %v2077, %v2077
        %v2195 = vadd.f32 %v2179, %v2180
        %v2196 = vadd.f32 %v2195, %v2181
        %v2197 = vadd.f32 %v2196, %v2182
        %v2198 = vadd.f32 %v2197, %v2183
        %v2199 = vadd.f32 %v2198, %v2184
        %v2200 = vadd.f32 %v2199, %v2185
        %v2201 = vadd.f32 %v2200, %v2186
        %v2202 = vadd.f32 %v2201, %v2187
        %v2203 = vadd.f32 %v2202, %v2188
        %v2204 = vadd.f32 %v2203, %v2189
        %v2205 = vadd.f32 %v2204, %v2190
        %v2206 = vadd.f32 %v2205, %v2191
        %v2207 = vadd.f32 %v2206, %v2192
        %v2208 = vadd.f32 %v2207, %v2193
        %v2209 = vadd.f32 %v2208, %v2194
        %v2210 = vrot.slane %v2209, 4
        %v2211 = vadd.f32 %v2209, %v2210
        %v2212 = vrot.slane %v2211, 2
        %v2213 = vadd.f32 %v2211, %v2212
        %v2214 = vrot.slane %v2213, 1
        %v2215 = vadd.f32 %v2213, %v2214
        %vm2216 = vcmask 1040384
        %v2217 = vsel %vm2216, %v2178, %v2215
        %2218 = vst [vmem:[%s477] sm:$0x3] %v2217
        %s2219 = sand.u32 %s218, 1
        %s2220 = scalar_lea.sflag [#allocation4], %s2219
        %s2221 = sand.u32 %s218, 1
        %s2222 = smul.addr %s2221, 64
        %s2223 = scalar_lea.vmem [#allocation13], %s2222
        %s2224 = sand.u32 %s246, 1
        %s2225 = scalar_lea.sflag [#allocation15], %s2224
        %s2226 = sand.u32 %s246, 1
        %s2227 = smul.addr %s2226, 2
        %s2228 = scalar_lea.vmem [#allocation14], %s2227
        // Predicated region
        $region69: #{double_conv.3} parent=43 // pred_check
          %p2229 = pneg %p228
        $region70: #{double_conv.3} parent=43 // pred_check_branch
          %2231 = sbr.rel (%p2229) target = $region72
        $region71: #{double_conv.3} parent=43 // pred_region
          %s2232 = smul.u32 8, %s38
          %s2234 = ssub.s32 1024, 1024
          %2235 = vsyncadd %s2220, %s2234
          %s2236 = smul.addr %s2232, 2
          %s2237 = smul.addr %s37, 32
          %s2238 = sadd.s32 %s2236, %s2237
          %s2239 = smul.addr %s2238, 64
          %s2240 = scalar_lea.hbm %s6, %s2239
          %s2241 = sshll.u32 %s2223, 4
          %s2242 = int_to_ptr.vmem [resolvable:$true] %s2241
          %2247 = dma.vmem_to_hbm [thread:$0]  %s2242, 1024, %s2240, %s2220, 64, 64, 4
        $region72: #{double_conv.3} parent=43 // pred_fallthru
          _
        // Predicated region
        $region73: #{double_conv.3} parent=43 // pred_check
          %p2248 = pneg %p256
        $region74: #{double_conv.3} parent=43 // pred_check_branch
          %2250 = sbr.rel (%p2248) target = $region76
        $region75: #{double_conv.3} parent=43 // pred_region
          %s2252 = ssub.s32 32, 32
          %2253 = vsyncadd %s2225, %s2252
          %s2254 = smul.addr %s37, 2
          %s2255 = sadd.s32 %s38, %s2254
          %s2256 = smul.addr %s2255, 32
          %s2257 = scalar_lea.hbm %s7, %s2256
          %s2259 = sshll.u32 %s2228, 4
          %s2260 = int_to_ptr.vmem [resolvable:$true] %s2259
          %2262 = dma.vmem_to_hbm [thread:$0]  %s2260, 32, %s2257, %s2225
        $region76: #{double_conv.3} parent=43 // pred_fallthru
          _
      $region44: #{double_conv.3} parent=5 // pred_fallthru
        _
      %p2263 = scmp.le.s32.totalorder 2, %s28
      // Predicated region
      $region77: #{double_conv.3} parent=5 // pred_check
        %p2264 = pneg %p2263
      $region78: #{double_conv.3} parent=5 // pred_check_branch
        %2266 = sbr.rel (%p2264) target = $region80
      $region79: #{double_conv.3} parent=5 // pred_region
        %s2267 = ssub.s32 %s28, 2
        // Predicated region
        $region81: #{double_conv.3} parent=79 // pred_check
          %p2268 = pneg %p234
        $region82: #{double_conv.3} parent=79 // pred_check_branch
          %2270 = sbr.rel (%p2268) target = $region84
        $region83: #{double_conv.3} parent=79 // pred_region
          %s2271 = sand.u32 %s219, 1
          %s2272 = scalar_lea.sflag [#allocation4], %s2271
          %s2273 = sand.u32 %s219, 1
          %s2274 = smul.addr %s2273, 64
          %s2275 = scalar_lea.vmem [#allocation13], %s2274
          %2276 = dma.done %s2272, 1024
        $region84: #{double_conv.3} parent=79 // pred_fallthru
          _
        // Predicated region
        $region85: #{double_conv.3} parent=79 // pred_check
          %p2277 = pneg %p262
        $region86: #{double_conv.3} parent=79 // pred_check_branch
          %2279 = sbr.rel (%p2277) target = $region88
        $region87: #{double_conv.3} parent=79 // pred_region
          %s2280 = sand.u32 %s247, 1
          %s2281 = scalar_lea.sflag [#allocation15], %s2280
          %s2282 = sand.u32 %s247, 1
          %s2283 = smul.addr %s2282, 2
          %s2284 = scalar_lea.vmem [#allocation14], %s2283
          %2285 = dma.done %s2281, 32
        $region88: #{double_conv.3} parent=79 // pred_fallthru
          _
      $region80: #{double_conv.3} parent=5 // pred_fallthru
        _
    $region6: #{double_conv.3} parent=1 // loop_footer
      %s32 = sadd.s32 1, %s28
    $region7: #{double_conv.3} parent=1 // loop_footer_branch
      %27 = sbr.rel target = $region3
    $region8: #{double_conv.3} parent=1 // loop_exit
      _
    %2286 = vsyncpa [#allocation3], 1
    %s2287 = scalar_lea.sflag [#allocation3], 1
    %2288 = vsyncpa %s2287, 1
    %2289 = vsyncpa [#allocation6], 1
    %s2290 = scalar_lea.sflag [#allocation6], 1
    %2291 = vsyncpa %s2290, 1
    %2292 = vsyncpa [#allocation9], 1
    %2293 = vsyncpa [#allocation12], 1
    %2294 = vsyncpa [#allocation4], 1
    %s2295 = scalar_lea.sflag [#allocation4], 1
    %2296 = vsyncpa %s2295, 1
    %2297 = vsyncpa [#allocation15], 1
    %s2298 = scalar_lea.sflag [#allocation15], 1
    %2299 = vsyncpa %s2298, 1

// kernel: double_conv.4
$region0: #{double_conv.4}
  #allocation0 [shape = 'u32[]', space=smem, size = 0x4, offset = 0x4, fixed_abs, tag = 'smem constant byte address 0x4 - core index']
  #allocation1 [shape = 'u32[144,128]{1,0:T(1,128)}', space=vmem, size = 0x12000, scoped, tag = 'internal scratch']
  %s0 = inlined_call_operand.hbm [shape: bf16[2,16,16,128], index: 0, kind: input, shape index: {}, may-alias: {0,1,2}]
  %s1 = inlined_call_operand.hbm [shape: bf16[2,16,16,128], index: 1, kind: input, shape index: {}, may-alias: {0,1,2}]
  %s2 = inlined_call_operand.hbm [shape: bf16[2,16,16,128], index: 2, kind: input, shape index: {}, may-alias: {0,1,2}]
  %s3 = inlined_call_operand.hbm [shape: bf16[3,384,128], index: 3, kind: input, shape index: {}]
  %s4 = inlined_call_operand.hbm [shape: f32[1,128], index: 4, kind: input, shape index: {}]
  %s5 = inlined_call_operand.hbm [shape: f32[1,128], index: 5, kind: input, shape index: {}]
  %s6 = inlined_call_operand.hbm [shape: bf16[2,16,16,128], index: 6, kind: output, shape index: {0}]
  %s7 = inlined_call_operand.hbm [shape: f32[2,2,2,128], index: 7, kind: output, shape index: {1}]
  %8 = xla_tuple %s6, %s7
  %s9 = sld [smem:[#allocation0]]
  $region89: #{double_conv.4} parent=0
    _
  %s11 = ssub.s32 1, %s9
  %s12 = scalar_select 0, %s11, %s9
  $region1: #{double_conv.4} parent=0
    #allocation2 [shape = 'u8[8192]{0}', space=vmem, size = 0x2000, scoped, tag = 'input window, operand 0']
    #allocation3 [shape = 's32[2]{0}', space=sflag, size = 0x8, scoped, tag = 'scoped memory for double_conv.4']
    #allocation4 [shape = 's32[2]{0}', space=sflag, size = 0x8, scoped, tag = 'scoped memory for double_conv.4']
    #allocation5 [shape = 'u8[65536]{0}', space=vmem, size = 0x10000, scoped, tag = 'input window, operand 1']
    #allocation6 [shape = 's32[2]{0}', space=sflag, size = 0x8, scoped, tag = 'scoped memory for double_conv.4']
    #allocation7 [shape = 'u8[8192]{0}', space=vmem, size = 0x2000, scoped, tag = 'input window, operand 2']
    #allocation8 [shape = 'u8[294912]{0}', space=vmem, size = 0x48000, scoped, tag = 'input window, operand 3, single buffered']
    #allocation9 [shape = 's32[1]{0}', space=sflag, size = 0x4, scoped, tag = 'scoped memory for double_conv.4']
    #allocation10 [shape = 'u8[512]{0}', space=vmem, size = 0x400, scoped, tag = 'input window, operand 4, single buffered']
    #allocation11 [shape = 'u8[512]{0}', space=vmem, size = 0x400, scoped, tag = 'input window, operand 5, single buffered']
    #allocation12 [shape = 's32[1]{0}', space=sflag, size = 0x4, scoped, tag = 'scoped memory for double_conv.4']
    #allocation13 [shape = 'u8[65536]{0}', space=vmem, size = 0x10000, scoped, tag = 'output window, operand 0']
    #allocation14 [shape = 'u8[2048]{0}', space=vmem, size = 0x800, scoped, tag = 'output window, operand 1']
    #allocation15 [shape = 's32[2]{0}', space=sflag, size = 0x8, scoped, tag = 'scoped memory for double_conv.4']
    %13 = vsyncpa [#allocation3], 0
    %s14 = scalar_lea.sflag [#allocation3], 1
    %15 = vsyncpa %s14, 0
    %16 = vsyncpa [#allocation6], 0
    %s17 = scalar_lea.sflag [#allocation6], 1
    %18 = vsyncpa %s17, 0
    %19 = vsyncpa [#allocation9], 0
    %20 = vsyncpa [#allocation12], 0
    %21 = vsyncpa [#allocation4], 0
    %s22 = scalar_lea.sflag [#allocation4], 1
    %23 = vsyncpa %s22, 0
    %24 = vsyncpa [#allocation15], 0
    %s25 = scalar_lea.sflag [#allocation15], 1
    %26 = vsyncpa %s25, 0
    loop: start=0, step=1, limit=6
    $region2: #{double_conv.4} parent=1 // loop_pre_header
      _
    $region3: #{double_conv.4} parent=1 // loop_header
      %s28 = sphi 0, %s32
      %p29 = scmp.ge.s32.totalorder %s28, 6
      %s35 = sphi 0, %s47
      %s36 = sphi 0, %s43
      %s37 = sphi 0, %s35
      %s38 = sphi 0, %s36
      %s39 = sphi 0, %s37
      %s40 = sphi 0, %s38
      %s60 = sphi 0, %s62
      %s63 = sphi 0, %s60
      %s64 = sphi 0, %s63
      %s80 = sphi 0, %s64
      %s88 = sphi 0, %s90
      %s91 = sphi 0, %s88
      %s92 = sphi 0, %s91
      %s108 = sphi 0, %s92
      %s124 = sphi 0, %s126
      %s127 = sphi 0, %s124
      %s128 = sphi 0, %s127
      %s144 = sphi 0, %s128
      %s148 = sphi 0, %s148
      %s150 = sphi 0, %s148
      %s151 = sphi 0, %s150
      %s165 = sphi 0, %s151
      %s169 = sphi 0, %s169
      %s171 = sphi 0, %s169
      %s172 = sphi 0, %s171
      %s186 = sphi 0, %s172
      %s190 = sphi 0, %s190
      %s192 = sphi 0, %s190
      %s193 = sphi 0, %s192
      %s207 = sphi 0, %s193
      %s215 = sphi 0, %s217
      %s218 = sphi 0, %s215
      %s219 = sphi 0, %s218
      %s235 = sphi 0, %s219
      %s243 = sphi 0, %s245
      %s246 = sphi 0, %s243
      %s247 = sphi 0, %s246
      %s263 = sphi 0, %s247
    $region4: #{double_conv.4} parent=1 // loop_header_branch
      %31 = sbr.rel (%p29) target = $region8
    $region5: #{double_conv.4} parent=1 // loop_body
      %s33 = ssub.s32 %s28, 1
      %s34 = ssub.s32 %s28, 2
      %s41 = sadd.s32 1, %s36
      %p42 = scmp.ge.s32.totalorder %s41, 2
      %s43 = scalar_select %p42, 0, %s41
      %s44 = sadd.s32 1, %s35
      %s45 = scalar_select %p42, %s44, %s35
      %p46 = scmp.ge.s32.totalorder %s45, 2
      %s47 = scalar_select %p46, 0, %s45
      %s48 = smul.u32 %s36, 8
      %s49 = ssub.s32 %s48, 1
      %p50 = scmp.gt.s32.totalorder %s49, 0
      %s51 = scalar_select %p50, %s49, 0
      %s52 = smul.u32 %s43, 8
      %s53 = ssub.s32 %s52, 1
      %p54 = scmp.gt.s32.totalorder %s53, 0
      %s55 = scalar_select %p54, %s53, 0
      %s56 = ssub.s32 %s35, %s47
      %s57 = ssub.s32 %s51, %s55
      %s58 = sor.u32 %s56, %s57
      %p59 = scmp.eq.s32.totalorder %s58, 0
      %s61 = sadd.s32 %s60, 1
      %s62 = scalar_select %p59, %s60, %s61
      %p65 = pneg %p59
      %p66 = scmp.eq.s32.totalorder %s28, 3
      %p67 = por %p65, %p66
      %p68 = scmp.ne.s32.totalorder %s60, %s63
      %p69 = scmp.eq.s32.totalorder %s28, 0
      %p70 = por %p68, %p69
      %p71 = scmp.ne.s32.totalorder %s60, %s63
      %p72 = scmp.eq.s32.totalorder %s33, 3
      %p73 = por %p71, %p72
      %p74 = scmp.ne.s32.totalorder %s63, %s64
      %p75 = scmp.eq.s32.totalorder %s33, 0
      %p76 = por %p74, %p75
      %p77 = scmp.ne.s32.totalorder %s63, %s64
      %p78 = scmp.eq.s32.totalorder %s34, 3
      %p79 = por %p77, %p78
      %p81 = scmp.ne.s32.totalorder %s64, %s80
      %p82 = scmp.eq.s32.totalorder %s34, 0
      %p83 = por %p81, %p82
      %s84 = ssub.s32 %s35, %s47
      %s85 = ssub.s32 %s36, %s43
      %s86 = sor.u32 %s84, %s85
      %p87 = scmp.eq.s32.totalorder %s86, 0
      %s89 = sadd.s32 %s88, 1
      %s90 = scalar_select %p87, %s88, %s89
      %p93 = pneg %p87
      %p94 = scmp.eq.s32.totalorder %s28, 3
      %p95 = por %p93, %p94
      %p96 = scmp.ne.s32.totalorder %s88, %s91
      %p97 = scmp.eq.s32.totalorder %s28, 0
      %p98 = por %p96, %p97
      %p99 = scmp.ne.s32.totalorder %s88, %s91
      %p100 = scmp.eq.s32.totalorder %s33, 3
      %p101 = por %p99, %p100
      %p102 = scmp.ne.s32.totalorder %s91, %s92
      %p103 = scmp.eq.s32.totalorder %s33, 0
      %p104 = por %p102, %p103
      %p105 = scmp.ne.s32.totalorder %s91, %s92
      %p106 = scmp.eq.s32.totalorder %s34, 3
      %p107 = por %p105, %p106
      %p109 = scmp.ne.s32.totalorder %s92, %s108
      %p110 = scmp.eq.s32.totalorder %s34, 0
      %p111 = por %p109, %p110
      %s112 = smul.u32 %s36, 8
      %s113 = sadd.s32 %s112, 8
      %p114 = scmp.lt.s32.totalorder %s113, 15
      %s115 = scalar_select %p114, %s113, 15
      %s116 = smul.u32 %s43, 8
      %s117 = sadd.s32 %s116, 8
      %p118 = scmp.lt.s32.totalorder %s117, 15
      %s119 = scalar_select %p118, %s117, 15
      %s120 = ssub.s32 %s35, %s47
      %s121 = ssub.s32 %s115, %s119
      %s122 = sor.u32 %s120, %s121
      %p123 = scmp.eq.s32.totalorder %s122, 0
      %s125 = sadd.s32 %s124, 1
      %s126 = scalar_select %p123, %s124, %s125
      %p129 = pneg %p123
      %p130 = scmp.eq.s32.totalorder %s28, 3
      %p131 = por %p129, %p130
      %p132 = scmp.ne.s32.totalorder %s124, %s127
      %p133 = scmp.eq.s32.totalorder %s28, 0
      %p134 = por %p132, %p133
      %p135 = scmp.ne.s32.totalorder %s124, %s127
      %p136 = scmp.eq.s32.totalorder %s33, 3
      %p137 = por %p135, %p136
      %p138 = scmp.ne.s32.totalorder %s127, %s128
      %p139 = scmp.eq.s32.totalorder %s33, 0
      %p140 = por %p138, %p139
      %p141 = scmp.ne.s32.totalorder %s127, %s128
      %p142 = scmp.eq.s32.totalorder %s34, 3
      %p143 = por %p141, %p142
      %p145 = scmp.ne.s32.totalorder %s128, %s144
      %p146 = scmp.eq.s32.totalorder %s34, 0
      %p147 = por %p145, %p146
      %s149 = sadd.s32 %s148, 1
      %p152 = scmp.eq.s32.totalorder %s28, 3
      %p153 = scmp.ne.s32.totalorder %s148, %s150
      %p154 = scmp.eq.s32.totalorder %s28, 0
      %p155 = por %p153, %p154
      %p156 = scmp.ne.s32.totalorder %s148, %s150
      %p157 = scmp.eq.s32.totalorder %s33, 3
      %p158 = por %p156, %p157
      %p159 = scmp.ne.s32.totalorder %s150, %s151
      %p160 = scmp.eq.s32.totalorder %s33, 0
      %p161 = por %p159, %p160
      %p162 = scmp.ne.s32.totalorder %s150, %s151
      %p163 = scmp.eq.s32.totalorder %s34, 3
      %p164 = por %p162, %p163
      %p166 = scmp.ne.s32.totalorder %s151, %s165
      %p167 = scmp.eq.s32.totalorder %s34, 0
      %p168 = por %p166, %p167
      %s170 = sadd.s32 %s169, 1
      %p173 = scmp.eq.s32.totalorder %s28, 3
      %p174 = scmp.ne.s32.totalorder %s169, %s171
      %p175 = scmp.eq.s32.totalorder %s28, 0
      %p176 = por %p174, %p175
      %p177 = scmp.ne.s32.totalorder %s169, %s171
      %p178 = scmp.eq.s32.totalorder %s33, 3
      %p179 = por %p177, %p178
      %p180 = scmp.ne.s32.totalorder %s171, %s172
      %p181 = scmp.eq.s32.totalorder %s33, 0
      %p182 = por %p180, %p181
      %p183 = scmp.ne.s32.totalorder %s171, %s172
      %p184 = scmp.eq.s32.totalorder %s34, 3
      %p185 = por %p183, %p184
      %p187 = scmp.ne.s32.totalorder %s172, %s186
      %p188 = scmp.eq.s32.totalorder %s34, 0
      %p189 = por %p187, %p188
      %s191 = sadd.s32 %s190, 1
      %p194 = scmp.eq.s32.totalorder %s28, 3
      %p195 = scmp.ne.s32.totalorder %s190, %s192
      %p196 = scmp.eq.s32.totalorder %s28, 0
      %p197 = por %p195, %p196
      %p198 = scmp.ne.s32.totalorder %s190, %s192
      %p199 = scmp.eq.s32.totalorder %s33, 3
      %p200 = por %p198, %p199
      %p201 = scmp.ne.s32.totalorder %s192, %s193
      %p202 = scmp.eq.s32.totalorder %s33, 0
      %p203 = por %p201, %p202
      %p204 = scmp.ne.s32.totalorder %s192, %s193
      %p205 = scmp.eq.s32.totalorder %s34, 3
      %p206 = por %p204, %p205
      %p208 = scmp.ne.s32.totalorder %s193, %s207
      %p209 = scmp.eq.s32.totalorder %s34, 0
      %p210 = por %p208, %p209
      %s211 = ssub.s32 %s35, %s47
      %s212 = ssub.s32 %s36, %s43
      %s213 = sor.u32 %s211, %s212
      %p214 = scmp.eq.s32.totalorder %s213, 0
      %s216 = sadd.s32 %s215, 1
      %s217 = scalar_select %p214, %s215, %s216
      %p220 = pneg %p214
      %p221 = scmp.eq.s32.totalorder %s28, 3
      %p222 = por %p220, %p221
      %p223 = scmp.ne.s32.totalorder %s215, %s218
      %p224 = scmp.eq.s32.totalorder %s28, 0
      %p225 = por %p223, %p224
      %p226 = scmp.ne.s32.totalorder %s215, %s218
      %p227 = scmp.eq.s32.totalorder %s33, 3
      %p228 = por %p226, %p227
      %p229 = scmp.ne.s32.totalorder %s218, %s219
      %p230 = scmp.eq.s32.totalorder %s33, 0
      %p231 = por %p229, %p230
      %p232 = scmp.ne.s32.totalorder %s218, %s219
      %p233 = scmp.eq.s32.totalorder %s34, 3
      %p234 = por %p232, %p233
      %p236 = scmp.ne.s32.totalorder %s219, %s235
      %p237 = scmp.eq.s32.totalorder %s34, 0
      %p238 = por %p236, %p237
      %s239 = ssub.s32 %s35, %s47
      %s240 = ssub.s32 %s36, %s43
      %s241 = sor.u32 %s239, %s240
      %p242 = scmp.eq.s32.totalorder %s241, 0
      %s244 = sadd.s32 %s243, 1
      %s245 = scalar_select %p242, %s243, %s244
      %p248 = pneg %p242
      %p249 = scmp.eq.s32.totalorder %s28, 3
      %p250 = por %p248, %p249
      %p251 = scmp.ne.s32.totalorder %s243, %s246
      %p252 = scmp.eq.s32.totalorder %s28, 0
      %p253 = por %p251, %p252
      %p254 = scmp.ne.s32.totalorder %s243, %s246
      %p255 = scmp.eq.s32.totalorder %s33, 3
      %p256 = por %p254, %p255
      %p257 = scmp.ne.s32.totalorder %s246, %s247
      %p258 = scmp.eq.s32.totalorder %s33, 0
      %p259 = por %p257, %p258
      %p260 = scmp.ne.s32.totalorder %s246, %s247
      %p261 = scmp.eq.s32.totalorder %s34, 3
      %p262 = por %p260, %p261
      %p264 = scmp.ne.s32.totalorder %s247, %s263
      %p265 = scmp.eq.s32.totalorder %s34, 0
      %p266 = por %p264, %p265
      %p267 = scmp.le.s32.totalorder 1, %s28
      %p268 = scmp.lt.s32.totalorder %s28, 5
      %p269 = pnand %p267, %p268
      %p270 = pneg %p269
      // Predicated region
      $region9: #{double_conv.4} parent=5 // pred_check
        _
      $region10: #{double_conv.4} parent=5 // pred_check_branch
        %272 = sbr.rel (%p269) target = $region12
      $region11: #{double_conv.4} parent=5 // pred_region
        %s273 = ssub.s32 %s28, 1
        // Predicated region
        $region13: #{double_conv.4} parent=11 // pred_check
          %p274 = pneg %p161
        $region14: #{double_conv.4} parent=11 // pred_check_branch
          %276 = sbr.rel (%p274) target = $region16
        $region15: #{double_conv.4} parent=11 // pred_region
          %s278 = ssub.s32 9216, 9216
          %279 = vsyncadd [#allocation9], %s278
          %s280 = sshll.u32 [#allocation8], 4
          %s281 = int_to_ptr.vmem [resolvable:$true] %s280
          %286 = dma.hbm_to_vmem [thread:$0]  %s3, 9216, %s281, [#allocation9], 64, 64, 4
        $region16: #{double_conv.4} parent=11 // pred_fallthru
          _
        // Predicated region
        $region17: #{double_conv.4} parent=11 // pred_check
          %p287 = pneg %p182
        $region18: #{double_conv.4} parent=11 // pred_check_branch
          %289 = sbr.rel (%p287) target = $region20
        $region19: #{double_conv.4} parent=11 // pred_region
          %s291 = ssub.s32 16, 16
          %292 = vsyncadd [#allocation9], %s291
          %s294 = sshll.u32 [#allocation10], 4
          %s295 = int_to_ptr.vmem [resolvable:$true] %s294
          %297 = dma.hbm_to_vmem [thread:$0]  %s4, 16, %s295, [#allocation9]
        $region20: #{double_conv.4} parent=11 // pred_fallthru
          _
        // Predicated region
        $region21: #{double_conv.4} parent=11 // pred_check
          %p298 = pneg %p203
        $region22: #{double_conv.4} parent=11 // pred_check_branch
          %300 = sbr.rel (%p298) target = $region24
        $region23: #{double_conv.4} parent=11 // pred_region
          %s302 = ssub.s32 16, 16
          %303 = vsyncadd [#allocation12], %s302
          %s305 = sshll.u32 [#allocation11], 4
          %s306 = int_to_ptr.vmem [resolvable:$true] %s305
          %308 = dma.hbm_to_vmem [thread:$0]  %s5, 16, %s306, [#allocation12]
        $region24: #{double_conv.4} parent=11 // pred_fallthru
          _
      $region12: #{double_conv.4} parent=5 // pred_fallthru
        _
      %p309 = scmp.lt.s32.totalorder %s28, 4
      // Predicated region
      $region25: #{double_conv.4} parent=5 // pred_check
        %p310 = pneg %p309
      $region26: #{double_conv.4} parent=5 // pred_check_branch
        %312 = sbr.rel (%p310) target = $region28
      $region27: #{double_conv.4} parent=5 // pred_region
        // Predicated region
        $region29: #{double_conv.4} parent=27 // pred_check
          %p313 = pneg %p70
        $region30: #{double_conv.4} parent=27 // pred_check_branch
          %315 = sbr.rel (%p313) target = $region32
        $region31: #{double_conv.4} parent=27 // pred_region
          %s316 = sand.u32 %s60, 1
          %s317 = scalar_lea.sflag [#allocation3], %s316
          %s318 = sand.u32 %s60, 1
          %s319 = smul.addr %s318, 8
          %s320 = scalar_lea.vmem [#allocation2], %s319
          %s321 = smul.u32 %s36, 8
          %s322 = ssub.s32 %s321, 1
          %p323 = scmp.gt.s32.totalorder %s322, 0
          %s324 = scalar_select %p323, %s322, 0
          %s326 = ssub.s32 128, 128
          %327 = vsyncadd %s317, %s326
          %s328 = smul.addr %s324, 2
          %s329 = smul.addr %s35, 32
          %s330 = sadd.s32 %s328, %s329
          %s331 = smul.addr %s330, 64
          %s332 = scalar_lea.hbm %s0, %s331
          %s333 = sshll.u32 %s320, 4
          %s334 = int_to_ptr.vmem [resolvable:$true] %s333
          %339 = dma.hbm_to_vmem [thread:$0]  %s332, 128, %s334, %s317, 64, 64, 4
        $region32: #{double_conv.4} parent=27 // pred_fallthru
          _
        // Predicated region
        $region33: #{double_conv.4} parent=27 // pred_check
          %p340 = pneg %p98
        $region34: #{double_conv.4} parent=27 // pred_check_branch
          %342 = sbr.rel (%p340) target = $region36
        $region35: #{double_conv.4} parent=27 // pred_region
          %s343 = sand.u32 %s28, 1
          %s344 = scalar_lea.sflag [#allocation6], %s343
          %s345 = sand.u32 %s88, 1
          %s346 = smul.addr %s345, 64
          %s347 = scalar_lea.vmem [#allocation5], %s346
          %s348 = smul.u32 8, %s36
          %s350 = ssub.s32 1024, 1024
          %351 = vsyncadd %s344, %s350
          %s352 = smul.addr %s348, 2
          %s353 = smul.addr %s35, 32
          %s354 = sadd.s32 %s352, %s353
          %s355 = smul.addr %s354, 64
          %s356 = scalar_lea.hbm %s1, %s355
          %s357 = sshll.u32 %s347, 4
          %s358 = int_to_ptr.vmem [resolvable:$true] %s357
          %363 = dma.hbm_to_vmem [thread:$0]  %s356, 1024, %s358, %s344, 64, 64, 4
        $region36: #{double_conv.4} parent=27 // pred_fallthru
          _
        // Predicated region
        $region37: #{double_conv.4} parent=27 // pred_check
          %p364 = pneg %p134
        $region38: #{double_conv.4} parent=27 // pred_check_branch
          %366 = sbr.rel (%p364) target = $region40
        $region39: #{double_conv.4} parent=27 // pred_region
          %s367 = sand.u32 %s28, 1
          %s368 = scalar_lea.sflag [#allocation6], %s367
          %s369 = sand.u32 %s124, 1
          %s370 = smul.addr %s369, 8
          %s371 = scalar_lea.vmem [#allocation7], %s370
          %s372 = smul.u32 %s36, 8
          %s373 = sadd.s32 %s372, 8
          %p374 = scmp.lt.s32.totalorder %s373, 15
          %s375 = scalar_select %p374, %s373, 15
          %s377 = ssub.s32 128, 128
          %378 = vsyncadd %s368, %s377
          %s379 = smul.addr %s375, 2
          %s380 = smul.addr %s35, 32
          %s381 = sadd.s32 %s379, %s380
          %s382 = smul.addr %s381, 64
          %s383 = scalar_lea.hbm %s2, %s382
          %s384 = sshll.u32 %s371, 4
          %s385 = int_to_ptr.vmem [resolvable:$true] %s384
          %390 = dma.hbm_to_vmem [thread:$0]  %s383, 128, %s385, %s368, 64, 64, 4
        $region40: #{double_conv.4} parent=27 // pred_fallthru
          _
      $region28: #{double_conv.4} parent=5 // pred_fallthru
        _
      %p391 = scmp.le.s32.totalorder 1, %s28
      %p392 = scmp.lt.s32.totalorder %s28, 5
      %p393 = pnand %p391, %p392
      %p394 = pneg %p393
      // Predicated region
      $region41: #{double_conv.4} parent=5 // pred_check
        _
      $region42: #{double_conv.4} parent=5 // pred_check_branch
        %396 = sbr.rel (%p393) target = $region44
      $region43: #{double_conv.4} parent=5 // pred_region
        %s397 = ssub.s32 %s28, 1
        %s398 = sand.u32 %s63, 1
        %s399 = scalar_lea.sflag [#allocation3], %s398
        %s400 = sand.u32 %s63, 1
        %s401 = smul.addr %s400, 8
        %s402 = scalar_lea.vmem [#allocation2], %s401
        // Predicated region
        $region45: #{double_conv.4} parent=43 // pred_check
          %p403 = pneg %p76
        $region46: #{double_conv.4} parent=43 // pred_check_branch
          %405 = sbr.rel (%p403) target = $region48
        $region47: #{double_conv.4} parent=43 // pred_region
          %406 = dma.done %s399, 128
        $region48: #{double_conv.4} parent=43 // pred_fallthru
          _
        %s407 = sand.u32 %s33, 1
        %s408 = scalar_lea.sflag [#allocation6], %s407
        %s409 = sand.u32 %s91, 1
        %s410 = smul.addr %s409, 64
        %s411 = scalar_lea.vmem [#allocation5], %s410
        // Predicated region
        $region49: #{double_conv.4} parent=43 // pred_check
          %p412 = pneg %p104
        $region50: #{double_conv.4} parent=43 // pred_check_branch
          %414 = sbr.rel (%p412) target = $region52
        $region51: #{double_conv.4} parent=43 // pred_region
          %415 = dma.done %s408, 1024
        $region52: #{double_conv.4} parent=43 // pred_fallthru
          _
        %s416 = sand.u32 %s33, 1
        %s417 = scalar_lea.sflag [#allocation6], %s416
        %s418 = sand.u32 %s127, 1
        %s419 = smul.addr %s418, 8
        %s420 = scalar_lea.vmem [#allocation7], %s419
        // Predicated region
        $region53: #{double_conv.4} parent=43 // pred_check
          %p421 = pneg %p140
        $region54: #{double_conv.4} parent=43 // pred_check_branch
          %423 = sbr.rel (%p421) target = $region56
        $region55: #{double_conv.4} parent=43 // pred_region
          %424 = dma.done %s417, 128
        $region56: #{double_conv.4} parent=43 // pred_fallthru
          _
        // Predicated region
        $region57: #{double_conv.4} parent=43 // pred_check
          %p425 = pneg %p161
        $region58: #{double_conv.4} parent=43 // pred_check_branch
          %427 = sbr.rel (%p425) target = $region60
        $region59: #{double_conv.4} parent=43 // pred_region
          %428 = dma.done [#allocation9], 9216
        $region60: #{double_conv.4} parent=43 // pred_fallthru
          _
        // Predicated region
        $region61: #{double_conv.4} parent=43 // pred_check
          %p429 = pneg %p182
        $region62: #{double_conv.4} parent=43 // pred_check_branch
          %431 = sbr.rel (%p429) target = $region64
        $region63: #{double_conv.4} parent=43 // pred_region
          %432 = dma.done [#allocation9], 16
        $region64: #{double_conv.4} parent=43 // pred_fallthru
          _
        // Predicated region
        $region65: #{double_conv.4} parent=43 // pred_check
          %p433 = pneg %p203
        $region66: #{double_conv.4} parent=43 // pred_check_branch
          %435 = sbr.rel (%p433) target = $region68
        $region67: #{double_conv.4} parent=43 // pred_region
          %436 = dma.done [#allocation12], 16
        $region68: #{double_conv.4} parent=43 // pred_fallthru
          _
        %s437 = sand.u32 %s63, 1
        %s438 = scalar_lea.sflag [#allocation3], %s437
        %s439 = sand.u32 %s63, 1
        %s440 = smul.addr %s439, 8
        %s441 = scalar_lea.vmem [#allocation2], %s440
        %p442 = pneg %p76
        %p443 = pneg %p73
        %s444 = sand.u32 %s33, 1
        %s445 = scalar_lea.sflag [#allocation6], %s444
        %s446 = sand.u32 %s91, 1
        %s447 = smul.addr %s446, 64
        %s448 = scalar_lea.vmem [#allocation5], %s447
        %p449 = pneg %p104
        %p450 = pneg %p101
        %s451 = sand.u32 %s33, 1
        %s452 = scalar_lea.sflag [#allocation6], %s451
        %s453 = sand.u32 %s127, 1
        %s454 = smul.addr %s453, 8
        %s455 = scalar_lea.vmem [#allocation7], %s454
        %p456 = pneg %p140
        %p457 = pneg %p137
        %p458 = pneg %p161
        %p459 = pneg %p158
        %p460 = pneg %p182
        %p461 = pneg %p179
        %p462 = pneg %p203
        %p463 = pneg %p200
        %p464 = pneg %p231
        %p465 = pneg %p228
        %s466 = sand.u32 %s218, 1
        %s467 = scalar_lea.sflag [#allocation4], %s466
        %s468 = sand.u32 %s218, 1
        %s469 = smul.addr %s468, 64
        %s470 = scalar_lea.vmem [#allocation13], %s469
        %p471 = pneg %p259
        %p472 = pneg %p256
        %s473 = sand.u32 %s246, 1
        %s474 = scalar_lea.sflag [#allocation15], %s473
        %s475 = sand.u32 %s246, 1
        %s476 = smul.addr %s475, 2
        %s477 = scalar_lea.vmem [#allocation14], %s476
        %s478 = smul.u32 %s38, 8
        %s479 = ssub.s32 %s478, 1
        %p480 = scmp.gt.s32.totalorder %s479, 0
        %s481 = scalar_select %p480, %s479, 0
        %s482 = smul.u32 8, %s38
        %s483 = smul.u32 %s38, 8
        %s484 = sadd.s32 %s483, 8
        %p485 = scmp.lt.s32.totalorder %s484, 15
        %s486 = scalar_select %p485, %s484, 15
        %s487 = smul.u32 8, %s38
        %v489 = vld [vmem:[#allocation10] sm:$0x1]
        %v490 = vld [vmem:[#allocation11] sm:$0x1]
        %v491 = vld [vmem:[%s411] sm:$0xf]
        %v492 = vld [vmem:[%s411 + $0x4] sm:$0xf]
        %v493 = vld [vmem:[%s411 + $0x8] sm:$0xf]
        %v494 = vld [vmem:[%s411 + $0xc] sm:$0xf]
        %v495 = vld [vmem:[%s411 + $0x10] sm:$0xf]
        %v496 = vld [vmem:[%s411 + $0x14] sm:$0xf]
        %v497 = vld [vmem:[%s411 + $0x18] sm:$0xf]
        %v498 = vld [vmem:[%s411 + $0x1c] sm:$0xf]
        %v499 = vld [vmem:[%s411 + $0x20] sm:$0xf]
        %v500 = vld [vmem:[%s411 + $0x24] sm:$0xf]
        %v501 = vld [vmem:[%s411 + $0x28] sm:$0xf]
        %v502 = vld [vmem:[%s411 + $0x2c] sm:$0xf]
        %v503 = vld [vmem:[%s411 + $0x30] sm:$0xf]
        %v504 = vld [vmem:[%s411 + $0x34] sm:$0xf]
        %v505 = vld [vmem:[%s411 + $0x38] sm:$0xf]
        %v506 = vld [vmem:[%s411 + $0x3c] sm:$0xf]
        %v507 = vunpack.c.l.bf16 %v491
        %v508 = vunpack.c.l.bf16 %v492
        %v509 = vunpack.c.l.bf16 %v493
        %v510 = vunpack.c.l.bf16 %v494
        %v511 = vunpack.c.l.bf16 %v495
        %v512 = vunpack.c.l.bf16 %v496
        %v513 = vunpack.c.l.bf16 %v497
        %v514 = vunpack.c.l.bf16 %v498
        %v515 = vunpack.c.l.bf16 %v499
        %v516 = vunpack.c.l.bf16 %v500
        %v517 = vunpack.c.l.bf16 %v501
        %v518 = vunpack.c.l.bf16 %v502
        %v519 = vunpack.c.l.bf16 %v503
        %v520 = vunpack.c.l.bf16 %v504
        %v521 = vunpack.c.l.bf16 %v505
        %v522 = vunpack.c.l.bf16 %v506
        %v524 = vlaneseq
        %v525 = vshrl.u32 %v524, 7
        %v526 = vsub.s32 0, %v525
        %v527 = vrot.slane %v489, %v526
        %v529 = vmul.f32 %v507, %v527
        %v530 = vmul.f32 %v508, %v527
        %v531 = vmul.f32 %v509, %v527
        %v532 = vmul.f32 %v510, %v527
        %v533 = vmul.f32 %v511, %v527
        %v534 = vmul.f32 %v512, %v527
        %v535 = vmul.f32 %v513, %v527
        %v536 = vmul.f32 %v514, %v527
        %v537 = vmul.f32 %v515, %v527
        %v538 = vmul.f32 %v516, %v527
        %v539 = vmul.f32 %v517, %v527
        %v540 = vmul.f32 %v518, %v527
        %v541 = vmul.f32 %v519, %v527
        %v542 = vmul.f32 %v520, %v527
        %v543 = vmul.f32 %v521, %v527
        %v544 = vmul.f32 %v522, %v527
        %v546 = vlaneseq
        %v547 = vshrl.u32 %v546, 7
        %v548 = vsub.s32 0, %v547
        %v549 = vrot.slane %v490, %v548
        %v551 = vadd.f32 %v529, %v549
        %v552 = vadd.f32 %v530, %v549
        %v553 = vadd.f32 %v531, %v549
        %v554 = vadd.f32 %v532, %v549
        %v555 = vadd.f32 %v533, %v549
        %v556 = vadd.f32 %v534, %v549
        %v557 = vadd.f32 %v535, %v549
        %v558 = vadd.f32 %v536, %v549
        %v559 = vadd.f32 %v537, %v549
        %v560 = vadd.f32 %v538, %v549
        %v561 = vadd.f32 %v539, %v549
        %v562 = vadd.f32 %v540, %v549
        %v563 = vadd.f32 %v541, %v549
        %v564 = vadd.f32 %v542, %v549
        %v565 = vadd.f32 %v543, %v549
        %v566 = vadd.f32 %v544, %v549
        %v567 = vmax.f32 %v551, 0.0
        %v568 = vmax.f32 %v552, 0.0
        %v569 = vmax.f32 %v553, 0.0
        %v570 = vmax.f32 %v554, 0.0
        %v571 = vmax.f32 %v555, 0.0
        %v572 = vmax.f32 %v556, 0.0
        %v573 = vmax.f32 %v557, 0.0
        %v574 = vmax.f32 %v558, 0.0
        %v575 = vmax.f32 %v559, 0.0
        %v576 = vmax.f32 %v560, 0.0
        %v577 = vmax.f32 %v561, 0.0
        %v578 = vmax.f32 %v562, 0.0
        %v579 = vmax.f32 %v563, 0.0
        %v580 = vmax.f32 %v564, 0.0
        %v581 = vmax.f32 %v565, 0.0
        %v582 = vmax.f32 %v566, 0.0
        %v583 = vpack.c.bf16 %v568, %v567
        %v584 = vpack.c.bf16 %v570, %v569
        %v585 = vpack.c.bf16 %v572, %v571
        %v586 = vpack.c.bf16 %v574, %v573
        %v587 = vpack.c.bf16 %v576, %v575
        %v588 = vpack.c.bf16 %v578, %v577
        %v589 = vpack.c.bf16 %v580, %v579
        %v590 = vpack.c.bf16 %v582, %v581
        %v591 = vld [vmem:[%s402] sm:$0xf]
        %v592 = vld [vmem:[%s402 + $0x4] sm:$0xf]
        %v593 = vunpack.c.l.bf16 %v591
        %v594 = vunpack.c.l.bf16 %v592
        %v595 = vmul.f32 %v593, %v527
        %v596 = vmul.f32 %v594, %v527
        %v597 = vadd.f32 %v595, %v549
        %v598 = vadd.f32 %v596, %v549
        %v599 = vmax.f32 %v597, 0.0
        %v600 = vmax.f32 %v598, 0.0
        %p601 = scmp.ne.s32.totalorder %s38, 0
        %s602 = scalar_select %p601, 1, 0
        %s603 = scvt.s32.f32 %s602
        %v604 = vstv %s603
        %v605 = vmul.f32 %v599, %v604
        %v606 = vmul.f32 %v600, %v604
        %v607 = vpack.c.bf16 %v606, %v605
        %v608 = vld [vmem:[%s420] sm:$0xf]
        %v609 = vld [vmem:[%s420 + $0x4] sm:$0xf]
        %v610 = vunpack.c.l.bf16 %v608
        %v611 = vunpack.c.l.bf16 %v609
        %v612 = vmul.f32 %v610, %v527
        %v613 = vmul.f32 %v611, %v527
        %v614 = vadd.f32 %v612, %v549
        %v615 = vadd.f32 %v613, %v549
        %v616 = vmax.f32 %v614, 0.0
        %v617 = vmax.f32 %v615, 0.0
        %p618 = scmp.ne.s32.totalorder %s38, 1
        %s619 = scalar_select %p618, 1, 0
        %s620 = scvt.s32.f32 %s619
        %v621 = vstv %s620
        %v622 = vmul.f32 %v616, %v621
        %v623 = vmul.f32 %v617, %v621
        %v624 = vpack.c.bf16 %v623, %v622
        %v626 = vshrl.u32 %v607, 16
        %v628 = vrot.slane %v626, 7
        %v629 = vshll.u32 %v607, 16
        %v631 = vor.u32 %v628, %v629
        %v633 = vshrl.u32 %v583, 16
        %v635 = vrot.slane %v633, 7
        %v636 = vshll.u32 %v583, 16
        %v638 = vor.u32 %v635, %v636
        %v640 = vshrl.u32 %v584, 16
        %v642 = vrot.slane %v640, 7
        %v643 = vshll.u32 %v584, 16
        %v645 = vor.u32 %v642, %v643
        %v647 = vshrl.u32 %v585, 16
        %v649 = vrot.slane %v647, 7
        %v650 = vshll.u32 %v585, 16
        %v652 = vor.u32 %v649, %v650
        %v654 = vshrl.u32 %v586, 16
        %v656 = vrot.slane %v654, 7
        %v657 = vshll.u32 %v586, 16
        %v659 = vor.u32 %v656, %v657
        %v661 = vshrl.u32 %v587, 16
        %v663 = vrot.slane %v661, 7
        %v664 = vshll.u32 %v587, 16
        %v666 = vor.u32 %v663, %v664
        %v668 = vshrl.u32 %v588, 16
        %v670 = vrot.slane %v668, 7
        %v671 = vshll.u32 %v588, 16
        %v673 = vor.u32 %v670, %v671
        %v675 = vshrl.u32 %v589, 16
        %v677 = vrot.slane %v675, 7
        %v678 = vshll.u32 %v589, 16
        %v680 = vor.u32 %v677, %v678
        %v682 = vshrl.u32 %v590, 16
        %v684 = vrot.slane %v682, 7
        %v685 = vshll.u32 %v590, 16
        %v687 = vor.u32 %v684, %v685
        %v689 = vshrl.u32 %v624, 16
        %v691 = vrot.slane %v689, 7
        %v692 = vshll.u32 %v624, 16
        %v694 = vor.u32 %v691, %v692
        %vm715 = vcmask 1040384
        %vm716 = vsmask.f32 256
        %vm717 = vmand %vm715, %vm716
        %v718 = vsel %vm717, 0, %v631
        %v719 = vsel %vm717, 0, %v638
        %v720 = vsel %vm717, 0, %v645
        %v721 = vsel %vm717, 0, %v652
        %v722 = vsel %vm717, 0, %v659
        %v723 = vsel %vm717, 0, %v666
        %v724 = vsel %vm717, 0, %v673
        %v725 = vsel %vm717, 0, %v680
        %v726 = vsel %vm717, 0, %v687
        %v727 = vsel %vm717, 0, %v694
        %v728 = vsel %vm717, %v628, 0
        %v729 = vsel %vm717, %v635, 0
        %v730 = vsel %vm717, %v642, 0
        %v731 = vsel %vm717, %v649, 0
        %v732 = vsel %vm717, %v656, 0
        %v733 = vsel %vm717, %v663, 0
        %v734 = vsel %vm717, %v670, 0
        %v735 = vsel %vm717, %v677, 0
        %v736 = vsel %vm717, %v684, 0
        %v737 = vsel %vm717, %v691, 0
        %vm738 = vsmask.f32 7424
        %v740 = vshrl.u32 %v718, 16
        %v742 = vshll.u32 %v718, 16
        %v744 = vrot.slane %v742, 1
        %v745 = vor.u32 %v740, %v744
        %v747 = vshll.u32 %v728, 16
        %v749 = vrot.slane %v747, 1
        %v750 = vsel %vm738, %v745, %v749
        %v752 = vshrl.u32 %v719, 16
        %v754 = vshll.u32 %v719, 16
        %v756 = vrot.slane %v754, 1
        %v757 = vor.u32 %v752, %v756
        %v759 = vshll.u32 %v729, 16
        %v761 = vrot.slane %v759, 1
        %v762 = vsel %vm738, %v757, %v761
        %v764 = vshrl.u32 %v720, 16
        %v766 = vshll.u32 %v720, 16
        %v768 = vrot.slane %v766, 1
        %v769 = vor.u32 %v764, %v768
        %v771 = vshll.u32 %v730, 16
        %v773 = vrot.slane %v771, 1
        %v774 = vsel %vm738, %v769, %v773
        %v776 = vshrl.u32 %v721, 16
        %v778 = vshll.u32 %v721, 16
        %v780 = vrot.slane %v778, 1
        %v781 = vor.u32 %v776, %v780
        %v783 = vshll.u32 %v731, 16
        %v785 = vrot.slane %v783, 1
        %v786 = vsel %vm738, %v781, %v785
        %v788 = vshrl.u32 %v722, 16
        %v790 = vshll.u32 %v722, 16
        %v792 = vrot.slane %v790, 1
        %v793 = vor.u32 %v788, %v792
        %v795 = vshll.u32 %v732, 16
        %v797 = vrot.slane %v795, 1
        %v798 = vsel %vm738, %v793, %v797
        %v800 = vshrl.u32 %v723, 16
        %v802 = vshll.u32 %v723, 16
        %v804 = vrot.slane %v802, 1
        %v805 = vor.u32 %v800, %v804
        %v807 = vshll.u32 %v733, 16
        %v809 = vrot.slane %v807, 1
        %v810 = vsel %vm738, %v805, %v809
        %v812 = vshrl.u32 %v724, 16
        %v814 = vshll.u32 %v724, 16
        %v816 = vrot.slane %v814, 1
        %v817 = vor.u32 %v812, %v816
        %v819 = vshll.u32 %v734, 16
        %v821 = vrot.slane %v819, 1
        %v822 = vsel %vm738, %v817, %v821
        %v824 = vshrl.u32 %v725, 16
        %v826 = vshll.u32 %v725, 16
        %v828 = vrot.slane %v826, 1
        %v829 = vor.u32 %v824, %v828
        %v831 = vshll.u32 %v735, 16
        %v833 = vrot.slane %v831, 1
        %v834 = vsel %vm738, %v829, %v833
        %vm859 = vcmask 1046528
        %v860 = vrot.slane %v718, 1
        %v861 = vrot.slane %v728, 1
        %v862 = vsel %vm859, %v860, %v861
        %v863 = vrot.slane %v719, 1
        %v864 = vrot.slane %v729, 1
        %v865 = vsel %vm859, %v863, %v864
        %v866 = vrot.slane %v720, 1
        %v867 = vrot.slane %v730, 1
        %v868 = vsel %vm859, %v866, %v867
        %v869 = vrot.slane %v721, 1
        %v870 = vrot.slane %v731, 1
        %v871 = vsel %vm859, %v869, %v870
        %v872 = vrot.slane %v722, 1
        %v873 = vrot.slane %v732, 1
        %v874 = vsel %vm859, %v872, %v873
        %v875 = vrot.slane %v723, 1
        %v876 = vrot.slane %v733, 1
        %v877 = vsel %vm859, %v875, %v876
        %v878 = vrot.slane %v724, 1
        %v879 = vrot.slane %v734, 1
        %v880 = vsel %vm859, %v878, %v879
        %v881 = vrot.slane %v725, 1
        %v882 = vrot.slane %v735, 1
        %v883 = vsel %vm859, %v881, %v882
        %v892 = vld [vmem:[#allocation8] sm:$0xf]
        %v893 = vld [vmem:[#allocation8 + $0x4] sm:$0xf]
        %v894 = vld [vmem:[#allocation8 + $0x8] sm:$0xf]
        %v895 = vld [vmem:[#allocation8 + $0xc] sm:$0xf]
        %v896 = vld [vmem:[#allocation8 + $0x10] sm:$0xf]
        %v897 = vld [vmem:[#allocation8 + $0x14] sm:$0xf]
        %v898 = vld [vmem:[#allocation8 + $0x18] sm:$0xf]
        %v899 = vld [vmem:[#allocation8 + $0x1c] sm:$0xf]
        %v900 = vld [vmem:[#allocation8 + $0x20] sm:$0xf]
        %v901 = vld [vmem:[#allocation8 + $0x24] sm:$0xf]
        %v902 = vld [vmem:[#allocation8 + $0x28] sm:$0xf]
        %v903 = vld [vmem:[#allocation8 + $0x2c] sm:$0xf]
        %v904 = vld [vmem:[#allocation8 + $0x30] sm:$0xf]
        %v905 = vld [vmem:[#allocation8 + $0x34] sm:$0xf]
        %v906 = vld [vmem:[#allocation8 + $0x38] sm:$0xf]
        %v907 = vld [vmem:[#allocation8 + $0x3c] sm:$0xf]
        %v908 = vld [vmem:[#allocation8 + $0x40] sm:$0xf]
        %v909 = vld [vmem:[#allocation8 + $0x44] sm:$0xf]
        %v910 = vld [vmem:[#allocation8 + $0x48] sm:$0xf]
        %v911 = vld [vmem:[#allocation8 + $0x4c] sm:$0xf]
        %v912 = vld [vmem:[#allocation8 + $0x50] sm:$0xf]
        %v913 = vld [vmem:[#allocation8 + $0x54] sm:$0xf]
        %v914 = vld [vmem:[#allocation8 + $0x58] sm:$0xf]
        %v915 = vld [vmem:[#allocation8 + $0x5c] sm:$0xf]
        %v916 = vld [vmem:[#allocation8 + $0x60] sm:$0xf]
        %v917 = vld [vmem:[#allocation8 + $0x64] sm:$0xf]
        %v918 = vld [vmem:[#allocation8 + $0x68] sm:$0xf]
        %v919 = vld [vmem:[#allocation8 + $0x6c] sm:$0xf]
        %v920 = vld [vmem:[#allocation8 + $0x70] sm:$0xf]
        %v921 = vld [vmem:[#allocation8 + $0x74] sm:$0xf]
        %v922 = vld [vmem:[#allocation8 + $0x78] sm:$0xf]
        %v923 = vld [vmem:[#allocation8 + $0x7c] sm:$0xf]
        %v924 = vld [vmem:[#allocation8 + $0x80] sm:$0xf]
        %v925 = vld [vmem:[#allocation8 + $0x84] sm:$0xf]
        %v926 = vld [vmem:[#allocation8 + $0x88] sm:$0xf]
        %v927 = vld [vmem:[#allocation8 + $0x8c] sm:$0xf]
        %v928 = vld [vmem:[#allocation8 + $0x90] sm:$0xf]
        %v929 = vld [vmem:[#allocation8 + $0x94] sm:$0xf]
        %v930 = vld [vmem:[#allocation8 + $0x98] sm:$0xf]
        %v931 = vld [vmem:[#allocation8 + $0x9c] sm:$0xf]
        %v932 = vld [vmem:[#allocation8 + $0xa0] sm:$0xf]
        %v933 = vld [vmem:[#allocation8 + $0xa4] sm:$0xf]
        %v934 = vld [vmem:[#allocation8 + $0xa8] sm:$0xf]
        %v935 = vld [vmem:[#allocation8 + $0xac] sm:$0xf]
        %v936 = vld [vmem:[#allocation8 + $0xb0] sm:$0xf]
        %v937 = vld [vmem:[#allocation8 + $0xb4] sm:$0xf]
        %v938 = vld [vmem:[#allocation8 + $0xb8] sm:$0xf]
        %v939 = vld [vmem:[#allocation8 + $0xbc] sm:$0xf]
        %v941 = vshrl.u32 %v726, 16
        %v943 = vshll.u32 %v726, 16
        %v945 = vrot.slane %v943, 1
        %v946 = vor.u32 %v941, %v945
        %v948 = vshll.u32 %v736, 16
        %v950 = vrot.slane %v948, 1
        %v951 = vsel %vm738, %v946, %v950
        %v955 = vrot.slane %v726, 1
        %v956 = vrot.slane %v736, 1
        %v957 = vsel %vm859, %v955, %v956
        %s959 = scalar_lea.vmem [#allocation8], 192
        %v960 = vld [vmem:[%s959] sm:$0xf]
        %v961 = vld [vmem:[%s959 + $0x4] sm:$0xf]
        %v962 = vld [vmem:[%s959 + $0x8] sm:$0xf]
        %v963 = vld [vmem:[%s959 + $0xc] sm:$0xf]
        %v964 = vld [vmem:[%s959 + $0x10] sm:$0xf]
        %v965 = vld [vmem:[%s959 + $0x14] sm:$0xf]
        %v966 = vld [vmem:[%s959 + $0x18] sm:$0xf]
        %v967 = vld [vmem:[%s959 + $0x1c] sm:$0xf]
        %v968 = vld [vmem:[%s959 + $0x20] sm:$0xf]
        %v969 = vld [vmem:[%s959 + $0x24] sm:$0xf]
        %v970 = vld [vmem:[%s959 + $0x28] sm:$0xf]
        %v971 = vld [vmem:[%s959 + $0x2c] sm:$0xf]
        %v972 = vld [vmem:[%s959 + $0x30] sm:$0xf]
        %v973 = vld [vmem:[%s959 + $0x34] sm:$0xf]
        %v974 = vld [vmem:[%s959 + $0x38] sm:$0xf]
        %v975 = vld [vmem:[%s959 + $0x3c] sm:$0xf]
        %v976 = vld [vmem:[%s959 + $0x40] sm:$0xf]
        %v977 = vld [vmem:[%s959 + $0x44] sm:$0xf]
        %v978 = vld [vmem:[%s959 + $0x48] sm:$0xf]
        %v979 = vld [vmem:[%s959 + $0x4c] sm:$0xf]
        %v980 = vld [vmem:[%s959 + $0x50] sm:$0xf]
        %v981 = vld [vmem:[%s959 + $0x54] sm:$0xf]
        %v982 = vld [vmem:[%s959 + $0x58] sm:$0xf]
        %v983 = vld [vmem:[%s959 + $0x5c] sm:$0xf]
        %v984 = vld [vmem:[%s959 + $0x60] sm:$0xf]
        %v985 = vld [vmem:[%s959 + $0x64] sm:$0xf]
        %v986 = vld [vmem:[%s959 + $0x68] sm:$0xf]
        %v987 = vld [vmem:[%s959 + $0x6c] sm:$0xf]
        %v988 = vld [vmem:[%s959 + $0x70] sm:$0xf]
        %v989 = vld [vmem:[%s959 + $0x74] sm:$0xf]
        %v990 = vld [vmem:[%s959 + $0x78] sm:$0xf]
        %v991 = vld [vmem:[%s959 + $0x7c] sm:$0xf]
        %v992 = vld [vmem:[%s959 + $0x80] sm:$0xf]
        %v993 = vld [vmem:[%s959 + $0x84] sm:$0xf]
        %v994 = vld [vmem:[%s959 + $0x88] sm:$0xf]
        %v995 = vld [vmem:[%s959 + $0x8c] sm:$0xf]
        %v996 = vld [vmem:[%s959 + $0x90] sm:$0xf]
        %v997 = vld [vmem:[%s959 + $0x94] sm:$0xf]
        %v998 = vld [vmem:[%s959 + $0x98] sm:$0xf]
        %v999 = vld [vmem:[%s959 + $0x9c] sm:$0xf]
        %v1000 = vld [vmem:[%s959 + $0xa0] sm:$0xf]
        %v1001 = vld [vmem:[%s959 + $0xa4] sm:$0xf]
        %v1002 = vld [vmem:[%s959 + $0xa8] sm:$0xf]
        %v1003 = vld [vmem:[%s959 + $0xac] sm:$0xf]
        %v1004 = vld [vmem:[%s959 + $0xb0] sm:$0xf]
        %v1005 = vld [vmem:[%s959 + $0xb4] sm:$0xf]
        %v1006 = vld [vmem:[%s959 + $0xb8] sm:$0xf]
        %v1007 = vld [vmem:[%s959 + $0xbc] sm:$0xf]
        %v1056 = vunpack.c.l.b16 %v960
        %v1057 = vunpack.c.l.b16 %v961
        %v1058 = vunpack.c.l.b16 %v962
        %v1059 = vunpack.c.l.b16 %v963
        %v1060 = vunpack.c.l.b16 %v964
        %v1061 = vunpack.c.l.b16 %v965
        %v1062 = vunpack.c.l.b16 %v966
        %v1063 = vunpack.c.l.b16 %v967
        %v1064 = vunpack.c.l.b16 %v968
        %v1065 = vunpack.c.l.b16 %v969
        %v1066 = vunpack.c.l.b16 %v970
        %v1067 = vunpack.c.l.b16 %v971
        %v1068 = vunpack.c.l.b16 %v972
        %v1069 = vunpack.c.l.b16 %v973
        %v1070 = vunpack.c.l.b16 %v974
        %v1071 = vunpack.c.l.b16 %v975
        %v1072 = vunpack.c.l.b16 %v976
        %v1073 = vunpack.c.l.b16 %v977
        %v1074 = vunpack.c.l.b16 %v978
        %v1075 = vunpack.c.l.b16 %v979
        %v1076 = vunpack.c.l.b16 %v980
        %v1077 = vunpack.c.l.b16 %v981
        %v1078 = vunpack.c.l.b16 %v982
        %v1079 = vunpack.c.l.b16 %v983
        %v1080 = vunpack.c.l.b16 %v984
        %v1081 = vunpack.c.l.b16 %v985
        %v1082 = vunpack.c.l.b16 %v986
        %v1083 = vunpack.c.l.b16 %v987
        %v1084 = vunpack.c.l.b16 %v988
        %v1085 = vunpack.c.l.b16 %v989
        %v1086 = vunpack.c.l.b16 %v990
        %v1087 = vunpack.c.l.b16 %v991
        %v1088 = vunpack.c.l.b16 %v992
        %v1089 = vunpack.c.l.b16 %v993
        %v1090 = vunpack.c.l.b16 %v994
        %v1091 = vunpack.c.l.b16 %v995
        %v1092 = vunpack.c.l.b16 %v996
        %v1093 = vunpack.c.l.b16 %v997
        %v1094 = vunpack.c.l.b16 %v998
        %v1095 = vunpack.c.l.b16 %v999
        %v1096 = vunpack.c.l.b16 %v1000
        %v1097 = vunpack.c.l.b16 %v1001
        %v1098 = vunpack.c.l.b16 %v1002
        %v1099 = vunpack.c.l.b16 %v1003
        %v1100 = vunpack.c.l.b16 %v1004
        %v1101 = vunpack.c.l.b16 %v1005
        %v1102 = vunpack.c.l.b16 %v1006
        %v1103 = vunpack.c.l.b16 %v1007
        %v1104 = vpack.c.b16 %v1057, %v1056
        %v1105 = vpack.c.b16 %v1059, %v1058
        %v1106 = vpack.c.b16 %v1061, %v1060
        %v1107 = vpack.c.b16 %v1063, %v1062
        %v1108 = vpack.c.b16 %v1065, %v1064
        %v1109 = vpack.c.b16 %v1067, %v1066
        %v1110 = vpack.c.b16 %v1069, %v1068
        %v1111 = vpack.c.b16 %v1071, %v1070
        %v1112 = vpack.c.b16 %v1073, %v1072
        %v1113 = vpack.c.b16 %v1075, %v1074
        %v1114 = vpack.c.b16 %v1077, %v1076
        %v1115 = vpack.c.b16 %v1079, %v1078
        %v1116 = vpack.c.b16 %v1081, %v1080
        %v1117 = vpack.c.b16 %v1083, %v1082
        %v1118 = vpack.c.b16 %v1085, %v1084
        %v1119 = vpack.c.b16 %v1087, %v1086
        %v1120 = vpack.c.b16 %v1089, %v1088
        %v1121 = vpack.c.b16 %v1091, %v1090
        %v1122 = vpack.c.b16 %v1093, %v1092
        %v1123 = vpack.c.b16 %v1095, %v1094
        %v1124 = vpack.c.b16 %v1097, %v1096
        %v1125 = vpack.c.b16 %v1099, %v1098
        %v1126 = vpack.c.b16 %v1101, %v1100
        %v1127 = vpack.c.b16 %v1103, %v1102
        %1152 = vmatprep.subr.bf16.mxu0 0
        %1153 = vmatpush1.bf16.msra.mxu0 %v1104
        %1154 = vmatprep.subr.bf16.mxu0 0
        %1155 = vmatpush1.bf16.msra.mxu0 %v1105
        %1156 = vmatprep.subr.bf16.mxu0 0
        %1157 = vmatpush1.bf16.msra.mxu0 %v1106
        %1158 = vmatprep.subr.bf16.mxu0 0
        %1159 = vmatpush1.bf16.msra.mxu0 %v1107
        %1160 = vmatprep.subr.bf16.mxu0 0
        %1161 = vmatpush1.bf16.msra.mxu0 %v1108
        %1162 = vmatprep.subr.bf16.mxu0 0
        %1163 = vmatpush1.bf16.msra.mxu0 %v1109
        %1164 = vmatprep.subr.bf16.mxu0 0
        %1165 = vmatpush1.bf16.msra.mxu0 %v1110
        %1166 = vmatprep.subr.bf16.mxu0 0
        %1167 = vmatpush1.bf16.msra.mxu0 %v1111
        %1168 = vmatprep.subr.bf16.mxu0 0
        %1169 = vmatpush1.bf16.msra.mxu0 %v1112
        %1170 = vmatprep.subr.bf16.mxu0 0
        %1171 = vmatpush1.bf16.msra.mxu0 %v1113
        %1172 = vmatprep.subr.bf16.mxu0 0
        %1173 = vmatpush1.bf16.msra.mxu0 %v1114
        %1174 = vmatprep.subr.bf16.mxu0 0
        %1175 = vmatpush1.bf16.msra.mxu0 %v1115
        %1176 = vmatprep.subr.bf16.mxu0 0
        %1177 = vmatpush1.bf16.msra.mxu0 %v1116
        %1178 = vmatprep.subr.bf16.mxu0 0
        %1179 = vmatpush1.bf16.msra.mxu0 %v1117
        %1180 = vmatprep.subr.bf16.mxu0 0
        %1181 = vmatpush1.bf16.msra.mxu0 %v1118
        %1182 = vmatprep.subr.bf16.mxu0 0
        %1183 = vmatpush1.bf16.msra.mxu0 %v1119
        %1184 = vmatprep.mubr.bf16.mxu0 %v762
        %1185 = vmatmul.mubr.bf16.gmra.mrb[0].mxu0 %v719
        %v1186 = vpop.f32.mrb[0].mxu0
        %v1187 = vadd.f32 0.0, %v1186
        %v1188 = vpop.f32.mrb[0].mxu0
        %v1189 = vpop.f32.mrb[0].mxu0
        %v1190 = vadd.f32 0.0, %v1189
        %v1191 = vpop.f32.mrb[0].mxu0
        %1192 = vmatprep.mubr.bf16.mxu0 %v774
        %1193 = vmatmul.mubr.bf16.gmra.mrb[0].mxu0 %v720
        %v1194 = vpop.f32.mrb[0].mxu0
        %v1195 = vadd.f32 0.0, %v1194
        %v1196 = vpop.f32.mrb[0].mxu0
        %v1197 = vpop.f32.mrb[0].mxu0
        %v1198 = vadd.f32 0.0, %v1197
        %v1199 = vpop.f32.mrb[0].mxu0
        %1200 = vmatprep.mubr.bf16.mxu0 %v786
        %1201 = vmatmul.mubr.bf16.gmra.mrb[0].mxu0 %v721
        %v1202 = vpop.f32.mrb[0].mxu0
        %v1203 = vadd.f32 0.0, %v1202
        %v1204 = vpop.f32.mrb[0].mxu0
        %v1205 = vpop.f32.mrb[0].mxu0
        %v1206 = vadd.f32 0.0, %v1205
        %v1207 = vpop.f32.mrb[0].mxu0
        %1208 = vmatprep.mubr.bf16.mxu0 %v798
        %1209 = vmatmul.mubr.bf16.gmra.mrb[0].mxu0 %v722
        %v1210 = vpop.f32.mrb[0].mxu0
        %v1211 = vadd.f32 0.0, %v1210
        %v1212 = vpop.f32.mrb[0].mxu0
        %v1213 = vpop.f32.mrb[0].mxu0
        %v1214 = vadd.f32 0.0, %v1213
        %v1215 = vpop.f32.mrb[0].mxu0
        %1216 = vmatprep.mubr.bf16.mxu0 %v810
        %1217 = vmatmul.mubr.bf16.gmra.mrb[0].mxu0 %v723
        %v1218 = vpop.f32.mrb[0].mxu0
        %v1219 = vadd.f32 0.0, %v1218
        %v1220 = vpop.f32.mrb[0].mxu0
        %v1221 = vpop.f32.mrb[0].mxu0
        %v1222 = vadd.f32 0.0, %v1221
        %v1223 = vpop.f32.mrb[0].mxu0
        %1224 = vmatprep.mubr.bf16.mxu0 %v822
        %1225 = vmatmul.mubr.bf16.gmra.mrb[0].mxu0 %v724
        %v1226 = vpop.f32.mrb[0].mxu0
        %v1227 = vadd.f32 0.0, %v1226
        %v1228 = vpop.f32.mrb[0].mxu0
        %v1229 = vpop.f32.mrb[0].mxu0
        %v1230 = vadd.f32 0.0, %v1229
        %v1231 = vpop.f32.mrb[0].mxu0
        %1232 = vmatprep.mubr.bf16.mxu0 %v834
        %1233 = vmatmul.mubr.bf16.gmra.mrb[0].mxu0 %v725
        %v1234 = vpop.f32.mrb[0].mxu0
        %v1235 = vadd.f32 0.0, %v1234
        %v1236 = vpop.f32.mrb[0].mxu0
        %v1237 = vpop.f32.mrb[0].mxu0
        %v1238 = vadd.f32 0.0, %v1237
        %v1239 = vpop.f32.mrb[0].mxu0
        %1240 = vmatprep.mubr.bf16.mxu0 %v951
        %1241 = vmatmul.mubr.bf16.gmra.mrb[0].mxu0 %v726
        %v1242 = vpop.f32.mrb[0].mxu0
        %v1243 = vadd.f32 0.0, %v1242
        %v1244 = vpop.f32.mrb[0].mxu0
        %v1245 = vpop.f32.mrb[0].mxu0
        %v1246 = vadd.f32 0.0, %v1245
        %v1247 = vpop.f32.mrb[0].mxu0
        %1248 = vdwg.mxu0
        %1249 = vmatprep.subr.bf16.mxu0 0
        %1250 = vmatpush1.bf16.msra.mxu0 %v1120
        %1251 = vmatprep.subr.bf16.mxu0 0
        %1252 = vmatpush1.bf16.msra.mxu0 %v1121
        %1253 = vmatprep.subr.bf16.mxu0 0
        %1254 = vmatpush1.bf16.msra.mxu0 %v1122
        %1255 = vmatprep.subr.bf16.mxu0 0
        %1256 = vmatpush1.bf16.msra.mxu0 %v1123
        %1257 = vmatprep.subr.bf16.mxu0 0
        %1258 = vmatpush1.bf16.msra.mxu0 %v1124
        %1259 = vmatprep.subr.bf16.mxu0 0
        %1260 = vmatpush1.bf16.msra.mxu0 %v1125
        %1261 = vmatprep.subr.bf16.mxu0 0
        %1262 = vmatpush1.bf16.msra.mxu0 %v1126
        %1263 = vmatprep.subr.bf16.mxu0 0
        %1264 = vmatpush1.bf16.msra.mxu0 %v1127
        %1265 = vmatprep.subr.bf16.mxu0 0
        %1266 = vmatpush1.bf16.msra.mxu0 0
        %1267 = vmatprep.subr.bf16.mxu0 0
        %1268 = vmatpush1.bf16.msra.mxu0 0
        %1269 = vmatprep.subr.bf16.mxu0 0
        %1270 = vmatpush1.bf16.msra.mxu0 0
        %1271 = vmatprep.subr.bf16.mxu0 0
        %1272 = vmatpush1.bf16.msra.mxu0 0
        %1273 = vmatprep.subr.bf16.mxu0 0
        %1274 = vmatpush1.bf16.msra.mxu0 0
        %1275 = vmatprep.subr.bf16.mxu0 0
        %1276 = vmatpush1.bf16.msra.mxu0 0
        %1277 = vmatprep.subr.bf16.mxu0 0
        %1278 = vmatpush1.bf16.msra.mxu0 0
        %1279 = vmatprep.subr.bf16.mxu0 0
        %1280 = vmatpush1.bf16.msra.mxu0 0
        %1281 = vmatprep.mubr.bf16.mxu0 0
        %1282 = vmatmul.mubr.bf16.gmra.mrb[0].mxu0 %v865
        %v1283 = vpop.f32.mrb[0].mxu0
        %v1284 = vadd.f32 %v1187, %v1283
        %v1285 = vpop.f32.mrb[0].mxu0
        %v1286 = vpop.f32.mrb[0].mxu0
        %v1287 = vadd.f32 %v1190, %v1286
        %v1288 = vpop.f32.mrb[0].mxu0
        %1289 = vmatprep.mubr.bf16.mxu0 0
        %1290 = vmatmul.mubr.bf16.gmra.mrb[0].mxu0 %v868
        %v1291 = vpop.f32.mrb[0].mxu0
        %v1292 = vadd.f32 %v1195, %v1291
        %v1293 = vpop.f32.mrb[0].mxu0
        %v1294 = vpop.f32.mrb[0].mxu0
        %v1295 = vadd.f32 %v1198, %v1294
        %v1296 = vpop.f32.mrb[0].mxu0
        %1297 = vmatprep.mubr.bf16.mxu0 0
        %1298 = vmatmul.mubr.bf16.gmra.mrb[0].mxu0 %v871
        %v1299 = vpop.f32.mrb[0].mxu0
        %v1300 = vadd.f32 %v1203, %v1299
        %v1301 = vpop.f32.mrb[0].mxu0
        %v1302 = vpop.f32.mrb[0].mxu0
        %v1303 = vadd.f32 %v1206, %v1302
        %v1304 = vpop.f32.mrb[0].mxu0
        %1305 = vmatprep.mubr.bf16.mxu0 0
        %1306 = vmatmul.mubr.bf16.gmra.mrb[0].mxu0 %v874
        %v1307 = vpop.f32.mrb[0].mxu0
        %v1308 = vadd.f32 %v1211, %v1307
        %v1309 = vpop.f32.mrb[0].mxu0
        %v1310 = vpop.f32.mrb[0].mxu0
        %v1311 = vadd.f32 %v1214, %v1310
        %v1312 = vpop.f32.mrb[0].mxu0
        %1313 = vmatprep.mubr.bf16.mxu0 0
        %1314 = vmatmul.mubr.bf16.gmra.mrb[0].mxu0 %v877
        %v1315 = vpop.f32.mrb[0].mxu0
        %v1316 = vadd.f32 %v1219, %v1315
        %v1317 = vpop.f32.mrb[0].mxu0
        %v1318 = vpop.f32.mrb[0].mxu0
        %v1319 = vadd.f32 %v1222, %v1318
        %v1320 = vpop.f32.mrb[0].mxu0
        %1321 = vmatprep.mubr.bf16.mxu0 0
        %1322 = vmatmul.mubr.bf16.gmra.mrb[0].mxu0 %v880
        %v1323 = vpop.f32.mrb[0].mxu0
        %v1324 = vadd.f32 %v1227, %v1323
        %v1325 = vpop.f32.mrb[0].mxu0
        %v1326 = vpop.f32.mrb[0].mxu0
        %v1327 = vadd.f32 %v1230, %v1326
        %v1328 = vpop.f32.mrb[0].mxu0
        %1329 = vmatprep.mubr.bf16.mxu0 0
        %1330 = vmatmul.mubr.bf16.gmra.mrb[0].mxu0 %v883
        %v1331 = vpop.f32.mrb[0].mxu0
        %v1332 = vadd.f32 %v1235, %v1331
        %v1333 = vpop.f32.mrb[0].mxu0
        %v1334 = vpop.f32.mrb[0].mxu0
        %v1335 = vadd.f32 %v1238, %v1334
        %v1336 = vpop.f32.mrb[0].mxu0
        %1337 = vmatprep.mubr.bf16.mxu0 0
        %1338 = vmatmul.mubr.bf16.gmra.mrb[0].mxu0 %v957
        %v1339 = vpop.f32.mrb[0].mxu0
        %v1340 = vadd.f32 %v1243, %v1339
        %v1341 = vpop.f32.mrb[0].mxu0
        %v1342 = vpop.f32.mrb[0].mxu0
        %v1343 = vadd.f32 %v1246, %v1342
        %v1344 = vpop.f32.mrb[0].mxu0
        %1345 = vdwg.mxu0
        %v1394 = vunpack.c.l.b16 %v892
        %v1395 = vunpack.c.l.b16 %v893
        %v1396 = vunpack.c.l.b16 %v894
        %v1397 = vunpack.c.l.b16 %v895
        %v1398 = vunpack.c.l.b16 %v896
        %v1399 = vunpack.c.l.b16 %v897
        %v1400 = vunpack.c.l.b16 %v898
        %v1401 = vunpack.c.l.b16 %v899
        %v1402 = vunpack.c.l.b16 %v900
        %v1403 = vunpack.c.l.b16 %v901
        %v1404 = vunpack.c.l.b16 %v902
        %v1405 = vunpack.c.l.b16 %v903
        %v1406 = vunpack.c.l.b16 %v904
        %v1407 = vunpack.c.l.b16 %v905
        %v1408 = vunpack.c.l.b16 %v906
        %v1409 = vunpack.c.l.b16 %v907
        %v1410 = vunpack.c.l.b16 %v908
        %v1411 = vunpack.c.l.b16 %v909
        %v1412 = vunpack.c.l.b16 %v910
        %v1413 = vunpack.c.l.b16 %v911
        %v1414 = vunpack.c.l.b16 %v912
        %v1415 = vunpack.c.l.b16 %v913
        %v1416 = vunpack.c.l.b16 %v914
        %v1417 = vunpack.c.l.b16 %v915
        %v1418 = vunpack.c.l.b16 %v916
        %v1419 = vunpack.c.l.b16 %v917
        %v1420 = vunpack.c.l.b16 %v918
        %v1421 = vunpack.c.l.b16 %v919
        %v1422 = vunpack.c.l.b16 %v920
        %v1423 = vunpack.c.l.b16 %v921
        %v1424 = vunpack.c.l.b16 %v922
        %v1425 = vunpack.c.l.b16 %v923
        %v1426 = vunpack.c.l.b16 %v924
        %v1427 = vunpack.c.l.b16 %v925
        %v1428 = vunpack.c.l.b16 %v926
        %v1429 = vunpack.c.l.b16 %v927
        %v1430 = vunpack.c.l.b16 %v928
        %v1431 = vunpack.c.l.b16 %v929
        %v1432 = vunpack.c.l.b16 %v930
        %v1433 = vunpack.c.l.b16 %v931
        %v1434 = vunpack.c.l.b16 %v932
        %v1435 = vunpack.c.l.b16 %v933
        %v1436 = vunpack.c.l.b16 %v934
        %v1437 = vunpack.c.l.b16 %v935
        %v1438 = vunpack.c.l.b16 %v936
        %v1439 = vunpack.c.l.b16 %v937
        %v1440 = vunpack.c.l.b16 %v938
        %v1441 = vunpack.c.l.b16 %v939
        %v1442 = vpack.c.b16 %v1395, %v1394
        %v1443 = vpack.c.b16 %v1397, %v1396
        %v1444 = vpack.c.b16 %v1399, %v1398
        %v1445 = vpack.c.b16 %v1401, %v1400
        %v1446 = vpack.c.b16 %v1403, %v1402
        %v1447 = vpack.c.b16 %v1405, %v1404
        %v1448 = vpack.c.b16 %v1407, %v1406
        %v1449 = vpack.c.b16 %v1409, %v1408
        %v1450 = vpack.c.b16 %v1411, %v1410
        %v1451 = vpack.c.b16 %v1413, %v1412
        %v1452 = vpack.c.b16 %v1415, %v1414
        %v1453 = vpack.c.b16 %v1417, %v1416
        %v1454 = vpack.c.b16 %v1419, %v1418
        %v1455 = vpack.c.b16 %v1421, %v1420
        %v1456 = vpack.c.b16 %v1423, %v1422
        %v1457 = vpack.c.b16 %v1425, %v1424
        %v1458 = vpack.c.b16 %v1427, %v1426
        %v1459 = vpack.c.b16 %v1429, %v1428
        %v1460 = vpack.c.b16 %v1431, %v1430
        %v1461 = vpack.c.b16 %v1433, %v1432
        %v1462 = vpack.c.b16 %v1435, %v1434
        %v1463 = vpack.c.b16 %v1437, %v1436
        %v1464 = vpack.c.b16 %v1439, %v1438
        %v1465 = vpack.c.b16 %v1441, %v1440
        %1490 = vmatprep.subr.bf16.mxu0 0
        %1491 = vmatpush1.bf16.msra.mxu0 %v1442
        %1492 = vmatprep.subr.bf16.mxu0 0
        %1493 = vmatpush1.bf16.msra.mxu0 %v1443
        %1494 = vmatprep.subr.bf16.mxu0 0
        %1495 = vmatpush1.bf16.msra.mxu0 %v1444
        %1496 = vmatprep.subr.bf16.mxu0 0
        %1497 = vmatpush1.bf16.msra.mxu0 %v1445
        %1498 = vmatprep.subr.bf16.mxu0 0
        %1499 = vmatpush1.bf16.msra.mxu0 %v1446
        %1500 = vmatprep.subr.bf16.mxu0 0
        %1501 = vmatpush1.bf16.msra.mxu0 %v1447
        %1502 = vmatprep.subr.bf16.mxu0 0
        %1503 = vmatpush1.bf16.msra.mxu0 %v1448
        %1504 = vmatprep.subr.bf16.mxu0 0
        %1505 = vmatpush1.bf16.msra.mxu0 %v1449
        %1506 = vmatprep.subr.bf16.mxu0 0
        %1507 = vmatpush1.bf16.msra.mxu0 %v1450
        %1508 = vmatprep.subr.bf16.mxu0 0
        %1509 = vmatpush1.bf16.msra.mxu0 %v1451
        %1510 = vmatprep.subr.bf16.mxu0 0
        %1511 = vmatpush1.bf16.msra.mxu0 %v1452
        %1512 = vmatprep.subr.bf16.mxu0 0
        %1513 = vmatpush1.bf16.msra.mxu0 %v1453
        %1514 = vmatprep.subr.bf16.mxu0 0
        %1515 = vmatpush1.bf16.msra.mxu0 %v1454
        %1516 = vmatprep.subr.bf16.mxu0 0
        %1517 = vmatpush1.bf16.msra.mxu0 %v1455
        %1518 = vmatprep.subr.bf16.mxu0 0
        %1519 = vmatpush1.bf16.msra.mxu0 %v1456
        %1520 = vmatprep.subr.bf16.mxu0 0
        %1521 = vmatpush1.bf16.msra.mxu0 %v1457
        %1522 = vmatprep.mubr.bf16.mxu0 %v750
        %1523 = vmatmul.mubr.bf16.gmra.mrb[0].mxu0 %v718
        %v1524 = vpop.f32.mrb[0].mxu0
        %v1525 = vadd.f32 %v1284, %v1524
        %v1526 = vpop.f32.mrb[0].mxu0
        %v1527 = vpop.f32.mrb[0].mxu0
        %v1528 = vadd.f32 %v1287, %v1527
        %v1529 = vpop.f32.mrb[0].mxu0
        %1530 = vmatprep.mubr.bf16.mxu0 %v762
        %1531 = vmatmul.mubr.bf16.gmra.mrb[0].mxu0 %v719
        %v1532 = vpop.f32.mrb[0].mxu0
        %v1533 = vadd.f32 %v1292, %v1532
        %v1534 = vpop.f32.mrb[0].mxu0
        %v1535 = vpop.f32.mrb[0].mxu0
        %v1536 = vadd.f32 %v1295, %v1535
        %v1537 = vpop.f32.mrb[0].mxu0
        %1538 = vmatprep.mubr.bf16.mxu0 %v774
        %1539 = vmatmul.mubr.bf16.gmra.mrb[0].mxu0 %v720
        %v1540 = vpop.f32.mrb[0].mxu0
        %v1541 = vadd.f32 %v1300, %v1540
        %v1542 = vpop.f32.mrb[0].mxu0
        %v1543 = vpop.f32.mrb[0].mxu0
        %v1544 = vadd.f32 %v1303, %v1543
        %v1545 = vpop.f32.mrb[0].mxu0
        %1546 = vmatprep.mubr.bf16.mxu0 %v786
        %1547 = vmatmul.mubr.bf16.gmra.mrb[0].mxu0 %v721
        %v1548 = vpop.f32.mrb[0].mxu0
        %v1549 = vadd.f32 %v1308, %v1548
        %v1550 = vpop.f32.mrb[0].mxu0
        %v1551 = vpop.f32.mrb[0].mxu0
        %v1552 = vadd.f32 %v1311, %v1551
        %v1553 = vpop.f32.mrb[0].mxu0
        %1554 = vmatprep.mubr.bf16.mxu0 %v798
        %1555 = vmatmul.mubr.bf16.gmra.mrb[0].mxu0 %v722
        %v1556 = vpop.f32.mrb[0].mxu0
        %v1557 = vadd.f32 %v1316, %v1556
        %v1558 = vpop.f32.mrb[0].mxu0
        %v1559 = vpop.f32.mrb[0].mxu0
        %v1560 = vadd.f32 %v1319, %v1559
        %v1561 = vpop.f32.mrb[0].mxu0
        %1562 = vmatprep.mubr.bf16.mxu0 %v810
        %1563 = vmatmul.mubr.bf16.gmra.mrb[0].mxu0 %v723
        %v1564 = vpop.f32.mrb[0].mxu0
        %v1565 = vadd.f32 %v1324, %v1564
        %v1566 = vpop.f32.mrb[0].mxu0
        %v1567 = vpop.f32.mrb[0].mxu0
        %v1568 = vadd.f32 %v1327, %v1567
        %v1569 = vpop.f32.mrb[0].mxu0
        %1570 = vmatprep.mubr.bf16.mxu0 %v822
        %1571 = vmatmul.mubr.bf16.gmra.mrb[0].mxu0 %v724
        %v1572 = vpop.f32.mrb[0].mxu0
        %v1573 = vadd.f32 %v1332, %v1572
        %v1574 = vpop.f32.mrb[0].mxu0
        %v1575 = vpop.f32.mrb[0].mxu0
        %v1576 = vadd.f32 %v1335, %v1575
        %v1577 = vpop.f32.mrb[0].mxu0
        %1578 = vmatprep.mubr.bf16.mxu0 %v834
        %1579 = vmatmul.mubr.bf16.gmra.mrb[0].mxu0 %v725
        %v1580 = vpop.f32.mrb[0].mxu0
        %v1581 = vadd.f32 %v1340, %v1580
        %v1582 = vpop.f32.mrb[0].mxu0
        %v1583 = vpop.f32.mrb[0].mxu0
        %v1584 = vadd.f32 %v1343, %v1583
        %v1585 = vpop.f32.mrb[0].mxu0
        %1586 = vdwg.mxu0
        %1587 = vmatprep.subr.bf16.mxu0 0
        %1588 = vmatpush1.bf16.msra.mxu0 %v1458
        %1589 = vmatprep.subr.bf16.mxu0 0
        %1590 = vmatpush1.bf16.msra.mxu0 %v1459
        %1591 = vmatprep.subr.bf16.mxu0 0
        %1592 = vmatpush1.bf16.msra.mxu0 %v1460
        %1593 = vmatprep.subr.bf16.mxu0 0
        %1594 = vmatpush1.bf16.msra.mxu0 %v1461
        %1595 = vmatprep.subr.bf16.mxu0 0
        %1596 = vmatpush1.bf16.msra.mxu0 %v1462
        %1597 = vmatprep.subr.bf16.mxu0 0
        %1598 = vmatpush1.bf16.msra.mxu0 %v1463
        %1599 = vmatprep.subr.bf16.mxu0 0
        %1600 = vmatpush1.bf16.msra.mxu0 %v1464
        %1601 = vmatprep.subr.bf16.mxu0 0
        %1602 = vmatpush1.bf16.msra.mxu0 %v1465
        %1603 = vmatprep.subr.bf16.mxu0 0
        %1604 = vmatpush1.bf16.msra.mxu0 0
        %1605 = vmatprep.subr.bf16.mxu0 0
        %1606 = vmatpush1.bf16.msra.mxu0 0
        %1607 = vmatprep.subr.bf16.mxu0 0
        %1608 = vmatpush1.bf16.msra.mxu0 0
        %1609 = vmatprep.subr.bf16.mxu0 0
        %1610 = vmatpush1.bf16.msra.mxu0 0
        %1611 = vmatprep.subr.bf16.mxu0 0
        %1612 = vmatpush1.bf16.msra.mxu0 0
        %1613 = vmatprep.subr.bf16.mxu0 0
        %1614 = vmatpush1.bf16.msra.mxu0 0
        %1615 = vmatprep.subr.bf16.mxu0 0
        %1616 = vmatpush1.bf16.msra.mxu0 0
        %1617 = vmatprep.subr.bf16.mxu0 0
        %1618 = vmatpush1.bf16.msra.mxu0 0
        %1619 = vmatprep.mubr.bf16.mxu0 0
        %1620 = vmatmul.mubr.bf16.gmra.mrb[0].mxu0 %v862
        %v1621 = vpop.f32.mrb[0].mxu0
        %v1622 = vadd.f32 %v1525, %v1621
        %v1623 = vpop.f32.mrb[0].mxu0
        %v1624 = vpop.f32.mrb[0].mxu0
        %v1625 = vadd.f32 %v1528, %v1624
        %v1626 = vpop.f32.mrb[0].mxu0
        %1627 = vmatprep.mubr.bf16.mxu0 0
        %1628 = vmatmul.mubr.bf16.gmra.mrb[0].mxu0 %v865
        %v1629 = vpop.f32.mrb[0].mxu0
        %v1630 = vadd.f32 %v1533, %v1629
        %v1631 = vpop.f32.mrb[0].mxu0
        %v1632 = vpop.f32.mrb[0].mxu0
        %v1633 = vadd.f32 %v1536, %v1632
        %v1634 = vpop.f32.mrb[0].mxu0
        %1635 = vmatprep.mubr.bf16.mxu0 0
        %1636 = vmatmul.mubr.bf16.gmra.mrb[0].mxu0 %v868
        %v1637 = vpop.f32.mrb[0].mxu0
        %v1638 = vadd.f32 %v1541, %v1637
        %v1639 = vpop.f32.mrb[0].mxu0
        %v1640 = vpop.f32.mrb[0].mxu0
        %v1641 = vadd.f32 %v1544, %v1640
        %v1642 = vpop.f32.mrb[0].mxu0
        %1643 = vmatprep.mubr.bf16.mxu0 0
        %1644 = vmatmul.mubr.bf16.gmra.mrb[0].mxu0 %v871
        %v1645 = vpop.f32.mrb[0].mxu0
        %v1646 = vadd.f32 %v1549, %v1645
        %v1647 = vpop.f32.mrb[0].mxu0
        %v1648 = vpop.f32.mrb[0].mxu0
        %v1649 = vadd.f32 %v1552, %v1648
        %v1650 = vpop.f32.mrb[0].mxu0
        %1651 = vmatprep.mubr.bf16.mxu0 0
        %1652 = vmatmul.mubr.bf16.gmra.mrb[0].mxu0 %v874
        %v1653 = vpop.f32.mrb[0].mxu0
        %v1654 = vadd.f32 %v1557, %v1653
        %v1655 = vpop.f32.mrb[0].mxu0
        %v1656 = vpop.f32.mrb[0].mxu0
        %v1657 = vadd.f32 %v1560, %v1656
        %v1658 = vpop.f32.mrb[0].mxu0
        %1659 = vmatprep.mubr.bf16.mxu0 0
        %1660 = vmatmul.mubr.bf16.gmra.mrb[0].mxu0 %v877
        %v1661 = vpop.f32.mrb[0].mxu0
        %v1662 = vadd.f32 %v1565, %v1661
        %v1663 = vpop.f32.mrb[0].mxu0
        %v1664 = vpop.f32.mrb[0].mxu0
        %v1665 = vadd.f32 %v1568, %v1664
        %v1666 = vpop.f32.mrb[0].mxu0
        %1667 = vmatprep.mubr.bf16.mxu0 0
        %1668 = vmatmul.mubr.bf16.gmra.mrb[0].mxu0 %v880
        %v1669 = vpop.f32.mrb[0].mxu0
        %v1670 = vadd.f32 %v1573, %v1669
        %v1671 = vpop.f32.mrb[0].mxu0
        %v1672 = vpop.f32.mrb[0].mxu0
        %v1673 = vadd.f32 %v1576, %v1672
        %v1674 = vpop.f32.mrb[0].mxu0
        %1675 = vmatprep.mubr.bf16.mxu0 0
        %1676 = vmatmul.mubr.bf16.gmra.mrb[0].mxu0 %v883
        %v1677 = vpop.f32.mrb[0].mxu0
        %v1678 = vadd.f32 %v1581, %v1677
        %v1679 = vpop.f32.mrb[0].mxu0
        %v1680 = vpop.f32.mrb[0].mxu0
        %v1681 = vadd.f32 %v1584, %v1680
        %v1682 = vpop.f32.mrb[0].mxu0
        %1683 = vdwg.mxu0
        %v1685 = vshrl.u32 %v727, 16
        %v1687 = vshll.u32 %v727, 16
        %v1689 = vrot.slane %v1687, 1
        %v1690 = vor.u32 %v1685, %v1689
        %v1692 = vshll.u32 %v737, 16
        %v1694 = vrot.slane %v1692, 1
        %v1695 = vsel %vm738, %v1690, %v1694
        %v1699 = vrot.slane %v727, 1
        %v1700 = vrot.slane %v737, 1
        %v1701 = vsel %vm859, %v1699, %v1700
        %s1703 = scalar_lea.vmem [#allocation8], 384
        %v1704 = vld [vmem:[%s1703] sm:$0xf]
        %v1705 = vld [vmem:[%s1703 + $0x4] sm:$0xf]
        %v1706 = vld [vmem:[%s1703 + $0x8] sm:$0xf]
        %v1707 = vld [vmem:[%s1703 + $0xc] sm:$0xf]
        %v1708 = vld [vmem:[%s1703 + $0x10] sm:$0xf]
        %v1709 = vld [vmem:[%s1703 + $0x14] sm:$0xf]
        %v1710 = vld [vmem:[%s1703 + $0x18] sm:$0xf]
        %v1711 = vld [vmem:[%s1703 + $0x1c] sm:$0xf]
        %v1712 = vld [vmem:[%s1703 + $0x20] sm:$0xf]
        %v1713 = vld [vmem:[%s1703 + $0x24] sm:$0xf]
        %v1714 = vld [vmem:[%s1703 + $0x28] sm:$0xf]
        %v1715 = vld [vmem:[%s1703 + $0x2c] sm:$0xf]
        %v1716 = vld [vmem:[%s1703 + $0x30] sm:$0xf]
        %v1717 = vld [vmem:[%s1703 + $0x34] sm:$0xf]
        %v1718 = vld [vmem:[%s1703 + $0x38] sm:$0xf]
        %v1719 = vld [vmem:[%s1703 + $0x3c] sm:$0xf]
        %v1720 = vld [vmem:[%s1703 + $0x40] sm:$0xf]
        %v1721 = vld [vmem:[%s1703 + $0x44] sm:$0xf]
        %v1722 = vld [vmem:[%s1703 + $0x48] sm:$0xf]
        %v1723 = vld [vmem:[%s1703 + $0x4c] sm:$0xf]
        %v1724 = vld [vmem:[%s1703 + $0x50] sm:$0xf]
        %v1725 = vld [vmem:[%s1703 + $0x54] sm:$0xf]
        %v1726 = vld [vmem:[%s1703 + $0x58] sm:$0xf]
        %v1727 = vld [vmem:[%s1703 + $0x5c] sm:$0xf]
        %v1728 = vld [vmem:[%s1703 + $0x60] sm:$0xf]
        %v1729 = vld [vmem:[%s1703 + $0x64] sm:$0xf]
        %v1730 = vld [vmem:[%s1703 + $0x68] sm:$0xf]
        %v1731 = vld [vmem:[%s1703 + $0x6c] sm:$0xf]
        %v1732 = vld [vmem:[%s1703 + $0x70] sm:$0xf]
        %v1733 = vld [vmem:[%s1703 + $0x74] sm:$0xf]
        %v1734 = vld [vmem:[%s1703 + $0x78] sm:$0xf]
        %v1735 = vld [vmem:[%s1703 + $0x7c] sm:$0xf]
        %v1736 = vld [vmem:[%s1703 + $0x80] sm:$0xf]
        %v1737 = vld [vmem:[%s1703 + $0x84] sm:$0xf]
        %v1738 = vld [vmem:[%s1703 + $0x88] sm:$0xf]
        %v1739 = vld [vmem:[%s1703 + $0x8c] sm:$0xf]
        %v1740 = vld [vmem:[%s1703 + $0x90] sm:$0xf]
        %v1741 = vld [vmem:[%s1703 + $0x94] sm:$0xf]
        %v1742 = vld [vmem:[%s1703 + $0x98] sm:$0xf]
        %v1743 = vld [vmem:[%s1703 + $0x9c] sm:$0xf]
        %v1744 = vld [vmem:[%s1703 + $0xa0] sm:$0xf]
        %v1745 = vld [vmem:[%s1703 + $0xa4] sm:$0xf]
        %v1746 = vld [vmem:[%s1703 + $0xa8] sm:$0xf]
        %v1747 = vld [vmem:[%s1703 + $0xac] sm:$0xf]
        %v1748 = vld [vmem:[%s1703 + $0xb0] sm:$0xf]
        %v1749 = vld [vmem:[%s1703 + $0xb4] sm:$0xf]
        %v1750 = vld [vmem:[%s1703 + $0xb8] sm:$0xf]
        %v1751 = vld [vmem:[%s1703 + $0xbc] sm:$0xf]
        %v1800 = vunpack.c.l.b16 %v1704
        %v1801 = vunpack.c.l.b16 %v1705
        %v1802 = vunpack.c.l.b16 %v1706
        %v1803 = vunpack.c.l.b16 %v1707
        %v1804 = vunpack.c.l.b16 %v1708
        %v1805 = vunpack.c.l.b16 %v1709
        %v1806 = vunpack.c.l.b16 %v1710
        %v1807 = vunpack.c.l.b16 %v1711
        %v1808 = vunpack.c.l.b16 %v1712
        %v1809 = vunpack.c.l.b16 %v1713
        %v1810 = vunpack.c.l.b16 %v1714
        %v1811 = vunpack.c.l.b16 %v1715
        %v1812 = vunpack.c.l.b16 %v1716
        %v1813 = vunpack.c.l.b16 %v1717
        %v1814 = vunpack.c.l.b16 %v1718
        %v1815 = vunpack.c.l.b16 %v1719
        %v1816 = vunpack.c.l.b16 %v1720
        %v1817 = vunpack.c.l.b16 %v1721
        %v1818 = vunpack.c.l.b16 %v1722
        %v1819 = vunpack.c.l.b16 %v1723
        %v1820 = vunpack.c.l.b16 %v1724
        %v1821 = vunpack.c.l.b16 %v1725
        %v1822 = vunpack.c.l.b16 %v1726
        %v1823 = vunpack.c.l.b16 %v1727
        %v1824 = vunpack.c.l.b16 %v1728
        %v1825 = vunpack.c.l.b16 %v1729
        %v1826 = vunpack.c.l.b16 %v1730
        %v1827 = vunpack.c.l.b16 %v1731
        %v1828 = vunpack.c.l.b16 %v1732
        %v1829 = vunpack.c.l.b16 %v1733
        %v1830 = vunpack.c.l.b16 %v1734
        %v1831 = vunpack.c.l.b16 %v1735
        %v1832 = vunpack.c.l.b16 %v1736
        %v1833 = vunpack.c.l.b16 %v1737
        %v1834 = vunpack.c.l.b16 %v1738
        %v1835 = vunpack.c.l.b16 %v1739
        %v1836 = vunpack.c.l.b16 %v1740
        %v1837 = vunpack.c.l.b16 %v1741
        %v1838 = vunpack.c.l.b16 %v1742
        %v1839 = vunpack.c.l.b16 %v1743
        %v1840 = vunpack.c.l.b16 %v1744
        %v1841 = vunpack.c.l.b16 %v1745
        %v1842 = vunpack.c.l.b16 %v1746
        %v1843 = vunpack.c.l.b16 %v1747
        %v1844 = vunpack.c.l.b16 %v1748
        %v1845 = vunpack.c.l.b16 %v1749
        %v1846 = vunpack.c.l.b16 %v1750
        %v1847 = vunpack.c.l.b16 %v1751
        %v1848 = vpack.c.b16 %v1801, %v1800
        %v1849 = vpack.c.b16 %v1803, %v1802
        %v1850 = vpack.c.b16 %v1805, %v1804
        %v1851 = vpack.c.b16 %v1807, %v1806
        %v1852 = vpack.c.b16 %v1809, %v1808
        %v1853 = vpack.c.b16 %v1811, %v1810
        %v1854 = vpack.c.b16 %v1813, %v1812
        %v1855 = vpack.c.b16 %v1815, %v1814
        %v1856 = vpack.c.b16 %v1817, %v1816
        %v1857 = vpack.c.b16 %v1819, %v1818
        %v1858 = vpack.c.b16 %v1821, %v1820
        %v1859 = vpack.c.b16 %v1823, %v1822
        %v1860 = vpack.c.b16 %v1825, %v1824
        %v1861 = vpack.c.b16 %v1827, %v1826
        %v1862 = vpack.c.b16 %v1829, %v1828
        %v1863 = vpack.c.b16 %v1831, %v1830
        %v1864 = vpack.c.b16 %v1833, %v1832
        %v1865 = vpack.c.b16 %v1835, %v1834
        %v1866 = vpack.c.b16 %v1837, %v1836
        %v1867 = vpack.c.b16 %v1839, %v1838
        %v1868 = vpack.c.b16 %v1841, %v1840
        %v1869 = vpack.c.b16 %v1843, %v1842
        %v1870 = vpack.c.b16 %v1845, %v1844
        %v1871 = vpack.c.b16 %v1847, %v1846
        %1896 = vmatprep.subr.bf16.mxu0 0
        %1897 = vmatpush1.bf16.msra.mxu0 %v1848
        %1898 = vmatprep.subr.bf16.mxu0 0
        %1899 = vmatpush1.bf16.msra.mxu0 %v1849
        %1900 = vmatprep.subr.bf16.mxu0 0
        %1901 = vmatpush1.bf16.msra.mxu0 %v1850
        %1902 = vmatprep.subr.bf16.mxu0 0
        %1903 = vmatpush1.bf16.msra.mxu0 %v1851
        %1904 = vmatprep.subr.bf16.mxu0 0
        %1905 = vmatpush1.bf16.msra.mxu0 %v1852
        %1906 = vmatprep.subr.bf16.mxu0 0
        %1907 = vmatpush1.bf16.msra.mxu0 %v1853
        %1908 = vmatprep.subr.bf16.mxu0 0
        %1909 = vmatpush1.bf16.msra.mxu0 %v1854
        %1910 = vmatprep.subr.bf16.mxu0 0
        %1911 = vmatpush1.bf16.msra.mxu0 %v1855
        %1912 = vmatprep.subr.bf16.mxu0 0
        %1913 = vmatpush1.bf16.msra.mxu0 %v1856
        %1914 = vmatprep.subr.bf16.mxu0 0
        %1915 = vmatpush1.bf16.msra.mxu0 %v1857
        %1916 = vmatprep.subr.bf16.mxu0 0
        %1917 = vmatpush1.bf16.msra.mxu0 %v1858
        %1918 = vmatprep.subr.bf16.mxu0 0
        %1919 = vmatpush1.bf16.msra.mxu0 %v1859
        %1920 = vmatprep.subr.bf16.mxu0 0
        %1921 = vmatpush1.bf16.msra.mxu0 %v1860
        %1922 = vmatprep.subr.bf16.mxu0 0
        %1923 = vmatpush1.bf16.msra.mxu0 %v1861
        %1924 = vmatprep.subr.bf16.mxu0 0
        %1925 = vmatpush1.bf16.msra.mxu0 %v1862
        %1926 = vmatprep.subr.bf16.mxu0 0
        %1927 = vmatpush1.bf16.msra.mxu0 %v1863
        %1928 = vmatprep.mubr.bf16.mxu0 %v774
        %1929 = vmatmul.mubr.bf16.gmra.mrb[0].mxu0 %v720
        %v1930 = vpop.f32.mrb[0].mxu0
        %v1931 = vadd.f32 0.0, %v1930
        %v1932 = vpop.f32.mrb[0].mxu0
        %v1933 = vpop.f32.mrb[0].mxu0
        %v1934 = vadd.f32 0.0, %v1933
        %v1935 = vpop.f32.mrb[0].mxu0
        %1936 = vmatprep.mubr.bf16.mxu0 %v786
        %1937 = vmatmul.mubr.bf16.gmra.mrb[0].mxu0 %v721
        %v1938 = vpop.f32.mrb[0].mxu0
        %v1939 = vadd.f32 0.0, %v1938
        %v1940 = vpop.f32.mrb[0].mxu0
        %v1941 = vpop.f32.mrb[0].mxu0
        %v1942 = vadd.f32 0.0, %v1941
        %v1943 = vpop.f32.mrb[0].mxu0
        %1944 = vmatprep.mubr.bf16.mxu0 %v798
        %1945 = vmatmul.mubr.bf16.gmra.mrb[0].mxu0 %v722
        %v1946 = vpop.f32.mrb[0].mxu0
        %v1947 = vadd.f32 0.0, %v1946
        %v1948 = vpop.f32.mrb[0].mxu0
        %v1949 = vpop.f32.mrb[0].mxu0
        %v1950 = vadd.f32 0.0, %v1949
        %v1951 = vpop.f32.mrb[0].mxu0
        %1952 = vmatprep.mubr.bf16.mxu0 %v810
        %1953 = vmatmul.mubr.bf16.gmra.mrb[0].mxu0 %v723
        %v1954 = vpop.f32.mrb[0].mxu0
        %v1955 = vadd.f32 0.0, %v1954
        %v1956 = vpop.f32.mrb[0].mxu0
        %v1957 = vpop.f32.mrb[0].mxu0
        %v1958 = vadd.f32 0.0, %v1957
        %v1959 = vpop.f32.mrb[0].mxu0
        %1960 = vmatprep.mubr.bf16.mxu0 %v822
        %1961 = vmatmul.mubr.bf16.gmra.mrb[0].mxu0 %v724
        %v1962 = vpop.f32.mrb[0].mxu0
        %v1963 = vadd.f32 0.0, %v1962
        %v1964 = vpop.f32.mrb[0].mxu0
        %v1965 = vpop.f32.mrb[0].mxu0
        %v1966 = vadd.f32 0.0, %v1965
        %v1967 = vpop.f32.mrb[0].mxu0
        %1968 = vmatprep.mubr.bf16.mxu0 %v834
        %1969 = vmatmul.mubr.bf16.gmra.mrb[0].mxu0 %v725
        %v1970 = vpop.f32.mrb[0].mxu0
        %v1971 = vadd.f32 0.0, %v1970
        %v1972 = vpop.f32.mrb[0].mxu0
        %v1973 = vpop.f32.mrb[0].mxu0
        %v1974 = vadd.f32 0.0, %v1973
        %v1975 = vpop.f32.mrb[0].mxu0
        %1976 = vmatprep.mubr.bf16.mxu0 %v951
        %1977 = vmatmul.mubr.bf16.gmra.mrb[0].mxu0 %v726
        %v1978 = vpop.f32.mrb[0].mxu0
        %v1979 = vadd.f32 0.0, %v1978
        %v1980 = vpop.f32.mrb[0].mxu0
        %v1981 = vpop.f32.mrb[0].mxu0
        %v1982 = vadd.f32 0.0, %v1981
        %v1983 = vpop.f32.mrb[0].mxu0
        %1984 = vmatprep.mubr.bf16.mxu0 %v1695
        %1985 = vmatmul.mubr.bf16.gmra.mrb[0].mxu0 %v727
        %v1986 = vpop.f32.mrb[0].mxu0
        %v1987 = vadd.f32 0.0, %v1986
        %v1988 = vpop.f32.mrb[0].mxu0
        %v1989 = vpop.f32.mrb[0].mxu0
        %v1990 = vadd.f32 0.0, %v1989
        %v1991 = vpop.f32.mrb[0].mxu0
        %1992 = vdwg.mxu0
        %1993 = vmatprep.subr.bf16.mxu0 0
        %1994 = vmatpush1.bf16.msra.mxu0 %v1864
        %1995 = vmatprep.subr.bf16.mxu0 0
        %1996 = vmatpush1.bf16.msra.mxu0 %v1865
        %1997 = vmatprep.subr.bf16.mxu0 0
        %1998 = vmatpush1.bf16.msra.mxu0 %v1866
        %1999 = vmatprep.subr.bf16.mxu0 0
        %2000 = vmatpush1.bf16.msra.mxu0 %v1867
        %2001 = vmatprep.subr.bf16.mxu0 0
        %2002 = vmatpush1.bf16.msra.mxu0 %v1868
        %2003 = vmatprep.subr.bf16.mxu0 0
        %2004 = vmatpush1.bf16.msra.mxu0 %v1869
        %2005 = vmatprep.subr.bf16.mxu0 0
        %2006 = vmatpush1.bf16.msra.mxu0 %v1870
        %2007 = vmatprep.subr.bf16.mxu0 0
        %2008 = vmatpush1.bf16.msra.mxu0 %v1871
        %2009 = vmatprep.subr.bf16.mxu0 0
        %2010 = vmatpush1.bf16.msra.mxu0 0
        %2011 = vmatprep.subr.bf16.mxu0 0
        %2012 = vmatpush1.bf16.msra.mxu0 0
        %2013 = vmatprep.subr.bf16.mxu0 0
        %2014 = vmatpush1.bf16.msra.mxu0 0
        %2015 = vmatprep.subr.bf16.mxu0 0
        %2016 = vmatpush1.bf16.msra.mxu0 0
        %2017 = vmatprep.subr.bf16.mxu0 0
        %2018 = vmatpush1.bf16.msra.mxu0 0
        %2019 = vmatprep.subr.bf16.mxu0 0
        %2020 = vmatpush1.bf16.msra.mxu0 0
        %2021 = vmatprep.subr.bf16.mxu0 0
        %2022 = vmatpush1.bf16.msra.mxu0 0
        %2023 = vmatprep.subr.bf16.mxu0 0
        %2024 = vmatpush1.bf16.msra.mxu0 0
        %2025 = vmatprep.mubr.bf16.mxu0 0
        %2026 = vmatmul.mubr.bf16.gmra.mrb[0].mxu0 %v868
        %v2027 = vpop.f32.mrb[0].mxu0
        %v2028 = vadd.f32 %v1931, %v2027
        %v2029 = vpop.f32.mrb[0].mxu0
        %v2030 = vpop.f32.mrb[0].mxu0
        %v2031 = vadd.f32 %v1934, %v2030
        %v2032 = vpop.f32.mrb[0].mxu0
        %2033 = vmatprep.mubr.bf16.mxu0 0
        %2034 = vmatmul.mubr.bf16.gmra.mrb[0].mxu0 %v871
        %v2035 = vpop.f32.mrb[0].mxu0
        %v2036 = vadd.f32 %v1939, %v2035
        %v2037 = vpop.f32.mrb[0].mxu0
        %v2038 = vpop.f32.mrb[0].mxu0
        %v2039 = vadd.f32 %v1942, %v2038
        %v2040 = vpop.f32.mrb[0].mxu0
        %2041 = vmatprep.mubr.bf16.mxu0 0
        %2042 = vmatmul.mubr.bf16.gmra.mrb[0].mxu0 %v874
        %v2043 = vpop.f32.mrb[0].mxu0
        %v2044 = vadd.f32 %v1947, %v2043
        %v2045 = vpop.f32.mrb[0].mxu0
        %v2046 = vpop.f32.mrb[0].mxu0
        %v2047 = vadd.f32 %v1950, %v2046
        %v2048 = vpop.f32.mrb[0].mxu0
        %2049 = vmatprep.mubr.bf16.mxu0 0
        %2050 = vmatmul.mubr.bf16.gmra.mrb[0].mxu0 %v877
        %v2051 = vpop.f32.mrb[0].mxu0
        %v2052 = vadd.f32 %v1955, %v2051
        %v2053 = vpop.f32.mrb[0].mxu0
        %v2054 = vpop.f32.mrb[0].mxu0
        %v2055 = vadd.f32 %v1958, %v2054
        %v2056 = vpop.f32.mrb[0].mxu0
        %2057 = vmatprep.mubr.bf16.mxu0 0
        %2058 = vmatmul.mubr.bf16.gmra.mrb[0].mxu0 %v880
        %v2059 = vpop.f32.mrb[0].mxu0
        %v2060 = vadd.f32 %v1963, %v2059
        %v2061 = vpop.f32.mrb[0].mxu0
        %v2062 = vpop.f32.mrb[0].mxu0
        %v2063 = vadd.f32 %v1966, %v2062
        %v2064 = vpop.f32.mrb[0].mxu0
        %2065 = vmatprep.mubr.bf16.mxu0 0
        %2066 = vmatmul.mubr.bf16.gmra.mrb[0].mxu0 %v883
        %v2067 = vpop.f32.mrb[0].mxu0
        %v2068 = vadd.f32 %v1971, %v2067
        %v2069 = vpop.f32.mrb[0].mxu0
        %v2070 = vpop.f32.mrb[0].mxu0
        %v2071 = vadd.f32 %v1974, %v2070
        %v2072 = vpop.f32.mrb[0].mxu0
        %2073 = vmatprep.mubr.bf16.mxu0 0
        %2074 = vmatmul.mubr.bf16.gmra.mrb[0].mxu0 %v957
        %v2075 = vpop.f32.mrb[0].mxu0
        %v2076 = vadd.f32 %v1979, %v2075
        %v2077 = vpop.f32.mrb[0].mxu0
        %v2078 = vpop.f32.mrb[0].mxu0
        %v2079 = vadd.f32 %v1982, %v2078
        %v2080 = vpop.f32.mrb[0].mxu0
        %2081 = vmatprep.mubr.bf16.mxu0 0
        %2082 = vmatmul.mubr.bf16.gmra.mrb[0].mxu0 %v1701
        %v2083 = vpop.f32.mrb[0].mxu0
        %v2084 = vadd.f32 %v1987, %v2083
        %v2085 = vpop.f32.mrb[0].mxu0
        %v2086 = vpop.f32.mrb[0].mxu0
        %v2087 = vadd.f32 %v1990, %v2086
        %v2088 = vpop.f32.mrb[0].mxu0
        %2089 = vdwg.mxu0
        %v2090 = vadd.f32 %v1622, %v2028
        %v2091 = vadd.f32 %v1625, %v2031
        %v2092 = vadd.f32 %v1630, %v2036
        %v2093 = vadd.f32 %v1633, %v2039
        %v2094 = vadd.f32 %v1638, %v2044
        %v2095 = vadd.f32 %v1641, %v2047
        %v2096 = vadd.f32 %v1646, %v2052
        %v2097 = vadd.f32 %v1649, %v2055
        %v2098 = vadd.f32 %v1654, %v2060
        %v2099 = vadd.f32 %v1657, %v2063
        %v2100 = vadd.f32 %v1662, %v2068
        %v2101 = vadd.f32 %v1665, %v2071
        %v2102 = vadd.f32 %v1670, %v2076
        %v2103 = vadd.f32 %v1673, %v2079
        %v2104 = vadd.f32 %v1678, %v2084
        %v2105 = vadd.f32 %v1681, %v2087
        %v2106 = vpack.c.bf16 %v2091, %v2090
        %v2107 = vpack.c.bf16 %v2093, %v2092
        %v2108 = vpack.c.bf16 %v2095, %v2094
        %v2109 = vpack.c.bf16 %v2097, %v2096
        %v2110 = vpack.c.bf16 %v2099, %v2098
        %v2111 = vpack.c.bf16 %v2101, %v2100
        %v2112 = vpack.c.bf16 %v2103, %v2102
        %v2113 = vpack.c.bf16 %v2105, %v2104
        %v2122 = vunpack.c.l.b16 %v2106
        %v2123 = vunpack.c.h.b16 %v2106
        %v2124 = vunpack.c.l.b16 %v2107
        %v2125 = vunpack.c.h.b16 %v2107
        %v2126 = vunpack.c.l.b16 %v2108
        %v2127 = vunpack.c.h.b16 %v2108
        %v2128 = vunpack.c.l.b16 %v2109
        %v2129 = vunpack.c.h.b16 %v2109
        %v2130 = vunpack.c.l.b16 %v2110
        %v2131 = vunpack.c.h.b16 %v2110
        %v2132 = vunpack.c.l.b16 %v2111
        %v2133 = vunpack.c.h.b16 %v2111
        %v2134 = vunpack.c.l.b16 %v2112
        %v2135 = vunpack.c.h.b16 %v2112
        %v2136 = vunpack.c.l.b16 %v2113
        %v2137 = vunpack.c.h.b16 %v2113
        %v2138 = vpack.c.b16 %v2122, %v2122
        %v2139 = vpack.c.b16 %v2123, %v2123
        %v2140 = vpack.c.b16 %v2124, %v2124
        %v2141 = vpack.c.b16 %v2125, %v2125
        %v2142 = vpack.c.b16 %v2126, %v2126
        %v2143 = vpack.c.b16 %v2127, %v2127
        %v2144 = vpack.c.b16 %v2128, %v2128
        %v2145 = vpack.c.b16 %v2129, %v2129
        %v2146 = vpack.c.b16 %v2130, %v2130
        %v2147 = vpack.c.b16 %v2131, %v2131
        %v2148 = vpack.c.b16 %v2132, %v2132
        %v2149 = vpack.c.b16 %v2133, %v2133
        %v2150 = vpack.c.b16 %v2134, %v2134
        %v2151 = vpack.c.b16 %v2135, %v2135
        %v2152 = vpack.c.b16 %v2136, %v2136
        %v2153 = vpack.c.b16 %v2137, %v2137
        %2170 = vst [vmem:[%s470] sm:$0xf] %v2138
        %2171 = vst [vmem:[%s470 + $0x4] sm:$0xf] %v2139
        %2172 = vst [vmem:[%s470 + $0x8] sm:$0xf] %v2140
        %2173 = vst [vmem:[%s470 + $0xc] sm:$0xf] %v2141
        %2174 = vst [vmem:[%s470 + $0x10] sm:$0xf] %v2142
        %2175 = vst [vmem:[%s470 + $0x14] sm:$0xf] %v2143
        %2176 = vst [vmem:[%s470 + $0x18] sm:$0xf] %v2144
        %2177 = vst [vmem:[%s470 + $0x1c] sm:$0xf] %v2145
        %2178 = vst [vmem:[%s470 + $0x20] sm:$0xf] %v2146
        %2179 = vst [vmem:[%s470 + $0x24] sm:$0xf] %v2147
        %2180 = vst [vmem:[%s470 + $0x28] sm:$0xf] %v2148
        %2181 = vst [vmem:[%s470 + $0x2c] sm:$0xf] %v2149
        %2182 = vst [vmem:[%s470 + $0x30] sm:$0xf] %v2150
        %2183 = vst [vmem:[%s470 + $0x34] sm:$0xf] %v2151
        %2184 = vst [vmem:[%s470 + $0x38] sm:$0xf] %v2152
        %2185 = vst [vmem:[%s470 + $0x3c] sm:$0xf] %v2153
        %v2186 = vadd.f32 %v2090, %v2091
        %v2187 = vadd.f32 %v2186, %v2092
        %v2188 = vadd.f32 %v2187, %v2093
        %v2189 = vadd.f32 %v2188, %v2094
        %v2190 = vadd.f32 %v2189, %v2095
        %v2191 = vadd.f32 %v2190, %v2096
        %v2192 = vadd.f32 %v2191, %v2097
        %v2193 = vadd.f32 %v2192, %v2098
        %v2194 = vadd.f32 %v2193, %v2099
        %v2195 = vadd.f32 %v2194, %v2100
        %v2196 = vadd.f32 %v2195, %v2101
        %v2197 = vadd.f32 %v2196, %v2102
        %v2198 = vadd.f32 %v2197, %v2103
        %v2199 = vadd.f32 %v2198, %v2104
        %v2200 = vadd.f32 %v2199, %v2105
        %v2201 = vrot.slane %v2200, 4
        %v2202 = vadd.f32 %v2200, %v2201
        %v2203 = vrot.slane %v2202, 2
        %v2204 = vadd.f32 %v2202, %v2203
        %v2205 = vrot.slane %v2204, 1
        %v2206 = vadd.f32 %v2204, %v2205
        %v2207 = vmul.f32 %v2090, %v2090
        %v2208 = vmul.f32 %v2091, %v2091
        %v2209 = vmul.f32 %v2092, %v2092
        %v2210 = vmul.f32 %v2093, %v2093
        %v2211 = vmul.f32 %v2094, %v2094
        %v2212 = vmul.f32 %v2095, %v2095
        %v2213 = vmul.f32 %v2096, %v2096
        %v2214 = vmul.f32 %v2097, %v2097
        %v2215 = vmul.f32 %v2098, %v2098
        %v2216 = vmul.f32 %v2099, %v2099
        %v2217 = vmul.f32 %v2100, %v2100
        %v2218 = vmul.f32 %v2101, %v2101
        %v2219 = vmul.f32 %v2102, %v2102
        %v2220 = vmul.f32 %v2103, %v2103
        %v2221 = vmul.f32 %v2104, %v2104
        %v2222 = vmul.f32 %v2105, %v2105
        %v2223 = vadd.f32 %v2207, %v2208
        %v2224 = vadd.f32 %v2223, %v2209
        %v2225 = vadd.f32 %v2224, %v2210
        %v2226 = vadd.f32 %v2225, %v2211
        %v2227 = vadd.f32 %v2226, %v2212
        %v2228 = vadd.f32 %v2227, %v2213
        %v2229 = vadd.f32 %v2228, %v2214
        %v2230 = vadd.f32 %v2229, %v2215
        %v2231 = vadd.f32 %v2230, %v2216
        %v2232 = vadd.f32 %v2231, %v2217
        %v2233 = vadd.f32 %v2232, %v2218
        %v2234 = vadd.f32 %v2233, %v2219
        %v2235 = vadd.f32 %v2234, %v2220
        %v2236 = vadd.f32 %v2235, %v2221
        %v2237 = vadd.f32 %v2236, %v2222
        %v2238 = vrot.slane %v2237, 4
        %v2239 = vadd.f32 %v2237, %v2238
        %v2240 = vrot.slane %v2239, 2
        %v2241 = vadd.f32 %v2239, %v2240
        %v2242 = vrot.slane %v2241, 1
        %v2243 = vadd.f32 %v2241, %v2242
        %vm2244 = vcmask 1040384
        %v2245 = vsel %vm2244, %v2206, %v2243
        %2246 = vst [vmem:[%s477] sm:$0x3] %v2245
        %s2247 = sand.u32 %s218, 1
        %s2248 = scalar_lea.sflag [#allocation4], %s2247
        %s2249 = sand.u32 %s218, 1
        %s2250 = smul.addr %s2249, 64
        %s2251 = scalar_lea.vmem [#allocation13], %s2250
        %s2252 = sand.u32 %s246, 1
        %s2253 = scalar_lea.sflag [#allocation15], %s2252
        %s2254 = sand.u32 %s246, 1
        %s2255 = smul.addr %s2254, 2
        %s2256 = scalar_lea.vmem [#allocation14], %s2255
        // Predicated region
        $region69: #{double_conv.4} parent=43 // pred_check
          %p2257 = pneg %p228
        $region70: #{double_conv.4} parent=43 // pred_check_branch
          %2259 = sbr.rel (%p2257) target = $region72
        $region71: #{double_conv.4} parent=43 // pred_region
          %s2260 = smul.u32 8, %s38
          %s2262 = ssub.s32 1024, 1024
          %2263 = vsyncadd %s2248, %s2262
          %s2264 = smul.addr %s2260, 2
          %s2265 = smul.addr %s37, 32
          %s2266 = sadd.s32 %s2264, %s2265
          %s2267 = smul.addr %s2266, 64
          %s2268 = scalar_lea.hbm %s6, %s2267
          %s2269 = sshll.u32 %s2251, 4
          %s2270 = int_to_ptr.vmem [resolvable:$true] %s2269
          %2275 = dma.vmem_to_hbm [thread:$0]  %s2270, 1024, %s2268, %s2248, 64, 64, 4
        $region72: #{double_conv.4} parent=43 // pred_fallthru
          _
        // Predicated region
        $region73: #{double_conv.4} parent=43 // pred_check
          %p2276 = pneg %p256
        $region74: #{double_conv.4} parent=43 // pred_check_branch
          %2278 = sbr.rel (%p2276) target = $region76
        $region75: #{double_conv.4} parent=43 // pred_region
          %s2280 = ssub.s32 32, 32
          %2281 = vsyncadd %s2253, %s2280
          %s2282 = smul.addr %s37, 2
          %s2283 = sadd.s32 %s38, %s2282
          %s2284 = smul.addr %s2283, 32
          %s2285 = scalar_lea.hbm %s7, %s2284
          %s2287 = sshll.u32 %s2256, 4
          %s2288 = int_to_ptr.vmem [resolvable:$true] %s2287
          %2290 = dma.vmem_to_hbm [thread:$0]  %s2288, 32, %s2285, %s2253
        $region76: #{double_conv.4} parent=43 // pred_fallthru
          _
      $region44: #{double_conv.4} parent=5 // pred_fallthru
        _
      %p2291 = scmp.le.s32.totalorder 2, %s28
      // Predicated region
      $region77: #{double_conv.4} parent=5 // pred_check
        %p2292 = pneg %p2291
      $region78: #{double_conv.4} parent=5 // pred_check_branch
        %2294 = sbr.rel (%p2292) target = $region80
      $region79: #{double_conv.4} parent=5 // pred_region
        %s2295 = ssub.s32 %s28, 2
        // Predicated region
        $region81: #{double_conv.4} parent=79 // pred_check
          %p2296 = pneg %p234
        $region82: #{double_conv.4} parent=79 // pred_check_branch
          %2298 = sbr.rel (%p2296) target = $region84
        $region83: #{double_conv.4} parent=79 // pred_region
          %s2299 = sand.u32 %s219, 1
          %s2300 = scalar_lea.sflag [#allocation4], %s2299
          %s2301 = sand.u32 %s219, 1
          %s2302 = smul.addr %s2301, 64
          %s2303 = scalar_lea.vmem [#allocation13], %s2302
          %2304 = dma.done %s2300, 1024
        $region84: #{double_conv.4} parent=79 // pred_fallthru
          _
        // Predicated region
        $region85: #{double_conv.4} parent=79 // pred_check
          %p2305 = pneg %p262
        $region86: #{double_conv.4} parent=79 // pred_check_branch
          %2307 = sbr.rel (%p2305) target = $region88
        $region87: #{double_conv.4} parent=79 // pred_region
          %s2308 = sand.u32 %s247, 1
          %s2309 = scalar_lea.sflag [#allocation15], %s2308
          %s2310 = sand.u32 %s247, 1
          %s2311 = smul.addr %s2310, 2
          %s2312 = scalar_lea.vmem [#allocation14], %s2311
          %2313 = dma.done %s2309, 32
        $region88: #{double_conv.4} parent=79 // pred_fallthru
          _
      $region80: #{double_conv.4} parent=5 // pred_fallthru
        _
    $region6: #{double_conv.4} parent=1 // loop_footer
      %s32 = sadd.s32 1, %s28
    $region7: #{double_conv.4} parent=1 // loop_footer_branch
      %27 = sbr.rel target = $region3
    $region8: #{double_conv.4} parent=1 // loop_exit
      _
    %2314 = vsyncpa [#allocation3], 1
    %s2315 = scalar_lea.sflag [#allocation3], 1
    %2316 = vsyncpa %s2315, 1
    %2317 = vsyncpa [#allocation6], 1
    %s2318 = scalar_lea.sflag [#allocation6], 1
    %2319 = vsyncpa %s2318, 1
    %2320 = vsyncpa [#allocation9], 1
    %2321 = vsyncpa [#allocation12], 1
    %2322 = vsyncpa [#allocation4], 1
    %s2323 = scalar_lea.sflag [#allocation4], 1
    %2324 = vsyncpa %s2323, 1
    %2325 = vsyncpa [#allocation15], 1
    %s2326 = scalar_lea.sflag [#allocation15], 1
    %2327 = vsyncpa %s2326, 1

</llo_original>
